<compile_context>
chip_gen: v5e
topology: v5e:2x2
jax: 0.10.0
libtpu: 0.0.40
codegen_flags: <defaults>
</compile_context>

<pallas_src>
import jax
import jax.numpy as jnp
from jax.experimental import pallas as pl
from jax.experimental.pallas import tpu as pltpu


_TARGET_BLOCK_BYTES = 4 * 1024 * 1024   # ~4 MiB per block buffer (per review)
_VMEM_LIMIT_BYTES = 32 * 1024 * 1024    # explicit scoped-VMEM budget, ~2x headroom
_SUBLANE_SAFE = 32                      # sublane-packing-safe row multiple (f32/bf16/int8)
_SMALL_BYPASS_BYTES = 1 << 20           # below this, pallas_call launch overhead dominates


def _abs_kernel(x_ref, o_ref):
    o_ref[...] = jnp.abs(x_ref[...])


def _choose_cols(n):
    """Widest lane-dense column count (multiple of 128) that divides n, else None."""
    for c in (2048, 1024, 512, 256, 128):
        if n % c == 0:
            return c
    return None


def absolute_value(x):
    """Elementwise |x|. Matches torch.abs(x) semantics for the forward pass."""
    orig_shape = x.shape
    dtype = x.dtype
    n = x.size
    if n == 0:
        return x

    # torch.abs(complex) returns a real tensor; the elementwise kernel declares
    # the input dtype for its output, so route complex through XLA directly.
    if jnp.issubdtype(dtype, jnp.complexfloating):
        return jnp.abs(x)

    itemsize = jnp.dtype(dtype).itemsize
    total_bytes = n * itemsize

    # Tiny activations: pallas_call launch/DMA-setup overhead dominates and
    # XLA's fused elementwise abs is already at the HBM roofline.
    if total_bytes < _SMALL_BYPASS_BYTES:
        return jnp.abs(x)

    cols = _choose_cols(n)
    if cols is None:
        # Ragged flat size (not a multiple of 128): padding + trailing slice
        # would double HBM traffic, so let XLA's fused abs keep the 2-pass
        # roofline instead.
        return jnp.abs(x)

    rows = n // cols
    x2d = jnp.ravel(x).reshape(rows, cols)

    # Row tiles of ~_TARGET_BLOCK_BYTES, a multiple of 32 rows (dtype-safe
    # sublane packing), clamped to the actual number of rows.
    tile_rows = (_TARGET_BLOCK_BYTES // (cols * itemsize)) // _SUBLANE_SAFE * _SUBLANE_SAFE
    tile_rows = max(_SUBLANE_SAFE, tile_rows)
    if tile_rows >= rows:
        tile_rows = rows  # block == full dim is legal
    grid_rows = pl.cdiv(rows, tile_rows)

    # v7x megacore balance: ("parallel",) shards the grid across 2 TensorCores,
    # so prefer an even step count when there are several steps (best effort).
    if grid_rows > 1 and grid_rows % 2 == 1:
        target_grid = grid_rows + 1
        cand = pl.cdiv(pl.cdiv(rows, target_grid), _SUBLANE_SAFE) * _SUBLANE_SAFE
        if cand >= _SUBLANE_SAFE and pl.cdiv(rows, cand) % 2 == 0:
            tile_rows = cand
            grid_rows = pl.cdiv(rows, cand)

    out2d = pl.pallas_call(
        _abs_kernel,
        out_shape=jax.ShapeDtypeStruct((rows, cols), dtype),
        grid_spec=pltpu.PrefetchScalarGridSpec(
            num_scalar_prefetch=0,
            grid=(grid_rows,),
            in_specs=[pl.BlockSpec((tile_rows, cols), lambda i: (i, 0))],
            out_specs=pl.BlockSpec((tile_rows, cols), lambda i: (i, 0)),
        ),
        compiler_params=pltpu.CompilerParams(
            dimension_semantics=("parallel",),
            vmem_limit_bytes=_VMEM_LIMIT_BYTES,
        ),
        cost_estimate=pl.CostEstimate(
            flops=n, transcendentals=0, bytes_accessed=2 * total_bytes
        ),
    )(x2d)

    return out2d.reshape(orig_shape)


if __name__ == "__main__":
    key = jax.random.PRNGKey(0)
    k0, k1, k2, k3 = jax.random.split(key, 4)

    # Small NCHW-like activation input (XLA bypass path for tiny tensors).
    x_small = jax.random.normal(k0, (2, 4, 16, 16), dtype=jnp.float32)
    y_small = absolute_value(x_small)
    jax.block_until_ready(y_small)
    assert y_small.shape == x_small.shape and y_small.dtype == x_small.dtype
    assert jnp.allclose(y_small, jnp.abs(x_small))

    # Pallas multi-block path: 8 MiB f32 -> rows=1024, tile_rows=512, grid=2
    # (even grid -> both v7x TensorCores).
    x_big = jax.random.normal(k1, (16, 8, 128, 128), dtype=jnp.float32)
    y_big = absolute_value(x_big)
    jax.block_until_ready(y_big)
    assert y_big.shape == x_big.shape and y_big.dtype == x_big.dtype
    assert jnp.allclose(y_big, jnp.abs(x_big))

    # Pallas single-block bf16 path (2 MiB, grid=1).
    x_bf16 = jax.random.normal(k2, (8, 8, 128, 128), dtype=jnp.bfloat16)
    y_bf16 = absolute_value(x_bf16)
    jax.block_until_ready(y_bf16)
    assert y_bf16.shape == x_bf16.shape and y_bf16.dtype == x_bf16.dtype
    assert jnp.array_equal(y_bf16, jnp.abs(x_bf16))

    # Ragged element count (not a multiple of 128) -> fused XLA fallback.
    x_odd = jax.random.normal(k3, (3, 5, 7), dtype=jnp.float32)
    y_odd = absolute_value(x_odd)
    jax.block_until_ready(y_odd)
    assert y_odd.shape == x_odd.shape and y_odd.dtype == x_odd.dtype
    assert jnp.allclose(y_odd, jnp.abs(x_odd))

    print("KERNEL_OK")
</pallas_src>

<mosaic_0001>
module attributes {stable_mosaic.version = 11 : i64} {
  func.func @_abs_kernel(%arg0: i32, %arg1: memref<512x2048xf32, #tpu.memory_space<vmem>>, %arg2: memref<512x2048xf32, #tpu.memory_space<vmem>>) attributes {dimension_semantics = [#tpu.dimension_semantics<parallel>], iteration_bounds = array<i64: 2>, scalar_prefetch = 0 : i64, scratch_operands = 0 : i64, tpu.core_type = #tpu.core_type<tc>, window_params = [{transform_indices = @transform_0, window_bounds = array<i64: 512, 2048>}, {transform_indices = @transform_1, window_bounds = array<i64: 512, 2048>}]} {
    %c0 = arith.constant 0 : index
    %c0_0 = arith.constant 0 : index
    %0 = vector.load %arg1[%c0, %c0_0] : memref<512x2048xf32, #tpu.memory_space<vmem>>, vector<512x2048xf32>
    %1 = math.absf %0 : vector<512x2048xf32>
    %c0_1 = arith.constant 0 : index
    %c0_2 = arith.constant 0 : index
    %2 = vector.load %arg2[%c0_1, %c0_2] : memref<512x2048xf32, #tpu.memory_space<vmem>>, vector<512x2048xf32>
    tpu.vector_store %arg2[%c0_1, %c0_2], %1 {strides = array<i32>} : memref<512x2048xf32, #tpu.memory_space<vmem>>, vector<512x2048xf32>,
    return
  }
  func.func @transform_0(%arg0: i32) -> (i32, i32) {
    %c0_i32 = arith.constant 0 : i32
    %c0_i32_0 = arith.constant 0 : i32
    return %arg0, %c0_i32 : i32, i32
  }
  func.func @transform_1(%arg0: i32) -> (i32, i32) {
    %c0_i32 = arith.constant 0 : i32
    %c0_i32_0 = arith.constant 0 : i32
    return %arg0, %c0_i32 : i32, i32
  }
}

</mosaic_0001>

<llo_original>
// kernel: tpu_custom_call.1
$region0: #{tpu_custom_call.1}
  #allocation0 [shape = 'u32[]', space=smem, size = 0x4, offset = 0x4, fixed_abs, tag = 'smem constant byte address 0x4 - core index']
  #allocation1 [shape = 'u32[72,128]{1,0:T(1,128)}', space=vmem, size = 0x9000, scoped, tag = 'internal scratch']
  %s0 = inlined_call_operand.hbm [shape: f32[1024,2048], index: 0, kind: input, shape index: {}]
  %s1 = inlined_call_operand.hbm [shape: f32[1024,2048], index: 1, kind: output, shape index: {}]
  %s2 = sld [smem:[#allocation0]]
  $region41: #{tpu_custom_call.1} parent=0
    _
  %s4 = ssub.s32 1, %s2
  %s5 = scalar_select 0, %s4, %s2
  $region1: #{tpu_custom_call.1} parent=0
    #allocation2 [shape = 'u8[8388608]{0}', space=vmem, size = 0x800000, scoped, tag = 'input window, operand 0']
    #allocation3 [shape = 's32[2]{0}', space=sflag, size = 0x8, scoped, tag = 'scoped memory for tpu_custom_call.1']
    #allocation4 [shape = 's32[2]{0}', space=sflag, size = 0x8, scoped, tag = 'scoped memory for tpu_custom_call.1']
    #allocation5 [shape = 'u8[8388608]{0}', space=vmem, size = 0x800000, scoped, tag = 'output window, operand 0']
    %6 = vsyncpa [#allocation3], 0
    %s7 = scalar_lea.sflag [#allocation3], 1
    %8 = vsyncpa %s7, 0
    %9 = vsyncpa [#allocation4], 0
    %s10 = scalar_lea.sflag [#allocation4], 1
    %11 = vsyncpa %s10, 0
    loop: start=0, step=1, limit=4
    $region2: #{tpu_custom_call.1} parent=1 // loop_pre_header
      _
    $region3: #{tpu_custom_call.1} parent=1 // loop_header
      %s13 = sphi 0, %s17
      %p14 = scmp.ge.s32.totalorder %s13, 4
      %s23 = sphi 0, %s25
      %s26 = sphi 0, %s23
      %s27 = sphi 0, %s26
      %s43 = sphi 0, %s27
      %s49 = sphi 0, %s51
      %s52 = sphi 0, %s49
      %s53 = sphi 0, %s52
      %s69 = sphi 0, %s53
    $region4: #{tpu_custom_call.1} parent=1 // loop_header_branch
      %16 = sbr.rel (%p14) target = $region8
    $region5: #{tpu_custom_call.1} parent=1 // loop_body
      %s18 = ssub.s32 %s13, 1
      %s19 = ssub.s32 %s13, 2
      %s20 = sadd.s32 %s13, 1
      %s21 = ssub.s32 %s13, %s20
      %p22 = scmp.eq.s32.totalorder %s21, 0
      %s24 = sadd.s32 %s23, 1
      %s25 = scalar_select %p22, %s23, %s24
      %p28 = pneg %p22
      %p29 = scmp.eq.s32.totalorder %s13, 1
      %p30 = por %p28, %p29
      %p31 = scmp.ne.s32.totalorder %s23, %s26
      %p32 = scmp.eq.s32.totalorder %s13, 0
      %p33 = por %p31, %p32
      %p34 = scmp.ne.s32.totalorder %s23, %s26
      %p35 = scmp.eq.s32.totalorder %s18, 1
      %p36 = por %p34, %p35
      %p37 = scmp.ne.s32.totalorder %s26, %s27
      %p38 = scmp.eq.s32.totalorder %s18, 0
      %p39 = por %p37, %p38
      %p40 = scmp.ne.s32.totalorder %s26, %s27
      %p41 = scmp.eq.s32.totalorder %s19, 1
      %p42 = por %p40, %p41
      %p44 = scmp.ne.s32.totalorder %s27, %s43
      %p45 = scmp.eq.s32.totalorder %s19, 0
      %p46 = por %p44, %p45
      %s47 = ssub.s32 %s13, %s20
      %p48 = scmp.eq.s32.totalorder %s47, 0
      %s50 = sadd.s32 %s49, 1
      %s51 = scalar_select %p48, %s49, %s50
      %p54 = pneg %p48
      %p55 = scmp.eq.s32.totalorder %s13, 1
      %p56 = por %p54, %p55
      %p57 = scmp.ne.s32.totalorder %s49, %s52
      %p58 = scmp.eq.s32.totalorder %s13, 0
      %p59 = por %p57, %p58
      %p60 = scmp.ne.s32.totalorder %s49, %s52
      %p61 = scmp.eq.s32.totalorder %s18, 1
      %p62 = por %p60, %p61
      %p63 = scmp.ne.s32.totalorder %s52, %s53
      %p64 = scmp.eq.s32.totalorder %s18, 0
      %p65 = por %p63, %p64
      %p66 = scmp.ne.s32.totalorder %s52, %s53
      %p67 = scmp.eq.s32.totalorder %s19, 1
      %p68 = por %p66, %p67
      %p70 = scmp.ne.s32.totalorder %s53, %s69
      %p71 = scmp.eq.s32.totalorder %s19, 0
      %p72 = por %p70, %p71
      %p73 = scmp.le.s32.totalorder 1, %s13
      %p74 = scmp.lt.s32.totalorder %s13, 3
      %p75 = pnand %p73, %p74
      %p76 = pneg %p75
      // Predicated region
      $region9: #{tpu_custom_call.1} parent=5 // pred_check
        _
      $region10: #{tpu_custom_call.1} parent=5 // pred_check_branch
        %78 = sbr.rel (%p75) target = $region12
      $region11: #{tpu_custom_call.1} parent=5 // pred_region
        %s79 = ssub.s32 %s13, 1
      $region12: #{tpu_custom_call.1} parent=5 // pred_fallthru
        _
      %p80 = scmp.lt.s32.totalorder %s13, 2
      // Predicated region
      $region13: #{tpu_custom_call.1} parent=5 // pred_check
        %p81 = pneg %p80
      $region14: #{tpu_custom_call.1} parent=5 // pred_check_branch
        %83 = sbr.rel (%p81) target = $region16
      $region15: #{tpu_custom_call.1} parent=5 // pred_region
        // Predicated region
        $region17: #{tpu_custom_call.1} parent=15 // pred_check
          %p84 = pneg %p33
        $region18: #{tpu_custom_call.1} parent=15 // pred_check_branch
          %86 = sbr.rel (%p84) target = $region20
        $region19: #{tpu_custom_call.1} parent=15 // pred_region
          %s87 = sand.u32 %s23, 1
          %s88 = scalar_lea.sflag [#allocation3], %s87
          %s89 = sand.u32 %s23, 1
          %s90 = smul.addr %s89, 8192
          %s91 = scalar_lea.vmem [#allocation2], %s90
          %s92 = smul.u32 64, %s13
          %94 = vsyncadd %s88, 0
          %s95 = smul.addr %s92, 16
          %s96 = smul.addr %s95, 8
          %s97 = scalar_lea.hbm %s0, %s96
          %s98 = sshll.u32 %s97, 4
          %s99 = int_to_ptr.hbm [resolvable:$true] %s98
          %s100 = sshll.u32 %s91, 4
          %s101 = int_to_ptr.vmem [resolvable:$true] %s100
          %106 = dma.hbm_to_vmem [thread:$0]  %s99, 131072, %s101, %s88, 2048, 2048, 128
        $region20: #{tpu_custom_call.1} parent=15 // pred_fallthru
          _
      $region16: #{tpu_custom_call.1} parent=5 // pred_fallthru
        _
      %p107 = scmp.le.s32.totalorder 1, %s13
      %p108 = scmp.lt.s32.totalorder %s13, 3
      %p109 = pnand %p107, %p108
      %p110 = pneg %p109
      // Predicated region
      $region21: #{tpu_custom_call.1} parent=5 // pred_check
        _
      $region22: #{tpu_custom_call.1} parent=5 // pred_check_branch
        %112 = sbr.rel (%p109) target = $region24
      $region23: #{tpu_custom_call.1} parent=5 // pred_region
        %s113 = ssub.s32 %s13, 1
        %s114 = sand.u32 %s26, 1
        %s115 = scalar_lea.sflag [#allocation3], %s114
        %s116 = sand.u32 %s26, 1
        %s117 = smul.addr %s116, 8192
        %s118 = scalar_lea.vmem [#allocation2], %s117
        // Predicated region
        $region25: #{tpu_custom_call.1} parent=23 // pred_check
          %p119 = pneg %p39
        $region26: #{tpu_custom_call.1} parent=23 // pred_check_branch
          %121 = sbr.rel (%p119) target = $region28
        $region27: #{tpu_custom_call.1} parent=23 // pred_region
          %123 = dma.done %s115, 131072
        $region28: #{tpu_custom_call.1} parent=23 // pred_fallthru
          _
        %s124 = sand.u32 %s26, 1
        %s125 = scalar_lea.sflag [#allocation3], %s124
        %s126 = sand.u32 %s26, 1
        %s127 = smul.addr %s126, 8192
        %s128 = scalar_lea.vmem [#allocation2], %s127
        %p129 = pneg %p39
        %p130 = pneg %p36
        %p131 = pneg %p65
        %p132 = pneg %p62
        %s133 = sand.u32 %s52, 1
        %s134 = scalar_lea.sflag [#allocation4], %s133
        %s135 = sand.u32 %s52, 1
        %s136 = smul.addr %s135, 8192
        %s137 = scalar_lea.vmem [#allocation5], %s136
        %s138 = smul.u32 64, %s18
        %s139 = smul.u32 64, %s18
        %v140 = vld [vmem:[%s118] sm:$0xff]
        %v141 = vld [vmem:[%s118 + $0x8] sm:$0xff]
        %v142 = vld [vmem:[%s118 + $0x10] sm:$0xff]
        %v143 = vld [vmem:[%s118 + $0x18] sm:$0xff]
        %v144 = vld [vmem:[%s118 + $0x20] sm:$0xff]
        %v145 = vld [vmem:[%s118 + $0x28] sm:$0xff]
        %v146 = vld [vmem:[%s118 + $0x30] sm:$0xff]
        %v147 = vld [vmem:[%s118 + $0x38] sm:$0xff]
        %v148 = vld [vmem:[%s118 + $0x40] sm:$0xff]
        %v149 = vld [vmem:[%s118 + $0x48] sm:$0xff]
        %v150 = vld [vmem:[%s118 + $0x50] sm:$0xff]
        %v151 = vld [vmem:[%s118 + $0x58] sm:$0xff]
        %v152 = vld [vmem:[%s118 + $0x60] sm:$0xff]
        %v153 = vld [vmem:[%s118 + $0x68] sm:$0xff]
        %v154 = vld [vmem:[%s118 + $0x70] sm:$0xff]
        %v155 = vld [vmem:[%s118 + $0x78] sm:$0xff]
        %v156 = vld [vmem:[%s118 + $0x80] sm:$0xff]
        %v157 = vld [vmem:[%s118 + $0x88] sm:$0xff]
        %v158 = vld [vmem:[%s118 + $0x90] sm:$0xff]
        %v159 = vld [vmem:[%s118 + $0x98] sm:$0xff]
        %v160 = vld [vmem:[%s118 + $0xa0] sm:$0xff]
        %v161 = vld [vmem:[%s118 + $0xa8] sm:$0xff]
        %v162 = vld [vmem:[%s118 + $0xb0] sm:$0xff]
        %v163 = vld [vmem:[%s118 + $0xb8] sm:$0xff]
        %v164 = vld [vmem:[%s118 + $0xc0] sm:$0xff]
        %v165 = vld [vmem:[%s118 + $0xc8] sm:$0xff]
        %v166 = vld [vmem:[%s118 + $0xd0] sm:$0xff]
        %v167 = vld [vmem:[%s118 + $0xd8] sm:$0xff]
        %v168 = vld [vmem:[%s118 + $0xe0] sm:$0xff]
        %v169 = vld [vmem:[%s118 + $0xe8] sm:$0xff]
        %v170 = vld [vmem:[%s118 + $0xf0] sm:$0xff]
        %v171 = vld [vmem:[%s118 + $0xf8] sm:$0xff]
        %v172 = vld [vmem:[%s118 + $0x100] sm:$0xff]
        %v173 = vld [vmem:[%s118 + $0x108] sm:$0xff]
        %v174 = vld [vmem:[%s118 + $0x110] sm:$0xff]
        %v175 = vld [vmem:[%s118 + $0x118] sm:$0xff]
        %v176 = vld [vmem:[%s118 + $0x120] sm:$0xff]
        %v177 = vld [vmem:[%s118 + $0x128] sm:$0xff]
        %v178 = vld [vmem:[%s118 + $0x130] sm:$0xff]
        %v179 = vld [vmem:[%s118 + $0x138] sm:$0xff]
        %v180 = vld [vmem:[%s118 + $0x140] sm:$0xff]
        %v181 = vld [vmem:[%s118 + $0x148] sm:$0xff]
        %v182 = vld [vmem:[%s118 + $0x150] sm:$0xff]
        %v183 = vld [vmem:[%s118 + $0x158] sm:$0xff]
        %v184 = vld [vmem:[%s118 + $0x160] sm:$0xff]
        %v185 = vld [vmem:[%s118 + $0x168] sm:$0xff]
        %v186 = vld [vmem:[%s118 + $0x170] sm:$0xff]
        %v187 = vld [vmem:[%s118 + $0x178] sm:$0xff]
        %v188 = vld [vmem:[%s118 + $0x180] sm:$0xff]
        %v189 = vld [vmem:[%s118 + $0x188] sm:$0xff]
        %v190 = vld [vmem:[%s118 + $0x190] sm:$0xff]
        %v191 = vld [vmem:[%s118 + $0x198] sm:$0xff]
        %v192 = vld [vmem:[%s118 + $0x1a0] sm:$0xff]
        %v193 = vld [vmem:[%s118 + $0x1a8] sm:$0xff]
        %v194 = vld [vmem:[%s118 + $0x1b0] sm:$0xff]
        %v195 = vld [vmem:[%s118 + $0x1b8] sm:$0xff]
        %v196 = vld [vmem:[%s118 + $0x1c0] sm:$0xff]
        %v197 = vld [vmem:[%s118 + $0x1c8] sm:$0xff]
        %v198 = vld [vmem:[%s118 + $0x1d0] sm:$0xff]
        %v199 = vld [vmem:[%s118 + $0x1d8] sm:$0xff]
        %v200 = vld [vmem:[%s118 + $0x1e0] sm:$0xff]
        %v201 = vld [vmem:[%s118 + $0x1e8] sm:$0xff]
        %v202 = vld [vmem:[%s118 + $0x1f0] sm:$0xff]
        %v203 = vld [vmem:[%s118 + $0x1f8] sm:$0xff]
        %v204 = vld [vmem:[%s118 + $0x200] sm:$0xff]
        %v205 = vld [vmem:[%s118 + $0x208] sm:$0xff]
        %v206 = vld [vmem:[%s118 + $0x210] sm:$0xff]
        %v207 = vld [vmem:[%s118 + $0x218] sm:$0xff]
        %v208 = vld [vmem:[%s118 + $0x220] sm:$0xff]
        %v209 = vld [vmem:[%s118 + $0x228] sm:$0xff]
        %v210 = vld [vmem:[%s118 + $0x230] sm:$0xff]
        %v211 = vld [vmem:[%s118 + $0x238] sm:$0xff]
        %v212 = vld [vmem:[%s118 + $0x240] sm:$0xff]
        %v213 = vld [vmem:[%s118 + $0x248] sm:$0xff]
        %v214 = vld [vmem:[%s118 + $0x250] sm:$0xff]
        %v215 = vld [vmem:[%s118 + $0x258] sm:$0xff]
        %v216 = vld [vmem:[%s118 + $0x260] sm:$0xff]
        %v217 = vld [vmem:[%s118 + $0x268] sm:$0xff]
        %v218 = vld [vmem:[%s118 + $0x270] sm:$0xff]
        %v219 = vld [vmem:[%s118 + $0x278] sm:$0xff]
        %v220 = vld [vmem:[%s118 + $0x280] sm:$0xff]
        %v221 = vld [vmem:[%s118 + $0x288] sm:$0xff]
        %v222 = vld [vmem:[%s118 + $0x290] sm:$0xff]
        %v223 = vld [vmem:[%s118 + $0x298] sm:$0xff]
        %v224 = vld [vmem:[%s118 + $0x2a0] sm:$0xff]
        %v225 = vld [vmem:[%s118 + $0x2a8] sm:$0xff]
        %v226 = vld [vmem:[%s118 + $0x2b0] sm:$0xff]
        %v227 = vld [vmem:[%s118 + $0x2b8] sm:$0xff]
        %v228 = vld [vmem:[%s118 + $0x2c0] sm:$0xff]
        %v229 = vld [vmem:[%s118 + $0x2c8] sm:$0xff]
        %v230 = vld [vmem:[%s118 + $0x2d0] sm:$0xff]
        %v231 = vld [vmem:[%s118 + $0x2d8] sm:$0xff]
        %v232 = vld [vmem:[%s118 + $0x2e0] sm:$0xff]
        %v233 = vld [vmem:[%s118 + $0x2e8] sm:$0xff]
        %v234 = vld [vmem:[%s118 + $0x2f0] sm:$0xff]
        %v235 = vld [vmem:[%s118 + $0x2f8] sm:$0xff]
        %v236 = vld [vmem:[%s118 + $0x300] sm:$0xff]
        %v237 = vld [vmem:[%s118 + $0x308] sm:$0xff]
        %v238 = vld [vmem:[%s118 + $0x310] sm:$0xff]
        %v239 = vld [vmem:[%s118 + $0x318] sm:$0xff]
        %v240 = vld [vmem:[%s118 + $0x320] sm:$0xff]
        %v241 = vld [vmem:[%s118 + $0x328] sm:$0xff]
        %v242 = vld [vmem:[%s118 + $0x330] sm:$0xff]
        %v243 = vld [vmem:[%s118 + $0x338] sm:$0xff]
        %v244 = vld [vmem:[%s118 + $0x340] sm:$0xff]
        %v245 = vld [vmem:[%s118 + $0x348] sm:$0xff]
        %v246 = vld [vmem:[%s118 + $0x350] sm:$0xff]
        %v247 = vld [vmem:[%s118 + $0x358] sm:$0xff]
        %v248 = vld [vmem:[%s118 + $0x360] sm:$0xff]
        %v249 = vld [vmem:[%s118 + $0x368] sm:$0xff]
        %v250 = vld [vmem:[%s118 + $0x370] sm:$0xff]
        %v251 = vld [vmem:[%s118 + $0x378] sm:$0xff]
        %v252 = vld [vmem:[%s118 + $0x380] sm:$0xff]
        %v253 = vld [vmem:[%s118 + $0x388] sm:$0xff]
        %v254 = vld [vmem:[%s118 + $0x390] sm:$0xff]
        %v255 = vld [vmem:[%s118 + $0x398] sm:$0xff]
        %v256 = vld [vmem:[%s118 + $0x3a0] sm:$0xff]
        %v257 = vld [vmem:[%s118 + $0x3a8] sm:$0xff]
        %v258 = vld [vmem:[%s118 + $0x3b0] sm:$0xff]
        %v259 = vld [vmem:[%s118 + $0x3b8] sm:$0xff]
        %v260 = vld [vmem:[%s118 + $0x3c0] sm:$0xff]
        %v261 = vld [vmem:[%s118 + $0x3c8] sm:$0xff]
        %v262 = vld [vmem:[%s118 + $0x3d0] sm:$0xff]
        %v263 = vld [vmem:[%s118 + $0x3d8] sm:$0xff]
        %v264 = vld [vmem:[%s118 + $0x3e0] sm:$0xff]
        %v265 = vld [vmem:[%s118 + $0x3e8] sm:$0xff]
        %v266 = vld [vmem:[%s118 + $0x3f0] sm:$0xff]
        %v267 = vld [vmem:[%s118 + $0x3f8] sm:$0xff]
        %v268 = vld [vmem:[%s118 + $0x400] sm:$0xff]
        %v269 = vld [vmem:[%s118 + $0x408] sm:$0xff]
        %v270 = vld [vmem:[%s118 + $0x410] sm:$0xff]
        %v271 = vld [vmem:[%s118 + $0x418] sm:$0xff]
        %v272 = vld [vmem:[%s118 + $0x420] sm:$0xff]
        %v273 = vld [vmem:[%s118 + $0x428] sm:$0xff]
        %v274 = vld [vmem:[%s118 + $0x430] sm:$0xff]
        %v275 = vld [vmem:[%s118 + $0x438] sm:$0xff]
        %v276 = vld [vmem:[%s118 + $0x440] sm:$0xff]
        %v277 = vld [vmem:[%s118 + $0x448] sm:$0xff]
        %v278 = vld [vmem:[%s118 + $0x450] sm:$0xff]
        %v279 = vld [vmem:[%s118 + $0x458] sm:$0xff]
        %v280 = vld [vmem:[%s118 + $0x460] sm:$0xff]
        %v281 = vld [vmem:[%s118 + $0x468] sm:$0xff]
        %v282 = vld [vmem:[%s118 + $0x470] sm:$0xff]
        %v283 = vld [vmem:[%s118 + $0x478] sm:$0xff]
        %v284 = vld [vmem:[%s118 + $0x480] sm:$0xff]
        %v285 = vld [vmem:[%s118 + $0x488] sm:$0xff]
        %v286 = vld [vmem:[%s118 + $0x490] sm:$0xff]
        %v287 = vld [vmem:[%s118 + $0x498] sm:$0xff]
        %v288 = vld [vmem:[%s118 + $0x4a0] sm:$0xff]
        %v289 = vld [vmem:[%s118 + $0x4a8] sm:$0xff]
        %v290 = vld [vmem:[%s118 + $0x4b0] sm:$0xff]
        %v291 = vld [vmem:[%s118 + $0x4b8] sm:$0xff]
        %v292 = vld [vmem:[%s118 + $0x4c0] sm:$0xff]
        %v293 = vld [vmem:[%s118 + $0x4c8] sm:$0xff]
        %v294 = vld [vmem:[%s118 + $0x4d0] sm:$0xff]
        %v295 = vld [vmem:[%s118 + $0x4d8] sm:$0xff]
        %v296 = vld [vmem:[%s118 + $0x4e0] sm:$0xff]
        %v297 = vld [vmem:[%s118 + $0x4e8] sm:$0xff]
        %v298 = vld [vmem:[%s118 + $0x4f0] sm:$0xff]
        %v299 = vld [vmem:[%s118 + $0x4f8] sm:$0xff]
        %v300 = vld [vmem:[%s118 + $0x500] sm:$0xff]
        %v301 = vld [vmem:[%s118 + $0x508] sm:$0xff]
        %v302 = vld [vmem:[%s118 + $0x510] sm:$0xff]
        %v303 = vld [vmem:[%s118 + $0x518] sm:$0xff]
        %v304 = vld [vmem:[%s118 + $0x520] sm:$0xff]
        %v305 = vld [vmem:[%s118 + $0x528] sm:$0xff]
        %v306 = vld [vmem:[%s118 + $0x530] sm:$0xff]
        %v307 = vld [vmem:[%s118 + $0x538] sm:$0xff]
        %v308 = vld [vmem:[%s118 + $0x540] sm:$0xff]
        %v309 = vld [vmem:[%s118 + $0x548] sm:$0xff]
        %v310 = vld [vmem:[%s118 + $0x550] sm:$0xff]
        %v311 = vld [vmem:[%s118 + $0x558] sm:$0xff]
        %v312 = vld [vmem:[%s118 + $0x560] sm:$0xff]
        %v313 = vld [vmem:[%s118 + $0x568] sm:$0xff]
        %v314 = vld [vmem:[%s118 + $0x570] sm:$0xff]
        %v315 = vld [vmem:[%s118 + $0x578] sm:$0xff]
        %v316 = vld [vmem:[%s118 + $0x580] sm:$0xff]
        %v317 = vld [vmem:[%s118 + $0x588] sm:$0xff]
        %v318 = vld [vmem:[%s118 + $0x590] sm:$0xff]
        %v319 = vld [vmem:[%s118 + $0x598] sm:$0xff]
        %v320 = vld [vmem:[%s118 + $0x5a0] sm:$0xff]
        %v321 = vld [vmem:[%s118 + $0x5a8] sm:$0xff]
        %v322 = vld [vmem:[%s118 + $0x5b0] sm:$0xff]
        %v323 = vld [vmem:[%s118 + $0x5b8] sm:$0xff]
        %v324 = vld [vmem:[%s118 + $0x5c0] sm:$0xff]
        %v325 = vld [vmem:[%s118 + $0x5c8] sm:$0xff]
        %v326 = vld [vmem:[%s118 + $0x5d0] sm:$0xff]
        %v327 = vld [vmem:[%s118 + $0x5d8] sm:$0xff]
        %v328 = vld [vmem:[%s118 + $0x5e0] sm:$0xff]
        %v329 = vld [vmem:[%s118 + $0x5e8] sm:$0xff]
        %v330 = vld [vmem:[%s118 + $0x5f0] sm:$0xff]
        %v331 = vld [vmem:[%s118 + $0x5f8] sm:$0xff]
        %v332 = vld [vmem:[%s118 + $0x600] sm:$0xff]
        %v333 = vld [vmem:[%s118 + $0x608] sm:$0xff]
        %v334 = vld [vmem:[%s118 + $0x610] sm:$0xff]
        %v335 = vld [vmem:[%s118 + $0x618] sm:$0xff]
        %v336 = vld [vmem:[%s118 + $0x620] sm:$0xff]
        %v337 = vld [vmem:[%s118 + $0x628] sm:$0xff]
        %v338 = vld [vmem:[%s118 + $0x630] sm:$0xff]
        %v339 = vld [vmem:[%s118 + $0x638] sm:$0xff]
        %v340 = vld [vmem:[%s118 + $0x640] sm:$0xff]
        %v341 = vld [vmem:[%s118 + $0x648] sm:$0xff]
        %v342 = vld [vmem:[%s118 + $0x650] sm:$0xff]
        %v343 = vld [vmem:[%s118 + $0x658] sm:$0xff]
        %v344 = vld [vmem:[%s118 + $0x660] sm:$0xff]
        %v345 = vld [vmem:[%s118 + $0x668] sm:$0xff]
        %v346 = vld [vmem:[%s118 + $0x670] sm:$0xff]
        %v347 = vld [vmem:[%s118 + $0x678] sm:$0xff]
        %v348 = vld [vmem:[%s118 + $0x680] sm:$0xff]
        %v349 = vld [vmem:[%s118 + $0x688] sm:$0xff]
        %v350 = vld [vmem:[%s118 + $0x690] sm:$0xff]
        %v351 = vld [vmem:[%s118 + $0x698] sm:$0xff]
        %v352 = vld [vmem:[%s118 + $0x6a0] sm:$0xff]
        %v353 = vld [vmem:[%s118 + $0x6a8] sm:$0xff]
        %v354 = vld [vmem:[%s118 + $0x6b0] sm:$0xff]
        %v355 = vld [vmem:[%s118 + $0x6b8] sm:$0xff]
        %v356 = vld [vmem:[%s118 + $0x6c0] sm:$0xff]
        %v357 = vld [vmem:[%s118 + $0x6c8] sm:$0xff]
        %v358 = vld [vmem:[%s118 + $0x6d0] sm:$0xff]
        %v359 = vld [vmem:[%s118 + $0x6d8] sm:$0xff]
        %v360 = vld [vmem:[%s118 + $0x6e0] sm:$0xff]
        %v361 = vld [vmem:[%s118 + $0x6e8] sm:$0xff]
        %v362 = vld [vmem:[%s118 + $0x6f0] sm:$0xff]
        %v363 = vld [vmem:[%s118 + $0x6f8] sm:$0xff]
        %v364 = vld [vmem:[%s118 + $0x700] sm:$0xff]
        %v365 = vld [vmem:[%s118 + $0x708] sm:$0xff]
        %v366 = vld [vmem:[%s118 + $0x710] sm:$0xff]
        %v367 = vld [vmem:[%s118 + $0x718] sm:$0xff]
        %v368 = vld [vmem:[%s118 + $0x720] sm:$0xff]
        %v369 = vld [vmem:[%s118 + $0x728] sm:$0xff]
        %v370 = vld [vmem:[%s118 + $0x730] sm:$0xff]
        %v371 = vld [vmem:[%s118 + $0x738] sm:$0xff]
        %v372 = vld [vmem:[%s118 + $0x740] sm:$0xff]
        %v373 = vld [vmem:[%s118 + $0x748] sm:$0xff]
        %v374 = vld [vmem:[%s118 + $0x750] sm:$0xff]
        %v375 = vld [vmem:[%s118 + $0x758] sm:$0xff]
        %v376 = vld [vmem:[%s118 + $0x760] sm:$0xff]
        %v377 = vld [vmem:[%s118 + $0x768] sm:$0xff]
        %v378 = vld [vmem:[%s118 + $0x770] sm:$0xff]
        %v379 = vld [vmem:[%s118 + $0x778] sm:$0xff]
        %v380 = vld [vmem:[%s118 + $0x780] sm:$0xff]
        %v381 = vld [vmem:[%s118 + $0x788] sm:$0xff]
        %v382 = vld [vmem:[%s118 + $0x790] sm:$0xff]
        %v383 = vld [vmem:[%s118 + $0x798] sm:$0xff]
        %v384 = vld [vmem:[%s118 + $0x7a0] sm:$0xff]
        %v385 = vld [vmem:[%s118 + $0x7a8] sm:$0xff]
        %v386 = vld [vmem:[%s118 + $0x7b0] sm:$0xff]
        %v387 = vld [vmem:[%s118 + $0x7b8] sm:$0xff]
        %v388 = vld [vmem:[%s118 + $0x7c0] sm:$0xff]
        %v389 = vld [vmem:[%s118 + $0x7c8] sm:$0xff]
        %v390 = vld [vmem:[%s118 + $0x7d0] sm:$0xff]
        %v391 = vld [vmem:[%s118 + $0x7d8] sm:$0xff]
        %v392 = vld [vmem:[%s118 + $0x7e0] sm:$0xff]
        %v393 = vld [vmem:[%s118 + $0x7e8] sm:$0xff]
        %v394 = vld [vmem:[%s118 + $0x7f0] sm:$0xff]
        %v395 = vld [vmem:[%s118 + $0x7f8] sm:$0xff]
        %v396 = vld [vmem:[%s118 + $0x800] sm:$0xff]
        %v397 = vld [vmem:[%s118 + $0x808] sm:$0xff]
        %v398 = vld [vmem:[%s118 + $0x810] sm:$0xff]
        %v399 = vld [vmem:[%s118 + $0x818] sm:$0xff]
        %v400 = vld [vmem:[%s118 + $0x820] sm:$0xff]
        %v401 = vld [vmem:[%s118 + $0x828] sm:$0xff]
        %v402 = vld [vmem:[%s118 + $0x830] sm:$0xff]
        %v403 = vld [vmem:[%s118 + $0x838] sm:$0xff]
        %v404 = vld [vmem:[%s118 + $0x840] sm:$0xff]
        %v405 = vld [vmem:[%s118 + $0x848] sm:$0xff]
        %v406 = vld [vmem:[%s118 + $0x850] sm:$0xff]
        %v407 = vld [vmem:[%s118 + $0x858] sm:$0xff]
        %v408 = vld [vmem:[%s118 + $0x860] sm:$0xff]
        %v409 = vld [vmem:[%s118 + $0x868] sm:$0xff]
        %v410 = vld [vmem:[%s118 + $0x870] sm:$0xff]
        %v411 = vld [vmem:[%s118 + $0x878] sm:$0xff]
        %v412 = vld [vmem:[%s118 + $0x880] sm:$0xff]
        %v413 = vld [vmem:[%s118 + $0x888] sm:$0xff]
        %v414 = vld [vmem:[%s118 + $0x890] sm:$0xff]
        %v415 = vld [vmem:[%s118 + $0x898] sm:$0xff]
        %v416 = vld [vmem:[%s118 + $0x8a0] sm:$0xff]
        %v417 = vld [vmem:[%s118 + $0x8a8] sm:$0xff]
        %v418 = vld [vmem:[%s118 + $0x8b0] sm:$0xff]
        %v419 = vld [vmem:[%s118 + $0x8b8] sm:$0xff]
        %v420 = vld [vmem:[%s118 + $0x8c0] sm:$0xff]
        %v421 = vld [vmem:[%s118 + $0x8c8] sm:$0xff]
        %v422 = vld [vmem:[%s118 + $0x8d0] sm:$0xff]
        %v423 = vld [vmem:[%s118 + $0x8d8] sm:$0xff]
        %v424 = vld [vmem:[%s118 + $0x8e0] sm:$0xff]
        %v425 = vld [vmem:[%s118 + $0x8e8] sm:$0xff]
        %v426 = vld [vmem:[%s118 + $0x8f0] sm:$0xff]
        %v427 = vld [vmem:[%s118 + $0x8f8] sm:$0xff]
        %v428 = vld [vmem:[%s118 + $0x900] sm:$0xff]
        %v429 = vld [vmem:[%s118 + $0x908] sm:$0xff]
        %v430 = vld [vmem:[%s118 + $0x910] sm:$0xff]
        %v431 = vld [vmem:[%s118 + $0x918] sm:$0xff]
        %v432 = vld [vmem:[%s118 + $0x920] sm:$0xff]
        %v433 = vld [vmem:[%s118 + $0x928] sm:$0xff]
        %v434 = vld [vmem:[%s118 + $0x930] sm:$0xff]
        %v435 = vld [vmem:[%s118 + $0x938] sm:$0xff]
        %v436 = vld [vmem:[%s118 + $0x940] sm:$0xff]
        %v437 = vld [vmem:[%s118 + $0x948] sm:$0xff]
        %v438 = vld [vmem:[%s118 + $0x950] sm:$0xff]
        %v439 = vld [vmem:[%s118 + $0x958] sm:$0xff]
        %v440 = vld [vmem:[%s118 + $0x960] sm:$0xff]
        %v441 = vld [vmem:[%s118 + $0x968] sm:$0xff]
        %v442 = vld [vmem:[%s118 + $0x970] sm:$0xff]
        %v443 = vld [vmem:[%s118 + $0x978] sm:$0xff]
        %v444 = vld [vmem:[%s118 + $0x980] sm:$0xff]
        %v445 = vld [vmem:[%s118 + $0x988] sm:$0xff]
        %v446 = vld [vmem:[%s118 + $0x990] sm:$0xff]
        %v447 = vld [vmem:[%s118 + $0x998] sm:$0xff]
        %v448 = vld [vmem:[%s118 + $0x9a0] sm:$0xff]
        %v449 = vld [vmem:[%s118 + $0x9a8] sm:$0xff]
        %v450 = vld [vmem:[%s118 + $0x9b0] sm:$0xff]
        %v451 = vld [vmem:[%s118 + $0x9b8] sm:$0xff]
        %v452 = vld [vmem:[%s118 + $0x9c0] sm:$0xff]
        %v453 = vld [vmem:[%s118 + $0x9c8] sm:$0xff]
        %v454 = vld [vmem:[%s118 + $0x9d0] sm:$0xff]
        %v455 = vld [vmem:[%s118 + $0x9d8] sm:$0xff]
        %v456 = vld [vmem:[%s118 + $0x9e0] sm:$0xff]
        %v457 = vld [vmem:[%s118 + $0x9e8] sm:$0xff]
        %v458 = vld [vmem:[%s118 + $0x9f0] sm:$0xff]
        %v459 = vld [vmem:[%s118 + $0x9f8] sm:$0xff]
        %v460 = vld [vmem:[%s118 + $0xa00] sm:$0xff]
        %v461 = vld [vmem:[%s118 + $0xa08] sm:$0xff]
        %v462 = vld [vmem:[%s118 + $0xa10] sm:$0xff]
        %v463 = vld [vmem:[%s118 + $0xa18] sm:$0xff]
        %v464 = vld [vmem:[%s118 + $0xa20] sm:$0xff]
        %v465 = vld [vmem:[%s118 + $0xa28] sm:$0xff]
        %v466 = vld [vmem:[%s118 + $0xa30] sm:$0xff]
        %v467 = vld [vmem:[%s118 + $0xa38] sm:$0xff]
        %v468 = vld [vmem:[%s118 + $0xa40] sm:$0xff]
        %v469 = vld [vmem:[%s118 + $0xa48] sm:$0xff]
        %v470 = vld [vmem:[%s118 + $0xa50] sm:$0xff]
        %v471 = vld [vmem:[%s118 + $0xa58] sm:$0xff]
        %v472 = vld [vmem:[%s118 + $0xa60] sm:$0xff]
        %v473 = vld [vmem:[%s118 + $0xa68] sm:$0xff]
        %v474 = vld [vmem:[%s118 + $0xa70] sm:$0xff]
        %v475 = vld [vmem:[%s118 + $0xa78] sm:$0xff]
        %v476 = vld [vmem:[%s118 + $0xa80] sm:$0xff]
        %v477 = vld [vmem:[%s118 + $0xa88] sm:$0xff]
        %v478 = vld [vmem:[%s118 + $0xa90] sm:$0xff]
        %v479 = vld [vmem:[%s118 + $0xa98] sm:$0xff]
        %v480 = vld [vmem:[%s118 + $0xaa0] sm:$0xff]
        %v481 = vld [vmem:[%s118 + $0xaa8] sm:$0xff]
        %v482 = vld [vmem:[%s118 + $0xab0] sm:$0xff]
        %v483 = vld [vmem:[%s118 + $0xab8] sm:$0xff]
        %v484 = vld [vmem:[%s118 + $0xac0] sm:$0xff]
        %v485 = vld [vmem:[%s118 + $0xac8] sm:$0xff]
        %v486 = vld [vmem:[%s118 + $0xad0] sm:$0xff]
        %v487 = vld [vmem:[%s118 + $0xad8] sm:$0xff]
        %v488 = vld [vmem:[%s118 + $0xae0] sm:$0xff]
        %v489 = vld [vmem:[%s118 + $0xae8] sm:$0xff]
        %v490 = vld [vmem:[%s118 + $0xaf0] sm:$0xff]
        %v491 = vld [vmem:[%s118 + $0xaf8] sm:$0xff]
        %v492 = vld [vmem:[%s118 + $0xb00] sm:$0xff]
        %v493 = vld [vmem:[%s118 + $0xb08] sm:$0xff]
        %v494 = vld [vmem:[%s118 + $0xb10] sm:$0xff]
        %v495 = vld [vmem:[%s118 + $0xb18] sm:$0xff]
        %v496 = vld [vmem:[%s118 + $0xb20] sm:$0xff]
        %v497 = vld [vmem:[%s118 + $0xb28] sm:$0xff]
        %v498 = vld [vmem:[%s118 + $0xb30] sm:$0xff]
        %v499 = vld [vmem:[%s118 + $0xb38] sm:$0xff]
        %v500 = vld [vmem:[%s118 + $0xb40] sm:$0xff]
        %v501 = vld [vmem:[%s118 + $0xb48] sm:$0xff]
        %v502 = vld [vmem:[%s118 + $0xb50] sm:$0xff]
        %v503 = vld [vmem:[%s118 + $0xb58] sm:$0xff]
        %v504 = vld [vmem:[%s118 + $0xb60] sm:$0xff]
        %v505 = vld [vmem:[%s118 + $0xb68] sm:$0xff]
        %v506 = vld [vmem:[%s118 + $0xb70] sm:$0xff]
        %v507 = vld [vmem:[%s118 + $0xb78] sm:$0xff]
        %v508 = vld [vmem:[%s118 + $0xb80] sm:$0xff]
        %v509 = vld [vmem:[%s118 + $0xb88] sm:$0xff]
        %v510 = vld [vmem:[%s118 + $0xb90] sm:$0xff]
        %v511 = vld [vmem:[%s118 + $0xb98] sm:$0xff]
        %v512 = vld [vmem:[%s118 + $0xba0] sm:$0xff]
        %v513 = vld [vmem:[%s118 + $0xba8] sm:$0xff]
        %v514 = vld [vmem:[%s118 + $0xbb0] sm:$0xff]
        %v515 = vld [vmem:[%s118 + $0xbb8] sm:$0xff]
        %v516 = vld [vmem:[%s118 + $0xbc0] sm:$0xff]
        %v517 = vld [vmem:[%s118 + $0xbc8] sm:$0xff]
        %v518 = vld [vmem:[%s118 + $0xbd0] sm:$0xff]
        %v519 = vld [vmem:[%s118 + $0xbd8] sm:$0xff]
        %v520 = vld [vmem:[%s118 + $0xbe0] sm:$0xff]
        %v521 = vld [vmem:[%s118 + $0xbe8] sm:$0xff]
        %v522 = vld [vmem:[%s118 + $0xbf0] sm:$0xff]
        %v523 = vld [vmem:[%s118 + $0xbf8] sm:$0xff]
        %v524 = vld [vmem:[%s118 + $0xc00] sm:$0xff]
        %v525 = vld [vmem:[%s118 + $0xc08] sm:$0xff]
        %v526 = vld [vmem:[%s118 + $0xc10] sm:$0xff]
        %v527 = vld [vmem:[%s118 + $0xc18] sm:$0xff]
        %v528 = vld [vmem:[%s118 + $0xc20] sm:$0xff]
        %v529 = vld [vmem:[%s118 + $0xc28] sm:$0xff]
        %v530 = vld [vmem:[%s118 + $0xc30] sm:$0xff]
        %v531 = vld [vmem:[%s118 + $0xc38] sm:$0xff]
        %v532 = vld [vmem:[%s118 + $0xc40] sm:$0xff]
        %v533 = vld [vmem:[%s118 + $0xc48] sm:$0xff]
        %v534 = vld [vmem:[%s118 + $0xc50] sm:$0xff]
        %v535 = vld [vmem:[%s118 + $0xc58] sm:$0xff]
        %v536 = vld [vmem:[%s118 + $0xc60] sm:$0xff]
        %v537 = vld [vmem:[%s118 + $0xc68] sm:$0xff]
        %v538 = vld [vmem:[%s118 + $0xc70] sm:$0xff]
        %v539 = vld [vmem:[%s118 + $0xc78] sm:$0xff]
        %v540 = vld [vmem:[%s118 + $0xc80] sm:$0xff]
        %v541 = vld [vmem:[%s118 + $0xc88] sm:$0xff]
        %v542 = vld [vmem:[%s118 + $0xc90] sm:$0xff]
        %v543 = vld [vmem:[%s118 + $0xc98] sm:$0xff]
        %v544 = vld [vmem:[%s118 + $0xca0] sm:$0xff]
        %v545 = vld [vmem:[%s118 + $0xca8] sm:$0xff]
        %v546 = vld [vmem:[%s118 + $0xcb0] sm:$0xff]
        %v547 = vld [vmem:[%s118 + $0xcb8] sm:$0xff]
        %v548 = vld [vmem:[%s118 + $0xcc0] sm:$0xff]
        %v549 = vld [vmem:[%s118 + $0xcc8] sm:$0xff]
        %v550 = vld [vmem:[%s118 + $0xcd0] sm:$0xff]
        %v551 = vld [vmem:[%s118 + $0xcd8] sm:$0xff]
        %v552 = vld [vmem:[%s118 + $0xce0] sm:$0xff]
        %v553 = vld [vmem:[%s118 + $0xce8] sm:$0xff]
        %v554 = vld [vmem:[%s118 + $0xcf0] sm:$0xff]
        %v555 = vld [vmem:[%s118 + $0xcf8] sm:$0xff]
        %v556 = vld [vmem:[%s118 + $0xd00] sm:$0xff]
        %v557 = vld [vmem:[%s118 + $0xd08] sm:$0xff]
        %v558 = vld [vmem:[%s118 + $0xd10] sm:$0xff]
        %v559 = vld [vmem:[%s118 + $0xd18] sm:$0xff]
        %v560 = vld [vmem:[%s118 + $0xd20] sm:$0xff]
        %v561 = vld [vmem:[%s118 + $0xd28] sm:$0xff]
        %v562 = vld [vmem:[%s118 + $0xd30] sm:$0xff]
        %v563 = vld [vmem:[%s118 + $0xd38] sm:$0xff]
        %v564 = vld [vmem:[%s118 + $0xd40] sm:$0xff]
        %v565 = vld [vmem:[%s118 + $0xd48] sm:$0xff]
        %v566 = vld [vmem:[%s118 + $0xd50] sm:$0xff]
        %v567 = vld [vmem:[%s118 + $0xd58] sm:$0xff]
        %v568 = vld [vmem:[%s118 + $0xd60] sm:$0xff]
        %v569 = vld [vmem:[%s118 + $0xd68] sm:$0xff]
        %v570 = vld [vmem:[%s118 + $0xd70] sm:$0xff]
        %v571 = vld [vmem:[%s118 + $0xd78] sm:$0xff]
        %v572 = vld [vmem:[%s118 + $0xd80] sm:$0xff]
        %v573 = vld [vmem:[%s118 + $0xd88] sm:$0xff]
        %v574 = vld [vmem:[%s118 + $0xd90] sm:$0xff]
        %v575 = vld [vmem:[%s118 + $0xd98] sm:$0xff]
        %v576 = vld [vmem:[%s118 + $0xda0] sm:$0xff]
        %v577 = vld [vmem:[%s118 + $0xda8] sm:$0xff]
        %v578 = vld [vmem:[%s118 + $0xdb0] sm:$0xff]
        %v579 = vld [vmem:[%s118 + $0xdb8] sm:$0xff]
        %v580 = vld [vmem:[%s118 + $0xdc0] sm:$0xff]
        %v581 = vld [vmem:[%s118 + $0xdc8] sm:$0xff]
        %v582 = vld [vmem:[%s118 + $0xdd0] sm:$0xff]
        %v583 = vld [vmem:[%s118 + $0xdd8] sm:$0xff]
        %v584 = vld [vmem:[%s118 + $0xde0] sm:$0xff]
        %v585 = vld [vmem:[%s118 + $0xde8] sm:$0xff]
        %v586 = vld [vmem:[%s118 + $0xdf0] sm:$0xff]
        %v587 = vld [vmem:[%s118 + $0xdf8] sm:$0xff]
        %v588 = vld [vmem:[%s118 + $0xe00] sm:$0xff]
        %v589 = vld [vmem:[%s118 + $0xe08] sm:$0xff]
        %v590 = vld [vmem:[%s118 + $0xe10] sm:$0xff]
        %v591 = vld [vmem:[%s118 + $0xe18] sm:$0xff]
        %v592 = vld [vmem:[%s118 + $0xe20] sm:$0xff]
        %v593 = vld [vmem:[%s118 + $0xe28] sm:$0xff]
        %v594 = vld [vmem:[%s118 + $0xe30] sm:$0xff]
        %v595 = vld [vmem:[%s118 + $0xe38] sm:$0xff]
        %v596 = vld [vmem:[%s118 + $0xe40] sm:$0xff]
        %v597 = vld [vmem:[%s118 + $0xe48] sm:$0xff]
        %v598 = vld [vmem:[%s118 + $0xe50] sm:$0xff]
        %v599 = vld [vmem:[%s118 + $0xe58] sm:$0xff]
        %v600 = vld [vmem:[%s118 + $0xe60] sm:$0xff]
        %v601 = vld [vmem:[%s118 + $0xe68] sm:$0xff]
        %v602 = vld [vmem:[%s118 + $0xe70] sm:$0xff]
        %v603 = vld [vmem:[%s118 + $0xe78] sm:$0xff]
        %v604 = vld [vmem:[%s118 + $0xe80] sm:$0xff]
        %v605 = vld [vmem:[%s118 + $0xe88] sm:$0xff]
        %v606 = vld [vmem:[%s118 + $0xe90] sm:$0xff]
        %v607 = vld [vmem:[%s118 + $0xe98] sm:$0xff]
        %v608 = vld [vmem:[%s118 + $0xea0] sm:$0xff]
        %v609 = vld [vmem:[%s118 + $0xea8] sm:$0xff]
        %v610 = vld [vmem:[%s118 + $0xeb0] sm:$0xff]
        %v611 = vld [vmem:[%s118 + $0xeb8] sm:$0xff]
        %v612 = vld [vmem:[%s118 + $0xec0] sm:$0xff]
        %v613 = vld [vmem:[%s118 + $0xec8] sm:$0xff]
        %v614 = vld [vmem:[%s118 + $0xed0] sm:$0xff]
        %v615 = vld [vmem:[%s118 + $0xed8] sm:$0xff]
        %v616 = vld [vmem:[%s118 + $0xee0] sm:$0xff]
        %v617 = vld [vmem:[%s118 + $0xee8] sm:$0xff]
        %v618 = vld [vmem:[%s118 + $0xef0] sm:$0xff]
        %v619 = vld [vmem:[%s118 + $0xef8] sm:$0xff]
        %v620 = vld [vmem:[%s118 + $0xf00] sm:$0xff]
        %v621 = vld [vmem:[%s118 + $0xf08] sm:$0xff]
        %v622 = vld [vmem:[%s118 + $0xf10] sm:$0xff]
        %v623 = vld [vmem:[%s118 + $0xf18] sm:$0xff]
        %v624 = vld [vmem:[%s118 + $0xf20] sm:$0xff]
        %v625 = vld [vmem:[%s118 + $0xf28] sm:$0xff]
        %v626 = vld [vmem:[%s118 + $0xf30] sm:$0xff]
        %v627 = vld [vmem:[%s118 + $0xf38] sm:$0xff]
        %v628 = vld [vmem:[%s118 + $0xf40] sm:$0xff]
        %v629 = vld [vmem:[%s118 + $0xf48] sm:$0xff]
        %v630 = vld [vmem:[%s118 + $0xf50] sm:$0xff]
        %v631 = vld [vmem:[%s118 + $0xf58] sm:$0xff]
        %v632 = vld [vmem:[%s118 + $0xf60] sm:$0xff]
        %v633 = vld [vmem:[%s118 + $0xf68] sm:$0xff]
        %v634 = vld [vmem:[%s118 + $0xf70] sm:$0xff]
        %v635 = vld [vmem:[%s118 + $0xf78] sm:$0xff]
        %v636 = vld [vmem:[%s118 + $0xf80] sm:$0xff]
        %v637 = vld [vmem:[%s118 + $0xf88] sm:$0xff]
        %v638 = vld [vmem:[%s118 + $0xf90] sm:$0xff]
        %v639 = vld [vmem:[%s118 + $0xf98] sm:$0xff]
        %v640 = vld [vmem:[%s118 + $0xfa0] sm:$0xff]
        %v641 = vld [vmem:[%s118 + $0xfa8] sm:$0xff]
        %v642 = vld [vmem:[%s118 + $0xfb0] sm:$0xff]
        %v643 = vld [vmem:[%s118 + $0xfb8] sm:$0xff]
        %v644 = vld [vmem:[%s118 + $0xfc0] sm:$0xff]
        %v645 = vld [vmem:[%s118 + $0xfc8] sm:$0xff]
        %v646 = vld [vmem:[%s118 + $0xfd0] sm:$0xff]
        %v647 = vld [vmem:[%s118 + $0xfd8] sm:$0xff]
        %v648 = vld [vmem:[%s118 + $0xfe0] sm:$0xff]
        %v649 = vld [vmem:[%s118 + $0xfe8] sm:$0xff]
        %v650 = vld [vmem:[%s118 + $0xff0] sm:$0xff]
        %v651 = vld [vmem:[%s118 + $0xff8] sm:$0xff]
        %v652 = vld [vmem:[%s118 + $0x1000] sm:$0xff]
        %v653 = vld [vmem:[%s118 + $0x1008] sm:$0xff]
        %v654 = vld [vmem:[%s118 + $0x1010] sm:$0xff]
        %v655 = vld [vmem:[%s118 + $0x1018] sm:$0xff]
        %v656 = vld [vmem:[%s118 + $0x1020] sm:$0xff]
        %v657 = vld [vmem:[%s118 + $0x1028] sm:$0xff]
        %v658 = vld [vmem:[%s118 + $0x1030] sm:$0xff]
        %v659 = vld [vmem:[%s118 + $0x1038] sm:$0xff]
        %v660 = vld [vmem:[%s118 + $0x1040] sm:$0xff]
        %v661 = vld [vmem:[%s118 + $0x1048] sm:$0xff]
        %v662 = vld [vmem:[%s118 + $0x1050] sm:$0xff]
        %v663 = vld [vmem:[%s118 + $0x1058] sm:$0xff]
        %v664 = vld [vmem:[%s118 + $0x1060] sm:$0xff]
        %v665 = vld [vmem:[%s118 + $0x1068] sm:$0xff]
        %v666 = vld [vmem:[%s118 + $0x1070] sm:$0xff]
        %v667 = vld [vmem:[%s118 + $0x1078] sm:$0xff]
        %v668 = vld [vmem:[%s118 + $0x1080] sm:$0xff]
        %v669 = vld [vmem:[%s118 + $0x1088] sm:$0xff]
        %v670 = vld [vmem:[%s118 + $0x1090] sm:$0xff]
        %v671 = vld [vmem:[%s118 + $0x1098] sm:$0xff]
        %v672 = vld [vmem:[%s118 + $0x10a0] sm:$0xff]
        %v673 = vld [vmem:[%s118 + $0x10a8] sm:$0xff]
        %v674 = vld [vmem:[%s118 + $0x10b0] sm:$0xff]
        %v675 = vld [vmem:[%s118 + $0x10b8] sm:$0xff]
        %v676 = vld [vmem:[%s118 + $0x10c0] sm:$0xff]
        %v677 = vld [vmem:[%s118 + $0x10c8] sm:$0xff]
        %v678 = vld [vmem:[%s118 + $0x10d0] sm:$0xff]
        %v679 = vld [vmem:[%s118 + $0x10d8] sm:$0xff]
        %v680 = vld [vmem:[%s118 + $0x10e0] sm:$0xff]
        %v681 = vld [vmem:[%s118 + $0x10e8] sm:$0xff]
        %v682 = vld [vmem:[%s118 + $0x10f0] sm:$0xff]
        %v683 = vld [vmem:[%s118 + $0x10f8] sm:$0xff]
        %v684 = vld [vmem:[%s118 + $0x1100] sm:$0xff]
        %v685 = vld [vmem:[%s118 + $0x1108] sm:$0xff]
        %v686 = vld [vmem:[%s118 + $0x1110] sm:$0xff]
        %v687 = vld [vmem:[%s118 + $0x1118] sm:$0xff]
        %v688 = vld [vmem:[%s118 + $0x1120] sm:$0xff]
        %v689 = vld [vmem:[%s118 + $0x1128] sm:$0xff]
        %v690 = vld [vmem:[%s118 + $0x1130] sm:$0xff]
        %v691 = vld [vmem:[%s118 + $0x1138] sm:$0xff]
        %v692 = vld [vmem:[%s118 + $0x1140] sm:$0xff]
        %v693 = vld [vmem:[%s118 + $0x1148] sm:$0xff]
        %v694 = vld [vmem:[%s118 + $0x1150] sm:$0xff]
        %v695 = vld [vmem:[%s118 + $0x1158] sm:$0xff]
        %v696 = vld [vmem:[%s118 + $0x1160] sm:$0xff]
        %v697 = vld [vmem:[%s118 + $0x1168] sm:$0xff]
        %v698 = vld [vmem:[%s118 + $0x1170] sm:$0xff]
        %v699 = vld [vmem:[%s118 + $0x1178] sm:$0xff]
        %v700 = vld [vmem:[%s118 + $0x1180] sm:$0xff]
        %v701 = vld [vmem:[%s118 + $0x1188] sm:$0xff]
        %v702 = vld [vmem:[%s118 + $0x1190] sm:$0xff]
        %v703 = vld [vmem:[%s118 + $0x1198] sm:$0xff]
        %v704 = vld [vmem:[%s118 + $0x11a0] sm:$0xff]
        %v705 = vld [vmem:[%s118 + $0x11a8] sm:$0xff]
        %v706 = vld [vmem:[%s118 + $0x11b0] sm:$0xff]
        %v707 = vld [vmem:[%s118 + $0x11b8] sm:$0xff]
        %v708 = vld [vmem:[%s118 + $0x11c0] sm:$0xff]
        %v709 = vld [vmem:[%s118 + $0x11c8] sm:$0xff]
        %v710 = vld [vmem:[%s118 + $0x11d0] sm:$0xff]
        %v711 = vld [vmem:[%s118 + $0x11d8] sm:$0xff]
        %v712 = vld [vmem:[%s118 + $0x11e0] sm:$0xff]
        %v713 = vld [vmem:[%s118 + $0x11e8] sm:$0xff]
        %v714 = vld [vmem:[%s118 + $0x11f0] sm:$0xff]
        %v715 = vld [vmem:[%s118 + $0x11f8] sm:$0xff]
        %v716 = vld [vmem:[%s118 + $0x1200] sm:$0xff]
        %v717 = vld [vmem:[%s118 + $0x1208] sm:$0xff]
        %v718 = vld [vmem:[%s118 + $0x1210] sm:$0xff]
        %v719 = vld [vmem:[%s118 + $0x1218] sm:$0xff]
        %v720 = vld [vmem:[%s118 + $0x1220] sm:$0xff]
        %v721 = vld [vmem:[%s118 + $0x1228] sm:$0xff]
        %v722 = vld [vmem:[%s118 + $0x1230] sm:$0xff]
        %v723 = vld [vmem:[%s118 + $0x1238] sm:$0xff]
        %v724 = vld [vmem:[%s118 + $0x1240] sm:$0xff]
        %v725 = vld [vmem:[%s118 + $0x1248] sm:$0xff]
        %v726 = vld [vmem:[%s118 + $0x1250] sm:$0xff]
        %v727 = vld [vmem:[%s118 + $0x1258] sm:$0xff]
        %v728 = vld [vmem:[%s118 + $0x1260] sm:$0xff]
        %v729 = vld [vmem:[%s118 + $0x1268] sm:$0xff]
        %v730 = vld [vmem:[%s118 + $0x1270] sm:$0xff]
        %v731 = vld [vmem:[%s118 + $0x1278] sm:$0xff]
        %v732 = vld [vmem:[%s118 + $0x1280] sm:$0xff]
        %v733 = vld [vmem:[%s118 + $0x1288] sm:$0xff]
        %v734 = vld [vmem:[%s118 + $0x1290] sm:$0xff]
        %v735 = vld [vmem:[%s118 + $0x1298] sm:$0xff]
        %v736 = vld [vmem:[%s118 + $0x12a0] sm:$0xff]
        %v737 = vld [vmem:[%s118 + $0x12a8] sm:$0xff]
        %v738 = vld [vmem:[%s118 + $0x12b0] sm:$0xff]
        %v739 = vld [vmem:[%s118 + $0x12b8] sm:$0xff]
        %v740 = vld [vmem:[%s118 + $0x12c0] sm:$0xff]
        %v741 = vld [vmem:[%s118 + $0x12c8] sm:$0xff]
        %v742 = vld [vmem:[%s118 + $0x12d0] sm:$0xff]
        %v743 = vld [vmem:[%s118 + $0x12d8] sm:$0xff]
        %v744 = vld [vmem:[%s118 + $0x12e0] sm:$0xff]
        %v745 = vld [vmem:[%s118 + $0x12e8] sm:$0xff]
        %v746 = vld [vmem:[%s118 + $0x12f0] sm:$0xff]
        %v747 = vld [vmem:[%s118 + $0x12f8] sm:$0xff]
        %v748 = vld [vmem:[%s118 + $0x1300] sm:$0xff]
        %v749 = vld [vmem:[%s118 + $0x1308] sm:$0xff]
        %v750 = vld [vmem:[%s118 + $0x1310] sm:$0xff]
        %v751 = vld [vmem:[%s118 + $0x1318] sm:$0xff]
        %v752 = vld [vmem:[%s118 + $0x1320] sm:$0xff]
        %v753 = vld [vmem:[%s118 + $0x1328] sm:$0xff]
        %v754 = vld [vmem:[%s118 + $0x1330] sm:$0xff]
        %v755 = vld [vmem:[%s118 + $0x1338] sm:$0xff]
        %v756 = vld [vmem:[%s118 + $0x1340] sm:$0xff]
        %v757 = vld [vmem:[%s118 + $0x1348] sm:$0xff]
        %v758 = vld [vmem:[%s118 + $0x1350] sm:$0xff]
        %v759 = vld [vmem:[%s118 + $0x1358] sm:$0xff]
        %v760 = vld [vmem:[%s118 + $0x1360] sm:$0xff]
        %v761 = vld [vmem:[%s118 + $0x1368] sm:$0xff]
        %v762 = vld [vmem:[%s118 + $0x1370] sm:$0xff]
        %v763 = vld [vmem:[%s118 + $0x1378] sm:$0xff]
        %v764 = vld [vmem:[%s118 + $0x1380] sm:$0xff]
        %v765 = vld [vmem:[%s118 + $0x1388] sm:$0xff]
        %v766 = vld [vmem:[%s118 + $0x1390] sm:$0xff]
        %v767 = vld [vmem:[%s118 + $0x1398] sm:$0xff]
        %v768 = vld [vmem:[%s118 + $0x13a0] sm:$0xff]
        %v769 = vld [vmem:[%s118 + $0x13a8] sm:$0xff]
        %v770 = vld [vmem:[%s118 + $0x13b0] sm:$0xff]
        %v771 = vld [vmem:[%s118 + $0x13b8] sm:$0xff]
        %v772 = vld [vmem:[%s118 + $0x13c0] sm:$0xff]
        %v773 = vld [vmem:[%s118 + $0x13c8] sm:$0xff]
        %v774 = vld [vmem:[%s118 + $0x13d0] sm:$0xff]
        %v775 = vld [vmem:[%s118 + $0x13d8] sm:$0xff]
        %v776 = vld [vmem:[%s118 + $0x13e0] sm:$0xff]
        %v777 = vld [vmem:[%s118 + $0x13e8] sm:$0xff]
        %v778 = vld [vmem:[%s118 + $0x13f0] sm:$0xff]
        %v779 = vld [vmem:[%s118 + $0x13f8] sm:$0xff]
        %v780 = vld [vmem:[%s118 + $0x1400] sm:$0xff]
        %v781 = vld [vmem:[%s118 + $0x1408] sm:$0xff]
        %v782 = vld [vmem:[%s118 + $0x1410] sm:$0xff]
        %v783 = vld [vmem:[%s118 + $0x1418] sm:$0xff]
        %v784 = vld [vmem:[%s118 + $0x1420] sm:$0xff]
        %v785 = vld [vmem:[%s118 + $0x1428] sm:$0xff]
        %v786 = vld [vmem:[%s118 + $0x1430] sm:$0xff]
        %v787 = vld [vmem:[%s118 + $0x1438] sm:$0xff]
        %v788 = vld [vmem:[%s118 + $0x1440] sm:$0xff]
        %v789 = vld [vmem:[%s118 + $0x1448] sm:$0xff]
        %v790 = vld [vmem:[%s118 + $0x1450] sm:$0xff]
        %v791 = vld [vmem:[%s118 + $0x1458] sm:$0xff]
        %v792 = vld [vmem:[%s118 + $0x1460] sm:$0xff]
        %v793 = vld [vmem:[%s118 + $0x1468] sm:$0xff]
        %v794 = vld [vmem:[%s118 + $0x1470] sm:$0xff]
        %v795 = vld [vmem:[%s118 + $0x1478] sm:$0xff]
        %v796 = vld [vmem:[%s118 + $0x1480] sm:$0xff]
        %v797 = vld [vmem:[%s118 + $0x1488] sm:$0xff]
        %v798 = vld [vmem:[%s118 + $0x1490] sm:$0xff]
        %v799 = vld [vmem:[%s118 + $0x1498] sm:$0xff]
        %v800 = vld [vmem:[%s118 + $0x14a0] sm:$0xff]
        %v801 = vld [vmem:[%s118 + $0x14a8] sm:$0xff]
        %v802 = vld [vmem:[%s118 + $0x14b0] sm:$0xff]
        %v803 = vld [vmem:[%s118 + $0x14b8] sm:$0xff]
        %v804 = vld [vmem:[%s118 + $0x14c0] sm:$0xff]
        %v805 = vld [vmem:[%s118 + $0x14c8] sm:$0xff]
        %v806 = vld [vmem:[%s118 + $0x14d0] sm:$0xff]
        %v807 = vld [vmem:[%s118 + $0x14d8] sm:$0xff]
        %v808 = vld [vmem:[%s118 + $0x14e0] sm:$0xff]
        %v809 = vld [vmem:[%s118 + $0x14e8] sm:$0xff]
        %v810 = vld [vmem:[%s118 + $0x14f0] sm:$0xff]
        %v811 = vld [vmem:[%s118 + $0x14f8] sm:$0xff]
        %v812 = vld [vmem:[%s118 + $0x1500] sm:$0xff]
        %v813 = vld [vmem:[%s118 + $0x1508] sm:$0xff]
        %v814 = vld [vmem:[%s118 + $0x1510] sm:$0xff]
        %v815 = vld [vmem:[%s118 + $0x1518] sm:$0xff]
        %v816 = vld [vmem:[%s118 + $0x1520] sm:$0xff]
        %v817 = vld [vmem:[%s118 + $0x1528] sm:$0xff]
        %v818 = vld [vmem:[%s118 + $0x1530] sm:$0xff]
        %v819 = vld [vmem:[%s118 + $0x1538] sm:$0xff]
        %v820 = vld [vmem:[%s118 + $0x1540] sm:$0xff]
        %v821 = vld [vmem:[%s118 + $0x1548] sm:$0xff]
        %v822 = vld [vmem:[%s118 + $0x1550] sm:$0xff]
        %v823 = vld [vmem:[%s118 + $0x1558] sm:$0xff]
        %v824 = vld [vmem:[%s118 + $0x1560] sm:$0xff]
        %v825 = vld [vmem:[%s118 + $0x1568] sm:$0xff]
        %v826 = vld [vmem:[%s118 + $0x1570] sm:$0xff]
        %v827 = vld [vmem:[%s118 + $0x1578] sm:$0xff]
        %v828 = vld [vmem:[%s118 + $0x1580] sm:$0xff]
        %v829 = vld [vmem:[%s118 + $0x1588] sm:$0xff]
        %v830 = vld [vmem:[%s118 + $0x1590] sm:$0xff]
        %v831 = vld [vmem:[%s118 + $0x1598] sm:$0xff]
        %v832 = vld [vmem:[%s118 + $0x15a0] sm:$0xff]
        %v833 = vld [vmem:[%s118 + $0x15a8] sm:$0xff]
        %v834 = vld [vmem:[%s118 + $0x15b0] sm:$0xff]
        %v835 = vld [vmem:[%s118 + $0x15b8] sm:$0xff]
        %v836 = vld [vmem:[%s118 + $0x15c0] sm:$0xff]
        %v837 = vld [vmem:[%s118 + $0x15c8] sm:$0xff]
        %v838 = vld [vmem:[%s118 + $0x15d0] sm:$0xff]
        %v839 = vld [vmem:[%s118 + $0x15d8] sm:$0xff]
        %v840 = vld [vmem:[%s118 + $0x15e0] sm:$0xff]
        %v841 = vld [vmem:[%s118 + $0x15e8] sm:$0xff]
        %v842 = vld [vmem:[%s118 + $0x15f0] sm:$0xff]
        %v843 = vld [vmem:[%s118 + $0x15f8] sm:$0xff]
        %v844 = vld [vmem:[%s118 + $0x1600] sm:$0xff]
        %v845 = vld [vmem:[%s118 + $0x1608] sm:$0xff]
        %v846 = vld [vmem:[%s118 + $0x1610] sm:$0xff]
        %v847 = vld [vmem:[%s118 + $0x1618] sm:$0xff]
        %v848 = vld [vmem:[%s118 + $0x1620] sm:$0xff]
        %v849 = vld [vmem:[%s118 + $0x1628] sm:$0xff]
        %v850 = vld [vmem:[%s118 + $0x1630] sm:$0xff]
        %v851 = vld [vmem:[%s118 + $0x1638] sm:$0xff]
        %v852 = vld [vmem:[%s118 + $0x1640] sm:$0xff]
        %v853 = vld [vmem:[%s118 + $0x1648] sm:$0xff]
        %v854 = vld [vmem:[%s118 + $0x1650] sm:$0xff]
        %v855 = vld [vmem:[%s118 + $0x1658] sm:$0xff]
        %v856 = vld [vmem:[%s118 + $0x1660] sm:$0xff]
        %v857 = vld [vmem:[%s118 + $0x1668] sm:$0xff]
        %v858 = vld [vmem:[%s118 + $0x1670] sm:$0xff]
        %v859 = vld [vmem:[%s118 + $0x1678] sm:$0xff]
        %v860 = vld [vmem:[%s118 + $0x1680] sm:$0xff]
        %v861 = vld [vmem:[%s118 + $0x1688] sm:$0xff]
        %v862 = vld [vmem:[%s118 + $0x1690] sm:$0xff]
        %v863 = vld [vmem:[%s118 + $0x1698] sm:$0xff]
        %v864 = vld [vmem:[%s118 + $0x16a0] sm:$0xff]
        %v865 = vld [vmem:[%s118 + $0x16a8] sm:$0xff]
        %v866 = vld [vmem:[%s118 + $0x16b0] sm:$0xff]
        %v867 = vld [vmem:[%s118 + $0x16b8] sm:$0xff]
        %v868 = vld [vmem:[%s118 + $0x16c0] sm:$0xff]
        %v869 = vld [vmem:[%s118 + $0x16c8] sm:$0xff]
        %v870 = vld [vmem:[%s118 + $0x16d0] sm:$0xff]
        %v871 = vld [vmem:[%s118 + $0x16d8] sm:$0xff]
        %v872 = vld [vmem:[%s118 + $0x16e0] sm:$0xff]
        %v873 = vld [vmem:[%s118 + $0x16e8] sm:$0xff]
        %v874 = vld [vmem:[%s118 + $0x16f0] sm:$0xff]
        %v875 = vld [vmem:[%s118 + $0x16f8] sm:$0xff]
        %v876 = vld [vmem:[%s118 + $0x1700] sm:$0xff]
        %v877 = vld [vmem:[%s118 + $0x1708] sm:$0xff]
        %v878 = vld [vmem:[%s118 + $0x1710] sm:$0xff]
        %v879 = vld [vmem:[%s118 + $0x1718] sm:$0xff]
        %v880 = vld [vmem:[%s118 + $0x1720] sm:$0xff]
        %v881 = vld [vmem:[%s118 + $0x1728] sm:$0xff]
        %v882 = vld [vmem:[%s118 + $0x1730] sm:$0xff]
        %v883 = vld [vmem:[%s118 + $0x1738] sm:$0xff]
        %v884 = vld [vmem:[%s118 + $0x1740] sm:$0xff]
        %v885 = vld [vmem:[%s118 + $0x1748] sm:$0xff]
        %v886 = vld [vmem:[%s118 + $0x1750] sm:$0xff]
        %v887 = vld [vmem:[%s118 + $0x1758] sm:$0xff]
        %v888 = vld [vmem:[%s118 + $0x1760] sm:$0xff]
        %v889 = vld [vmem:[%s118 + $0x1768] sm:$0xff]
        %v890 = vld [vmem:[%s118 + $0x1770] sm:$0xff]
        %v891 = vld [vmem:[%s118 + $0x1778] sm:$0xff]
        %v892 = vld [vmem:[%s118 + $0x1780] sm:$0xff]
        %v893 = vld [vmem:[%s118 + $0x1788] sm:$0xff]
        %v894 = vld [vmem:[%s118 + $0x1790] sm:$0xff]
        %v895 = vld [vmem:[%s118 + $0x1798] sm:$0xff]
        %v896 = vld [vmem:[%s118 + $0x17a0] sm:$0xff]
        %v897 = vld [vmem:[%s118 + $0x17a8] sm:$0xff]
        %v898 = vld [vmem:[%s118 + $0x17b0] sm:$0xff]
        %v899 = vld [vmem:[%s118 + $0x17b8] sm:$0xff]
        %v900 = vld [vmem:[%s118 + $0x17c0] sm:$0xff]
        %v901 = vld [vmem:[%s118 + $0x17c8] sm:$0xff]
        %v902 = vld [vmem:[%s118 + $0x17d0] sm:$0xff]
        %v903 = vld [vmem:[%s118 + $0x17d8] sm:$0xff]
        %v904 = vld [vmem:[%s118 + $0x17e0] sm:$0xff]
        %v905 = vld [vmem:[%s118 + $0x17e8] sm:$0xff]
        %v906 = vld [vmem:[%s118 + $0x17f0] sm:$0xff]
        %v907 = vld [vmem:[%s118 + $0x17f8] sm:$0xff]
        %v908 = vld [vmem:[%s118 + $0x1800] sm:$0xff]
        %v909 = vld [vmem:[%s118 + $0x1808] sm:$0xff]
        %v910 = vld [vmem:[%s118 + $0x1810] sm:$0xff]
        %v911 = vld [vmem:[%s118 + $0x1818] sm:$0xff]
        %v912 = vld [vmem:[%s118 + $0x1820] sm:$0xff]
        %v913 = vld [vmem:[%s118 + $0x1828] sm:$0xff]
        %v914 = vld [vmem:[%s118 + $0x1830] sm:$0xff]
        %v915 = vld [vmem:[%s118 + $0x1838] sm:$0xff]
        %v916 = vld [vmem:[%s118 + $0x1840] sm:$0xff]
        %v917 = vld [vmem:[%s118 + $0x1848] sm:$0xff]
        %v918 = vld [vmem:[%s118 + $0x1850] sm:$0xff]
        %v919 = vld [vmem:[%s118 + $0x1858] sm:$0xff]
        %v920 = vld [vmem:[%s118 + $0x1860] sm:$0xff]
        %v921 = vld [vmem:[%s118 + $0x1868] sm:$0xff]
        %v922 = vld [vmem:[%s118 + $0x1870] sm:$0xff]
        %v923 = vld [vmem:[%s118 + $0x1878] sm:$0xff]
        %v924 = vld [vmem:[%s118 + $0x1880] sm:$0xff]
        %v925 = vld [vmem:[%s118 + $0x1888] sm:$0xff]
        %v926 = vld [vmem:[%s118 + $0x1890] sm:$0xff]
        %v927 = vld [vmem:[%s118 + $0x1898] sm:$0xff]
        %v928 = vld [vmem:[%s118 + $0x18a0] sm:$0xff]
        %v929 = vld [vmem:[%s118 + $0x18a8] sm:$0xff]
        %v930 = vld [vmem:[%s118 + $0x18b0] sm:$0xff]
        %v931 = vld [vmem:[%s118 + $0x18b8] sm:$0xff]
        %v932 = vld [vmem:[%s118 + $0x18c0] sm:$0xff]
        %v933 = vld [vmem:[%s118 + $0x18c8] sm:$0xff]
        %v934 = vld [vmem:[%s118 + $0x18d0] sm:$0xff]
        %v935 = vld [vmem:[%s118 + $0x18d8] sm:$0xff]
        %v936 = vld [vmem:[%s118 + $0x18e0] sm:$0xff]
        %v937 = vld [vmem:[%s118 + $0x18e8] sm:$0xff]
        %v938 = vld [vmem:[%s118 + $0x18f0] sm:$0xff]
        %v939 = vld [vmem:[%s118 + $0x18f8] sm:$0xff]
        %v940 = vld [vmem:[%s118 + $0x1900] sm:$0xff]
        %v941 = vld [vmem:[%s118 + $0x1908] sm:$0xff]
        %v942 = vld [vmem:[%s118 + $0x1910] sm:$0xff]
        %v943 = vld [vmem:[%s118 + $0x1918] sm:$0xff]
        %v944 = vld [vmem:[%s118 + $0x1920] sm:$0xff]
        %v945 = vld [vmem:[%s118 + $0x1928] sm:$0xff]
        %v946 = vld [vmem:[%s118 + $0x1930] sm:$0xff]
        %v947 = vld [vmem:[%s118 + $0x1938] sm:$0xff]
        %v948 = vld [vmem:[%s118 + $0x1940] sm:$0xff]
        %v949 = vld [vmem:[%s118 + $0x1948] sm:$0xff]
        %v950 = vld [vmem:[%s118 + $0x1950] sm:$0xff]
        %v951 = vld [vmem:[%s118 + $0x1958] sm:$0xff]
        %v952 = vld [vmem:[%s118 + $0x1960] sm:$0xff]
        %v953 = vld [vmem:[%s118 + $0x1968] sm:$0xff]
        %v954 = vld [vmem:[%s118 + $0x1970] sm:$0xff]
        %v955 = vld [vmem:[%s118 + $0x1978] sm:$0xff]
        %v956 = vld [vmem:[%s118 + $0x1980] sm:$0xff]
        %v957 = vld [vmem:[%s118 + $0x1988] sm:$0xff]
        %v958 = vld [vmem:[%s118 + $0x1990] sm:$0xff]
        %v959 = vld [vmem:[%s118 + $0x1998] sm:$0xff]
        %v960 = vld [vmem:[%s118 + $0x19a0] sm:$0xff]
        %v961 = vld [vmem:[%s118 + $0x19a8] sm:$0xff]
        %v962 = vld [vmem:[%s118 + $0x19b0] sm:$0xff]
        %v963 = vld [vmem:[%s118 + $0x19b8] sm:$0xff]
        %v964 = vld [vmem:[%s118 + $0x19c0] sm:$0xff]
        %v965 = vld [vmem:[%s118 + $0x19c8] sm:$0xff]
        %v966 = vld [vmem:[%s118 + $0x19d0] sm:$0xff]
        %v967 = vld [vmem:[%s118 + $0x19d8] sm:$0xff]
        %v968 = vld [vmem:[%s118 + $0x19e0] sm:$0xff]
        %v969 = vld [vmem:[%s118 + $0x19e8] sm:$0xff]
        %v970 = vld [vmem:[%s118 + $0x19f0] sm:$0xff]
        %v971 = vld [vmem:[%s118 + $0x19f8] sm:$0xff]
        %v972 = vld [vmem:[%s118 + $0x1a00] sm:$0xff]
        %v973 = vld [vmem:[%s118 + $0x1a08] sm:$0xff]
        %v974 = vld [vmem:[%s118 + $0x1a10] sm:$0xff]
        %v975 = vld [vmem:[%s118 + $0x1a18] sm:$0xff]
        %v976 = vld [vmem:[%s118 + $0x1a20] sm:$0xff]
        %v977 = vld [vmem:[%s118 + $0x1a28] sm:$0xff]
        %v978 = vld [vmem:[%s118 + $0x1a30] sm:$0xff]
        %v979 = vld [vmem:[%s118 + $0x1a38] sm:$0xff]
        %v980 = vld [vmem:[%s118 + $0x1a40] sm:$0xff]
        %v981 = vld [vmem:[%s118 + $0x1a48] sm:$0xff]
        %v982 = vld [vmem:[%s118 + $0x1a50] sm:$0xff]
        %v983 = vld [vmem:[%s118 + $0x1a58] sm:$0xff]
        %v984 = vld [vmem:[%s118 + $0x1a60] sm:$0xff]
        %v985 = vld [vmem:[%s118 + $0x1a68] sm:$0xff]
        %v986 = vld [vmem:[%s118 + $0x1a70] sm:$0xff]
        %v987 = vld [vmem:[%s118 + $0x1a78] sm:$0xff]
        %v988 = vld [vmem:[%s118 + $0x1a80] sm:$0xff]
        %v989 = vld [vmem:[%s118 + $0x1a88] sm:$0xff]
        %v990 = vld [vmem:[%s118 + $0x1a90] sm:$0xff]
        %v991 = vld [vmem:[%s118 + $0x1a98] sm:$0xff]
        %v992 = vld [vmem:[%s118 + $0x1aa0] sm:$0xff]
        %v993 = vld [vmem:[%s118 + $0x1aa8] sm:$0xff]
        %v994 = vld [vmem:[%s118 + $0x1ab0] sm:$0xff]
        %v995 = vld [vmem:[%s118 + $0x1ab8] sm:$0xff]
        %v996 = vld [vmem:[%s118 + $0x1ac0] sm:$0xff]
        %v997 = vld [vmem:[%s118 + $0x1ac8] sm:$0xff]
        %v998 = vld [vmem:[%s118 + $0x1ad0] sm:$0xff]
        %v999 = vld [vmem:[%s118 + $0x1ad8] sm:$0xff]
        %v1000 = vld [vmem:[%s118 + $0x1ae0] sm:$0xff]
        %v1001 = vld [vmem:[%s118 + $0x1ae8] sm:$0xff]
        %v1002 = vld [vmem:[%s118 + $0x1af0] sm:$0xff]
        %v1003 = vld [vmem:[%s118 + $0x1af8] sm:$0xff]
        %v1004 = vld [vmem:[%s118 + $0x1b00] sm:$0xff]
        %v1005 = vld [vmem:[%s118 + $0x1b08] sm:$0xff]
        %v1006 = vld [vmem:[%s118 + $0x1b10] sm:$0xff]
        %v1007 = vld [vmem:[%s118 + $0x1b18] sm:$0xff]
        %v1008 = vld [vmem:[%s118 + $0x1b20] sm:$0xff]
        %v1009 = vld [vmem:[%s118 + $0x1b28] sm:$0xff]
        %v1010 = vld [vmem:[%s118 + $0x1b30] sm:$0xff]
        %v1011 = vld [vmem:[%s118 + $0x1b38] sm:$0xff]
        %v1012 = vld [vmem:[%s118 + $0x1b40] sm:$0xff]
        %v1013 = vld [vmem:[%s118 + $0x1b48] sm:$0xff]
        %v1014 = vld [vmem:[%s118 + $0x1b50] sm:$0xff]
        %v1015 = vld [vmem:[%s118 + $0x1b58] sm:$0xff]
        %v1016 = vld [vmem:[%s118 + $0x1b60] sm:$0xff]
        %v1017 = vld [vmem:[%s118 + $0x1b68] sm:$0xff]
        %v1018 = vld [vmem:[%s118 + $0x1b70] sm:$0xff]
        %v1019 = vld [vmem:[%s118 + $0x1b78] sm:$0xff]
        %v1020 = vld [vmem:[%s118 + $0x1b80] sm:$0xff]
        %v1021 = vld [vmem:[%s118 + $0x1b88] sm:$0xff]
        %v1022 = vld [vmem:[%s118 + $0x1b90] sm:$0xff]
        %v1023 = vld [vmem:[%s118 + $0x1b98] sm:$0xff]
        %v1024 = vld [vmem:[%s118 + $0x1ba0] sm:$0xff]
        %v1025 = vld [vmem:[%s118 + $0x1ba8] sm:$0xff]
        %v1026 = vld [vmem:[%s118 + $0x1bb0] sm:$0xff]
        %v1027 = vld [vmem:[%s118 + $0x1bb8] sm:$0xff]
        %v1028 = vld [vmem:[%s118 + $0x1bc0] sm:$0xff]
        %v1029 = vld [vmem:[%s118 + $0x1bc8] sm:$0xff]
        %v1030 = vld [vmem:[%s118 + $0x1bd0] sm:$0xff]
        %v1031 = vld [vmem:[%s118 + $0x1bd8] sm:$0xff]
        %v1032 = vld [vmem:[%s118 + $0x1be0] sm:$0xff]
        %v1033 = vld [vmem:[%s118 + $0x1be8] sm:$0xff]
        %v1034 = vld [vmem:[%s118 + $0x1bf0] sm:$0xff]
        %v1035 = vld [vmem:[%s118 + $0x1bf8] sm:$0xff]
        %v1036 = vld [vmem:[%s118 + $0x1c00] sm:$0xff]
        %v1037 = vld [vmem:[%s118 + $0x1c08] sm:$0xff]
        %v1038 = vld [vmem:[%s118 + $0x1c10] sm:$0xff]
        %v1039 = vld [vmem:[%s118 + $0x1c18] sm:$0xff]
        %v1040 = vld [vmem:[%s118 + $0x1c20] sm:$0xff]
        %v1041 = vld [vmem:[%s118 + $0x1c28] sm:$0xff]
        %v1042 = vld [vmem:[%s118 + $0x1c30] sm:$0xff]
        %v1043 = vld [vmem:[%s118 + $0x1c38] sm:$0xff]
        %v1044 = vld [vmem:[%s118 + $0x1c40] sm:$0xff]
        %v1045 = vld [vmem:[%s118 + $0x1c48] sm:$0xff]
        %v1046 = vld [vmem:[%s118 + $0x1c50] sm:$0xff]
        %v1047 = vld [vmem:[%s118 + $0x1c58] sm:$0xff]
        %v1048 = vld [vmem:[%s118 + $0x1c60] sm:$0xff]
        %v1049 = vld [vmem:[%s118 + $0x1c68] sm:$0xff]
        %v1050 = vld [vmem:[%s118 + $0x1c70] sm:$0xff]
        %v1051 = vld [vmem:[%s118 + $0x1c78] sm:$0xff]
        %v1052 = vld [vmem:[%s118 + $0x1c80] sm:$0xff]
        %v1053 = vld [vmem:[%s118 + $0x1c88] sm:$0xff]
        %v1054 = vld [vmem:[%s118 + $0x1c90] sm:$0xff]
        %v1055 = vld [vmem:[%s118 + $0x1c98] sm:$0xff]
        %v1056 = vld [vmem:[%s118 + $0x1ca0] sm:$0xff]
        %v1057 = vld [vmem:[%s118 + $0x1ca8] sm:$0xff]
        %v1058 = vld [vmem:[%s118 + $0x1cb0] sm:$0xff]
        %v1059 = vld [vmem:[%s118 + $0x1cb8] sm:$0xff]
        %v1060 = vld [vmem:[%s118 + $0x1cc0] sm:$0xff]
        %v1061 = vld [vmem:[%s118 + $0x1cc8] sm:$0xff]
        %v1062 = vld [vmem:[%s118 + $0x1cd0] sm:$0xff]
        %v1063 = vld [vmem:[%s118 + $0x1cd8] sm:$0xff]
        %v1064 = vld [vmem:[%s118 + $0x1ce0] sm:$0xff]
        %v1065 = vld [vmem:[%s118 + $0x1ce8] sm:$0xff]
        %v1066 = vld [vmem:[%s118 + $0x1cf0] sm:$0xff]
        %v1067 = vld [vmem:[%s118 + $0x1cf8] sm:$0xff]
        %v1068 = vld [vmem:[%s118 + $0x1d00] sm:$0xff]
        %v1069 = vld [vmem:[%s118 + $0x1d08] sm:$0xff]
        %v1070 = vld [vmem:[%s118 + $0x1d10] sm:$0xff]
        %v1071 = vld [vmem:[%s118 + $0x1d18] sm:$0xff]
        %v1072 = vld [vmem:[%s118 + $0x1d20] sm:$0xff]
        %v1073 = vld [vmem:[%s118 + $0x1d28] sm:$0xff]
        %v1074 = vld [vmem:[%s118 + $0x1d30] sm:$0xff]
        %v1075 = vld [vmem:[%s118 + $0x1d38] sm:$0xff]
        %v1076 = vld [vmem:[%s118 + $0x1d40] sm:$0xff]
        %v1077 = vld [vmem:[%s118 + $0x1d48] sm:$0xff]
        %v1078 = vld [vmem:[%s118 + $0x1d50] sm:$0xff]
        %v1079 = vld [vmem:[%s118 + $0x1d58] sm:$0xff]
        %v1080 = vld [vmem:[%s118 + $0x1d60] sm:$0xff]
        %v1081 = vld [vmem:[%s118 + $0x1d68] sm:$0xff]
        %v1082 = vld [vmem:[%s118 + $0x1d70] sm:$0xff]
        %v1083 = vld [vmem:[%s118 + $0x1d78] sm:$0xff]
        %v1084 = vld [vmem:[%s118 + $0x1d80] sm:$0xff]
        %v1085 = vld [vmem:[%s118 + $0x1d88] sm:$0xff]
        %v1086 = vld [vmem:[%s118 + $0x1d90] sm:$0xff]
        %v1087 = vld [vmem:[%s118 + $0x1d98] sm:$0xff]
        %v1088 = vld [vmem:[%s118 + $0x1da0] sm:$0xff]
        %v1089 = vld [vmem:[%s118 + $0x1da8] sm:$0xff]
        %v1090 = vld [vmem:[%s118 + $0x1db0] sm:$0xff]
        %v1091 = vld [vmem:[%s118 + $0x1db8] sm:$0xff]
        %v1092 = vld [vmem:[%s118 + $0x1dc0] sm:$0xff]
        %v1093 = vld [vmem:[%s118 + $0x1dc8] sm:$0xff]
        %v1094 = vld [vmem:[%s118 + $0x1dd0] sm:$0xff]
        %v1095 = vld [vmem:[%s118 + $0x1dd8] sm:$0xff]
        %v1096 = vld [vmem:[%s118 + $0x1de0] sm:$0xff]
        %v1097 = vld [vmem:[%s118 + $0x1de8] sm:$0xff]
        %v1098 = vld [vmem:[%s118 + $0x1df0] sm:$0xff]
        %v1099 = vld [vmem:[%s118 + $0x1df8] sm:$0xff]
        %v1100 = vld [vmem:[%s118 + $0x1e00] sm:$0xff]
        %v1101 = vld [vmem:[%s118 + $0x1e08] sm:$0xff]
        %v1102 = vld [vmem:[%s118 + $0x1e10] sm:$0xff]
        %v1103 = vld [vmem:[%s118 + $0x1e18] sm:$0xff]
        %v1104 = vld [vmem:[%s118 + $0x1e20] sm:$0xff]
        %v1105 = vld [vmem:[%s118 + $0x1e28] sm:$0xff]
        %v1106 = vld [vmem:[%s118 + $0x1e30] sm:$0xff]
        %v1107 = vld [vmem:[%s118 + $0x1e38] sm:$0xff]
        %v1108 = vld [vmem:[%s118 + $0x1e40] sm:$0xff]
        %v1109 = vld [vmem:[%s118 + $0x1e48] sm:$0xff]
        %v1110 = vld [vmem:[%s118 + $0x1e50] sm:$0xff]
        %v1111 = vld [vmem:[%s118 + $0x1e58] sm:$0xff]
        %v1112 = vld [vmem:[%s118 + $0x1e60] sm:$0xff]
        %v1113 = vld [vmem:[%s118 + $0x1e68] sm:$0xff]
        %v1114 = vld [vmem:[%s118 + $0x1e70] sm:$0xff]
        %v1115 = vld [vmem:[%s118 + $0x1e78] sm:$0xff]
        %v1116 = vld [vmem:[%s118 + $0x1e80] sm:$0xff]
        %v1117 = vld [vmem:[%s118 + $0x1e88] sm:$0xff]
        %v1118 = vld [vmem:[%s118 + $0x1e90] sm:$0xff]
        %v1119 = vld [vmem:[%s118 + $0x1e98] sm:$0xff]
        %v1120 = vld [vmem:[%s118 + $0x1ea0] sm:$0xff]
        %v1121 = vld [vmem:[%s118 + $0x1ea8] sm:$0xff]
        %v1122 = vld [vmem:[%s118 + $0x1eb0] sm:$0xff]
        %v1123 = vld [vmem:[%s118 + $0x1eb8] sm:$0xff]
        %v1124 = vld [vmem:[%s118 + $0x1ec0] sm:$0xff]
        %v1125 = vld [vmem:[%s118 + $0x1ec8] sm:$0xff]
        %v1126 = vld [vmem:[%s118 + $0x1ed0] sm:$0xff]
        %v1127 = vld [vmem:[%s118 + $0x1ed8] sm:$0xff]
        %v1128 = vld [vmem:[%s118 + $0x1ee0] sm:$0xff]
        %v1129 = vld [vmem:[%s118 + $0x1ee8] sm:$0xff]
        %v1130 = vld [vmem:[%s118 + $0x1ef0] sm:$0xff]
        %v1131 = vld [vmem:[%s118 + $0x1ef8] sm:$0xff]
        %v1132 = vld [vmem:[%s118 + $0x1f00] sm:$0xff]
        %v1133 = vld [vmem:[%s118 + $0x1f08] sm:$0xff]
        %v1134 = vld [vmem:[%s118 + $0x1f10] sm:$0xff]
        %v1135 = vld [vmem:[%s118 + $0x1f18] sm:$0xff]
        %v1136 = vld [vmem:[%s118 + $0x1f20] sm:$0xff]
        %v1137 = vld [vmem:[%s118 + $0x1f28] sm:$0xff]
        %v1138 = vld [vmem:[%s118 + $0x1f30] sm:$0xff]
        %v1139 = vld [vmem:[%s118 + $0x1f38] sm:$0xff]
        %v1140 = vld [vmem:[%s118 + $0x1f40] sm:$0xff]
        %v1141 = vld [vmem:[%s118 + $0x1f48] sm:$0xff]
        %v1142 = vld [vmem:[%s118 + $0x1f50] sm:$0xff]
        %v1143 = vld [vmem:[%s118 + $0x1f58] sm:$0xff]
        %v1144 = vld [vmem:[%s118 + $0x1f60] sm:$0xff]
        %v1145 = vld [vmem:[%s118 + $0x1f68] sm:$0xff]
        %v1146 = vld [vmem:[%s118 + $0x1f70] sm:$0xff]
        %v1147 = vld [vmem:[%s118 + $0x1f78] sm:$0xff]
        %v1148 = vld [vmem:[%s118 + $0x1f80] sm:$0xff]
        %v1149 = vld [vmem:[%s118 + $0x1f88] sm:$0xff]
        %v1150 = vld [vmem:[%s118 + $0x1f90] sm:$0xff]
        %v1151 = vld [vmem:[%s118 + $0x1f98] sm:$0xff]
        %v1152 = vld [vmem:[%s118 + $0x1fa0] sm:$0xff]
        %v1153 = vld [vmem:[%s118 + $0x1fa8] sm:$0xff]
        %v1154 = vld [vmem:[%s118 + $0x1fb0] sm:$0xff]
        %v1155 = vld [vmem:[%s118 + $0x1fb8] sm:$0xff]
        %v1156 = vld [vmem:[%s118 + $0x1fc0] sm:$0xff]
        %v1157 = vld [vmem:[%s118 + $0x1fc8] sm:$0xff]
        %v1158 = vld [vmem:[%s118 + $0x1fd0] sm:$0xff]
        %v1159 = vld [vmem:[%s118 + $0x1fd8] sm:$0xff]
        %v1160 = vld [vmem:[%s118 + $0x1fe0] sm:$0xff]
        %v1161 = vld [vmem:[%s118 + $0x1fe8] sm:$0xff]
        %v1162 = vld [vmem:[%s118 + $0x1ff0] sm:$0xff]
        %v1163 = vld [vmem:[%s118 + $0x1ff8] sm:$0xff]
        %v1164 = vand.u32 2147483647, %v140
        %v1165 = vand.u32 2147483647, %v141
        %v1166 = vand.u32 2147483647, %v142
        %v1167 = vand.u32 2147483647, %v143
        %v1168 = vand.u32 2147483647, %v144
        %v1169 = vand.u32 2147483647, %v145
        %v1170 = vand.u32 2147483647, %v146
        %v1171 = vand.u32 2147483647, %v147
        %v1172 = vand.u32 2147483647, %v148
        %v1173 = vand.u32 2147483647, %v149
        %v1174 = vand.u32 2147483647, %v150
        %v1175 = vand.u32 2147483647, %v151
        %v1176 = vand.u32 2147483647, %v152
        %v1177 = vand.u32 2147483647, %v153
        %v1178 = vand.u32 2147483647, %v154
        %v1179 = vand.u32 2147483647, %v155
        %v1180 = vand.u32 2147483647, %v156
        %v1181 = vand.u32 2147483647, %v157
        %v1182 = vand.u32 2147483647, %v158
        %v1183 = vand.u32 2147483647, %v159
        %v1184 = vand.u32 2147483647, %v160
        %v1185 = vand.u32 2147483647, %v161
        %v1186 = vand.u32 2147483647, %v162
        %v1187 = vand.u32 2147483647, %v163
        %v1188 = vand.u32 2147483647, %v164
        %v1189 = vand.u32 2147483647, %v165
        %v1190 = vand.u32 2147483647, %v166
        %v1191 = vand.u32 2147483647, %v167
        %v1192 = vand.u32 2147483647, %v168
        %v1193 = vand.u32 2147483647, %v169
        %v1194 = vand.u32 2147483647, %v170
        %v1195 = vand.u32 2147483647, %v171
        %v1196 = vand.u32 2147483647, %v172
        %v1197 = vand.u32 2147483647, %v173
        %v1198 = vand.u32 2147483647, %v174
        %v1199 = vand.u32 2147483647, %v175
        %v1200 = vand.u32 2147483647, %v176
        %v1201 = vand.u32 2147483647, %v177
        %v1202 = vand.u32 2147483647, %v178
        %v1203 = vand.u32 2147483647, %v179
        %v1204 = vand.u32 2147483647, %v180
        %v1205 = vand.u32 2147483647, %v181
        %v1206 = vand.u32 2147483647, %v182
        %v1207 = vand.u32 2147483647, %v183
        %v1208 = vand.u32 2147483647, %v184
        %v1209 = vand.u32 2147483647, %v185
        %v1210 = vand.u32 2147483647, %v186
        %v1211 = vand.u32 2147483647, %v187
        %v1212 = vand.u32 2147483647, %v188
        %v1213 = vand.u32 2147483647, %v189
        %v1214 = vand.u32 2147483647, %v190
        %v1215 = vand.u32 2147483647, %v191
        %v1216 = vand.u32 2147483647, %v192
        %v1217 = vand.u32 2147483647, %v193
        %v1218 = vand.u32 2147483647, %v194
        %v1219 = vand.u32 2147483647, %v195
        %v1220 = vand.u32 2147483647, %v196
        %v1221 = vand.u32 2147483647, %v197
        %v1222 = vand.u32 2147483647, %v198
        %v1223 = vand.u32 2147483647, %v199
        %v1224 = vand.u32 2147483647, %v200
        %v1225 = vand.u32 2147483647, %v201
        %v1226 = vand.u32 2147483647, %v202
        %v1227 = vand.u32 2147483647, %v203
        %v1228 = vand.u32 2147483647, %v204
        %v1229 = vand.u32 2147483647, %v205
        %v1230 = vand.u32 2147483647, %v206
        %v1231 = vand.u32 2147483647, %v207
        %v1232 = vand.u32 2147483647, %v208
        %v1233 = vand.u32 2147483647, %v209
        %v1234 = vand.u32 2147483647, %v210
        %v1235 = vand.u32 2147483647, %v211
        %v1236 = vand.u32 2147483647, %v212
        %v1237 = vand.u32 2147483647, %v213
        %v1238 = vand.u32 2147483647, %v214
        %v1239 = vand.u32 2147483647, %v215
        %v1240 = vand.u32 2147483647, %v216
        %v1241 = vand.u32 2147483647, %v217
        %v1242 = vand.u32 2147483647, %v218
        %v1243 = vand.u32 2147483647, %v219
        %v1244 = vand.u32 2147483647, %v220
        %v1245 = vand.u32 2147483647, %v221
        %v1246 = vand.u32 2147483647, %v222
        %v1247 = vand.u32 2147483647, %v223
        %v1248 = vand.u32 2147483647, %v224
        %v1249 = vand.u32 2147483647, %v225
        %v1250 = vand.u32 2147483647, %v226
        %v1251 = vand.u32 2147483647, %v227
        %v1252 = vand.u32 2147483647, %v228
        %v1253 = vand.u32 2147483647, %v229
        %v1254 = vand.u32 2147483647, %v230
        %v1255 = vand.u32 2147483647, %v231
        %v1256 = vand.u32 2147483647, %v232
        %v1257 = vand.u32 2147483647, %v233
        %v1258 = vand.u32 2147483647, %v234
        %v1259 = vand.u32 2147483647, %v235
        %v1260 = vand.u32 2147483647, %v236
        %v1261 = vand.u32 2147483647, %v237
        %v1262 = vand.u32 2147483647, %v238
        %v1263 = vand.u32 2147483647, %v239
        %v1264 = vand.u32 2147483647, %v240
        %v1265 = vand.u32 2147483647, %v241
        %v1266 = vand.u32 2147483647, %v242
        %v1267 = vand.u32 2147483647, %v243
        %v1268 = vand.u32 2147483647, %v244
        %v1269 = vand.u32 2147483647, %v245
        %v1270 = vand.u32 2147483647, %v246
        %v1271 = vand.u32 2147483647, %v247
        %v1272 = vand.u32 2147483647, %v248
        %v1273 = vand.u32 2147483647, %v249
        %v1274 = vand.u32 2147483647, %v250
        %v1275 = vand.u32 2147483647, %v251
        %v1276 = vand.u32 2147483647, %v252
        %v1277 = vand.u32 2147483647, %v253
        %v1278 = vand.u32 2147483647, %v254
        %v1279 = vand.u32 2147483647, %v255
        %v1280 = vand.u32 2147483647, %v256
        %v1281 = vand.u32 2147483647, %v257
        %v1282 = vand.u32 2147483647, %v258
        %v1283 = vand.u32 2147483647, %v259
        %v1284 = vand.u32 2147483647, %v260
        %v1285 = vand.u32 2147483647, %v261
        %v1286 = vand.u32 2147483647, %v262
        %v1287 = vand.u32 2147483647, %v263
        %v1288 = vand.u32 2147483647, %v264
        %v1289 = vand.u32 2147483647, %v265
        %v1290 = vand.u32 2147483647, %v266
        %v1291 = vand.u32 2147483647, %v267
        %v1292 = vand.u32 2147483647, %v268
        %v1293 = vand.u32 2147483647, %v269
        %v1294 = vand.u32 2147483647, %v270
        %v1295 = vand.u32 2147483647, %v271
        %v1296 = vand.u32 2147483647, %v272
        %v1297 = vand.u32 2147483647, %v273
        %v1298 = vand.u32 2147483647, %v274
        %v1299 = vand.u32 2147483647, %v275
        %v1300 = vand.u32 2147483647, %v276
        %v1301 = vand.u32 2147483647, %v277
        %v1302 = vand.u32 2147483647, %v278
        %v1303 = vand.u32 2147483647, %v279
        %v1304 = vand.u32 2147483647, %v280
        %v1305 = vand.u32 2147483647, %v281
        %v1306 = vand.u32 2147483647, %v282
        %v1307 = vand.u32 2147483647, %v283
        %v1308 = vand.u32 2147483647, %v284
        %v1309 = vand.u32 2147483647, %v285
        %v1310 = vand.u32 2147483647, %v286
        %v1311 = vand.u32 2147483647, %v287
        %v1312 = vand.u32 2147483647, %v288
        %v1313 = vand.u32 2147483647, %v289
        %v1314 = vand.u32 2147483647, %v290
        %v1315 = vand.u32 2147483647, %v291
        %v1316 = vand.u32 2147483647, %v292
        %v1317 = vand.u32 2147483647, %v293
        %v1318 = vand.u32 2147483647, %v294
        %v1319 = vand.u32 2147483647, %v295
        %v1320 = vand.u32 2147483647, %v296
        %v1321 = vand.u32 2147483647, %v297
        %v1322 = vand.u32 2147483647, %v298
        %v1323 = vand.u32 2147483647, %v299
        %v1324 = vand.u32 2147483647, %v300
        %v1325 = vand.u32 2147483647, %v301
        %v1326 = vand.u32 2147483647, %v302
        %v1327 = vand.u32 2147483647, %v303
        %v1328 = vand.u32 2147483647, %v304
        %v1329 = vand.u32 2147483647, %v305
        %v1330 = vand.u32 2147483647, %v306
        %v1331 = vand.u32 2147483647, %v307
        %v1332 = vand.u32 2147483647, %v308
        %v1333 = vand.u32 2147483647, %v309
        %v1334 = vand.u32 2147483647, %v310
        %v1335 = vand.u32 2147483647, %v311
        %v1336 = vand.u32 2147483647, %v312
        %v1337 = vand.u32 2147483647, %v313
        %v1338 = vand.u32 2147483647, %v314
        %v1339 = vand.u32 2147483647, %v315
        %v1340 = vand.u32 2147483647, %v316
        %v1341 = vand.u32 2147483647, %v317
        %v1342 = vand.u32 2147483647, %v318
        %v1343 = vand.u32 2147483647, %v319
        %v1344 = vand.u32 2147483647, %v320
        %v1345 = vand.u32 2147483647, %v321
        %v1346 = vand.u32 2147483647, %v322
        %v1347 = vand.u32 2147483647, %v323
        %v1348 = vand.u32 2147483647, %v324
        %v1349 = vand.u32 2147483647, %v325
        %v1350 = vand.u32 2147483647, %v326
        %v1351 = vand.u32 2147483647, %v327
        %v1352 = vand.u32 2147483647, %v328
        %v1353 = vand.u32 2147483647, %v329
        %v1354 = vand.u32 2147483647, %v330
        %v1355 = vand.u32 2147483647, %v331
        %v1356 = vand.u32 2147483647, %v332
        %v1357 = vand.u32 2147483647, %v333
        %v1358 = vand.u32 2147483647, %v334
        %v1359 = vand.u32 2147483647, %v335
        %v1360 = vand.u32 2147483647, %v336
        %v1361 = vand.u32 2147483647, %v337
        %v1362 = vand.u32 2147483647, %v338
        %v1363 = vand.u32 2147483647, %v339
        %v1364 = vand.u32 2147483647, %v340
        %v1365 = vand.u32 2147483647, %v341
        %v1366 = vand.u32 2147483647, %v342
        %v1367 = vand.u32 2147483647, %v343
        %v1368 = vand.u32 2147483647, %v344
        %v1369 = vand.u32 2147483647, %v345
        %v1370 = vand.u32 2147483647, %v346
        %v1371 = vand.u32 2147483647, %v347
        %v1372 = vand.u32 2147483647, %v348
        %v1373 = vand.u32 2147483647, %v349
        %v1374 = vand.u32 2147483647, %v350
        %v1375 = vand.u32 2147483647, %v351
        %v1376 = vand.u32 2147483647, %v352
        %v1377 = vand.u32 2147483647, %v353
        %v1378 = vand.u32 2147483647, %v354
        %v1379 = vand.u32 2147483647, %v355
        %v1380 = vand.u32 2147483647, %v356
        %v1381 = vand.u32 2147483647, %v357
        %v1382 = vand.u32 2147483647, %v358
        %v1383 = vand.u32 2147483647, %v359
        %v1384 = vand.u32 2147483647, %v360
        %v1385 = vand.u32 2147483647, %v361
        %v1386 = vand.u32 2147483647, %v362
        %v1387 = vand.u32 2147483647, %v363
        %v1388 = vand.u32 2147483647, %v364
        %v1389 = vand.u32 2147483647, %v365
        %v1390 = vand.u32 2147483647, %v366
        %v1391 = vand.u32 2147483647, %v367
        %v1392 = vand.u32 2147483647, %v368
        %v1393 = vand.u32 2147483647, %v369
        %v1394 = vand.u32 2147483647, %v370
        %v1395 = vand.u32 2147483647, %v371
        %v1396 = vand.u32 2147483647, %v372
        %v1397 = vand.u32 2147483647, %v373
        %v1398 = vand.u32 2147483647, %v374
        %v1399 = vand.u32 2147483647, %v375
        %v1400 = vand.u32 2147483647, %v376
        %v1401 = vand.u32 2147483647, %v377
        %v1402 = vand.u32 2147483647, %v378
        %v1403 = vand.u32 2147483647, %v379
        %v1404 = vand.u32 2147483647, %v380
        %v1405 = vand.u32 2147483647, %v381
        %v1406 = vand.u32 2147483647, %v382
        %v1407 = vand.u32 2147483647, %v383
        %v1408 = vand.u32 2147483647, %v384
        %v1409 = vand.u32 2147483647, %v385
        %v1410 = vand.u32 2147483647, %v386
        %v1411 = vand.u32 2147483647, %v387
        %v1412 = vand.u32 2147483647, %v388
        %v1413 = vand.u32 2147483647, %v389
        %v1414 = vand.u32 2147483647, %v390
        %v1415 = vand.u32 2147483647, %v391
        %v1416 = vand.u32 2147483647, %v392
        %v1417 = vand.u32 2147483647, %v393
        %v1418 = vand.u32 2147483647, %v394
        %v1419 = vand.u32 2147483647, %v395
        %v1420 = vand.u32 2147483647, %v396
        %v1421 = vand.u32 2147483647, %v397
        %v1422 = vand.u32 2147483647, %v398
        %v1423 = vand.u32 2147483647, %v399
        %v1424 = vand.u32 2147483647, %v400
        %v1425 = vand.u32 2147483647, %v401
        %v1426 = vand.u32 2147483647, %v402
        %v1427 = vand.u32 2147483647, %v403
        %v1428 = vand.u32 2147483647, %v404
        %v1429 = vand.u32 2147483647, %v405
        %v1430 = vand.u32 2147483647, %v406
        %v1431 = vand.u32 2147483647, %v407
        %v1432 = vand.u32 2147483647, %v408
        %v1433 = vand.u32 2147483647, %v409
        %v1434 = vand.u32 2147483647, %v410
        %v1435 = vand.u32 2147483647, %v411
        %v1436 = vand.u32 2147483647, %v412
        %v1437 = vand.u32 2147483647, %v413
        %v1438 = vand.u32 2147483647, %v414
        %v1439 = vand.u32 2147483647, %v415
        %v1440 = vand.u32 2147483647, %v416
        %v1441 = vand.u32 2147483647, %v417
        %v1442 = vand.u32 2147483647, %v418
        %v1443 = vand.u32 2147483647, %v419
        %v1444 = vand.u32 2147483647, %v420
        %v1445 = vand.u32 2147483647, %v421
        %v1446 = vand.u32 2147483647, %v422
        %v1447 = vand.u32 2147483647, %v423
        %v1448 = vand.u32 2147483647, %v424
        %v1449 = vand.u32 2147483647, %v425
        %v1450 = vand.u32 2147483647, %v426
        %v1451 = vand.u32 2147483647, %v427
        %v1452 = vand.u32 2147483647, %v428
        %v1453 = vand.u32 2147483647, %v429
        %v1454 = vand.u32 2147483647, %v430
        %v1455 = vand.u32 2147483647, %v431
        %v1456 = vand.u32 2147483647, %v432
        %v1457 = vand.u32 2147483647, %v433
        %v1458 = vand.u32 2147483647, %v434
        %v1459 = vand.u32 2147483647, %v435
        %v1460 = vand.u32 2147483647, %v436
        %v1461 = vand.u32 2147483647, %v437
        %v1462 = vand.u32 2147483647, %v438
        %v1463 = vand.u32 2147483647, %v439
        %v1464 = vand.u32 2147483647, %v440
        %v1465 = vand.u32 2147483647, %v441
        %v1466 = vand.u32 2147483647, %v442
        %v1467 = vand.u32 2147483647, %v443
        %v1468 = vand.u32 2147483647, %v444
        %v1469 = vand.u32 2147483647, %v445
        %v1470 = vand.u32 2147483647, %v446
        %v1471 = vand.u32 2147483647, %v447
        %v1472 = vand.u32 2147483647, %v448
        %v1473 = vand.u32 2147483647, %v449
        %v1474 = vand.u32 2147483647, %v450
        %v1475 = vand.u32 2147483647, %v451
        %v1476 = vand.u32 2147483647, %v452
        %v1477 = vand.u32 2147483647, %v453
        %v1478 = vand.u32 2147483647, %v454
        %v1479 = vand.u32 2147483647, %v455
        %v1480 = vand.u32 2147483647, %v456
        %v1481 = vand.u32 2147483647, %v457
        %v1482 = vand.u32 2147483647, %v458
        %v1483 = vand.u32 2147483647, %v459
        %v1484 = vand.u32 2147483647, %v460
        %v1485 = vand.u32 2147483647, %v461
        %v1486 = vand.u32 2147483647, %v462
        %v1487 = vand.u32 2147483647, %v463
        %v1488 = vand.u32 2147483647, %v464
        %v1489 = vand.u32 2147483647, %v465
        %v1490 = vand.u32 2147483647, %v466
        %v1491 = vand.u32 2147483647, %v467
        %v1492 = vand.u32 2147483647, %v468
        %v1493 = vand.u32 2147483647, %v469
        %v1494 = vand.u32 2147483647, %v470
        %v1495 = vand.u32 2147483647, %v471
        %v1496 = vand.u32 2147483647, %v472
        %v1497 = vand.u32 2147483647, %v473
        %v1498 = vand.u32 2147483647, %v474
        %v1499 = vand.u32 2147483647, %v475
        %v1500 = vand.u32 2147483647, %v476
        %v1501 = vand.u32 2147483647, %v477
        %v1502 = vand.u32 2147483647, %v478
        %v1503 = vand.u32 2147483647, %v479
        %v1504 = vand.u32 2147483647, %v480
        %v1505 = vand.u32 2147483647, %v481
        %v1506 = vand.u32 2147483647, %v482
        %v1507 = vand.u32 2147483647, %v483
        %v1508 = vand.u32 2147483647, %v484
        %v1509 = vand.u32 2147483647, %v485
        %v1510 = vand.u32 2147483647, %v486
        %v1511 = vand.u32 2147483647, %v487
        %v1512 = vand.u32 2147483647, %v488
        %v1513 = vand.u32 2147483647, %v489
        %v1514 = vand.u32 2147483647, %v490
        %v1515 = vand.u32 2147483647, %v491
        %v1516 = vand.u32 2147483647, %v492
        %v1517 = vand.u32 2147483647, %v493
        %v1518 = vand.u32 2147483647, %v494
        %v1519 = vand.u32 2147483647, %v495
        %v1520 = vand.u32 2147483647, %v496
        %v1521 = vand.u32 2147483647, %v497
        %v1522 = vand.u32 2147483647, %v498
        %v1523 = vand.u32 2147483647, %v499
        %v1524 = vand.u32 2147483647, %v500
        %v1525 = vand.u32 2147483647, %v501
        %v1526 = vand.u32 2147483647, %v502
        %v1527 = vand.u32 2147483647, %v503
        %v1528 = vand.u32 2147483647, %v504
        %v1529 = vand.u32 2147483647, %v505
        %v1530 = vand.u32 2147483647, %v506
        %v1531 = vand.u32 2147483647, %v507
        %v1532 = vand.u32 2147483647, %v508
        %v1533 = vand.u32 2147483647, %v509
        %v1534 = vand.u32 2147483647, %v510
        %v1535 = vand.u32 2147483647, %v511
        %v1536 = vand.u32 2147483647, %v512
        %v1537 = vand.u32 2147483647, %v513
        %v1538 = vand.u32 2147483647, %v514
        %v1539 = vand.u32 2147483647, %v515
        %v1540 = vand.u32 2147483647, %v516
        %v1541 = vand.u32 2147483647, %v517
        %v1542 = vand.u32 2147483647, %v518
        %v1543 = vand.u32 2147483647, %v519
        %v1544 = vand.u32 2147483647, %v520
        %v1545 = vand.u32 2147483647, %v521
        %v1546 = vand.u32 2147483647, %v522
        %v1547 = vand.u32 2147483647, %v523
        %v1548 = vand.u32 2147483647, %v524
        %v1549 = vand.u32 2147483647, %v525
        %v1550 = vand.u32 2147483647, %v526
        %v1551 = vand.u32 2147483647, %v527
        %v1552 = vand.u32 2147483647, %v528
        %v1553 = vand.u32 2147483647, %v529
        %v1554 = vand.u32 2147483647, %v530
        %v1555 = vand.u32 2147483647, %v531
        %v1556 = vand.u32 2147483647, %v532
        %v1557 = vand.u32 2147483647, %v533
        %v1558 = vand.u32 2147483647, %v534
        %v1559 = vand.u32 2147483647, %v535
        %v1560 = vand.u32 2147483647, %v536
        %v1561 = vand.u32 2147483647, %v537
        %v1562 = vand.u32 2147483647, %v538
        %v1563 = vand.u32 2147483647, %v539
        %v1564 = vand.u32 2147483647, %v540
        %v1565 = vand.u32 2147483647, %v541
        %v1566 = vand.u32 2147483647, %v542
        %v1567 = vand.u32 2147483647, %v543
        %v1568 = vand.u32 2147483647, %v544
        %v1569 = vand.u32 2147483647, %v545
        %v1570 = vand.u32 2147483647, %v546
        %v1571 = vand.u32 2147483647, %v547
        %v1572 = vand.u32 2147483647, %v548
        %v1573 = vand.u32 2147483647, %v549
        %v1574 = vand.u32 2147483647, %v550
        %v1575 = vand.u32 2147483647, %v551
        %v1576 = vand.u32 2147483647, %v552
        %v1577 = vand.u32 2147483647, %v553
        %v1578 = vand.u32 2147483647, %v554
        %v1579 = vand.u32 2147483647, %v555
        %v1580 = vand.u32 2147483647, %v556
        %v1581 = vand.u32 2147483647, %v557
        %v1582 = vand.u32 2147483647, %v558
        %v1583 = vand.u32 2147483647, %v559
        %v1584 = vand.u32 2147483647, %v560
        %v1585 = vand.u32 2147483647, %v561
        %v1586 = vand.u32 2147483647, %v562
        %v1587 = vand.u32 2147483647, %v563
        %v1588 = vand.u32 2147483647, %v564
        %v1589 = vand.u32 2147483647, %v565
        %v1590 = vand.u32 2147483647, %v566
        %v1591 = vand.u32 2147483647, %v567
        %v1592 = vand.u32 2147483647, %v568
        %v1593 = vand.u32 2147483647, %v569
        %v1594 = vand.u32 2147483647, %v570
        %v1595 = vand.u32 2147483647, %v571
        %v1596 = vand.u32 2147483647, %v572
        %v1597 = vand.u32 2147483647, %v573
        %v1598 = vand.u32 2147483647, %v574
        %v1599 = vand.u32 2147483647, %v575
        %v1600 = vand.u32 2147483647, %v576
        %v1601 = vand.u32 2147483647, %v577
        %v1602 = vand.u32 2147483647, %v578
        %v1603 = vand.u32 2147483647, %v579
        %v1604 = vand.u32 2147483647, %v580
        %v1605 = vand.u32 2147483647, %v581
        %v1606 = vand.u32 2147483647, %v582
        %v1607 = vand.u32 2147483647, %v583
        %v1608 = vand.u32 2147483647, %v584
        %v1609 = vand.u32 2147483647, %v585
        %v1610 = vand.u32 2147483647, %v586
        %v1611 = vand.u32 2147483647, %v587
        %v1612 = vand.u32 2147483647, %v588
        %v1613 = vand.u32 2147483647, %v589
        %v1614 = vand.u32 2147483647, %v590
        %v1615 = vand.u32 2147483647, %v591
        %v1616 = vand.u32 2147483647, %v592
        %v1617 = vand.u32 2147483647, %v593
        %v1618 = vand.u32 2147483647, %v594
        %v1619 = vand.u32 2147483647, %v595
        %v1620 = vand.u32 2147483647, %v596
        %v1621 = vand.u32 2147483647, %v597
        %v1622 = vand.u32 2147483647, %v598
        %v1623 = vand.u32 2147483647, %v599
        %v1624 = vand.u32 2147483647, %v600
        %v1625 = vand.u32 2147483647, %v601
        %v1626 = vand.u32 2147483647, %v602
        %v1627 = vand.u32 2147483647, %v603
        %v1628 = vand.u32 2147483647, %v604
        %v1629 = vand.u32 2147483647, %v605
        %v1630 = vand.u32 2147483647, %v606
        %v1631 = vand.u32 2147483647, %v607
        %v1632 = vand.u32 2147483647, %v608
        %v1633 = vand.u32 2147483647, %v609
        %v1634 = vand.u32 2147483647, %v610
        %v1635 = vand.u32 2147483647, %v611
        %v1636 = vand.u32 2147483647, %v612
        %v1637 = vand.u32 2147483647, %v613
        %v1638 = vand.u32 2147483647, %v614
        %v1639 = vand.u32 2147483647, %v615
        %v1640 = vand.u32 2147483647, %v616
        %v1641 = vand.u32 2147483647, %v617
        %v1642 = vand.u32 2147483647, %v618
        %v1643 = vand.u32 2147483647, %v619
        %v1644 = vand.u32 2147483647, %v620
        %v1645 = vand.u32 2147483647, %v621
        %v1646 = vand.u32 2147483647, %v622
        %v1647 = vand.u32 2147483647, %v623
        %v1648 = vand.u32 2147483647, %v624
        %v1649 = vand.u32 2147483647, %v625
        %v1650 = vand.u32 2147483647, %v626
        %v1651 = vand.u32 2147483647, %v627
        %v1652 = vand.u32 2147483647, %v628
        %v1653 = vand.u32 2147483647, %v629
        %v1654 = vand.u32 2147483647, %v630
        %v1655 = vand.u32 2147483647, %v631
        %v1656 = vand.u32 2147483647, %v632
        %v1657 = vand.u32 2147483647, %v633
        %v1658 = vand.u32 2147483647, %v634
        %v1659 = vand.u32 2147483647, %v635
        %v1660 = vand.u32 2147483647, %v636
        %v1661 = vand.u32 2147483647, %v637
        %v1662 = vand.u32 2147483647, %v638
        %v1663 = vand.u32 2147483647, %v639
        %v1664 = vand.u32 2147483647, %v640
        %v1665 = vand.u32 2147483647, %v641
        %v1666 = vand.u32 2147483647, %v642
        %v1667 = vand.u32 2147483647, %v643
        %v1668 = vand.u32 2147483647, %v644
        %v1669 = vand.u32 2147483647, %v645
        %v1670 = vand.u32 2147483647, %v646
        %v1671 = vand.u32 2147483647, %v647
        %v1672 = vand.u32 2147483647, %v648
        %v1673 = vand.u32 2147483647, %v649
        %v1674 = vand.u32 2147483647, %v650
        %v1675 = vand.u32 2147483647, %v651
        %v1676 = vand.u32 2147483647, %v652
        %v1677 = vand.u32 2147483647, %v653
        %v1678 = vand.u32 2147483647, %v654
        %v1679 = vand.u32 2147483647, %v655
        %v1680 = vand.u32 2147483647, %v656
        %v1681 = vand.u32 2147483647, %v657
        %v1682 = vand.u32 2147483647, %v658
        %v1683 = vand.u32 2147483647, %v659
        %v1684 = vand.u32 2147483647, %v660
        %v1685 = vand.u32 2147483647, %v661
        %v1686 = vand.u32 2147483647, %v662
        %v1687 = vand.u32 2147483647, %v663
        %v1688 = vand.u32 2147483647, %v664
        %v1689 = vand.u32 2147483647, %v665
        %v1690 = vand.u32 2147483647, %v666
        %v1691 = vand.u32 2147483647, %v667
        %v1692 = vand.u32 2147483647, %v668
        %v1693 = vand.u32 2147483647, %v669
        %v1694 = vand.u32 2147483647, %v670
        %v1695 = vand.u32 2147483647, %v671
        %v1696 = vand.u32 2147483647, %v672
        %v1697 = vand.u32 2147483647, %v673
        %v1698 = vand.u32 2147483647, %v674
        %v1699 = vand.u32 2147483647, %v675
        %v1700 = vand.u32 2147483647, %v676
        %v1701 = vand.u32 2147483647, %v677
        %v1702 = vand.u32 2147483647, %v678
        %v1703 = vand.u32 2147483647, %v679
        %v1704 = vand.u32 2147483647, %v680
        %v1705 = vand.u32 2147483647, %v681
        %v1706 = vand.u32 2147483647, %v682
        %v1707 = vand.u32 2147483647, %v683
        %v1708 = vand.u32 2147483647, %v684
        %v1709 = vand.u32 2147483647, %v685
        %v1710 = vand.u32 2147483647, %v686
        %v1711 = vand.u32 2147483647, %v687
        %v1712 = vand.u32 2147483647, %v688
        %v1713 = vand.u32 2147483647, %v689
        %v1714 = vand.u32 2147483647, %v690
        %v1715 = vand.u32 2147483647, %v691
        %v1716 = vand.u32 2147483647, %v692
        %v1717 = vand.u32 2147483647, %v693
        %v1718 = vand.u32 2147483647, %v694
        %v1719 = vand.u32 2147483647, %v695
        %v1720 = vand.u32 2147483647, %v696
        %v1721 = vand.u32 2147483647, %v697
        %v1722 = vand.u32 2147483647, %v698
        %v1723 = vand.u32 2147483647, %v699
        %v1724 = vand.u32 2147483647, %v700
        %v1725 = vand.u32 2147483647, %v701
        %v1726 = vand.u32 2147483647, %v702
        %v1727 = vand.u32 2147483647, %v703
        %v1728 = vand.u32 2147483647, %v704
        %v1729 = vand.u32 2147483647, %v705
        %v1730 = vand.u32 2147483647, %v706
        %v1731 = vand.u32 2147483647, %v707
        %v1732 = vand.u32 2147483647, %v708
        %v1733 = vand.u32 2147483647, %v709
        %v1734 = vand.u32 2147483647, %v710
        %v1735 = vand.u32 2147483647, %v711
        %v1736 = vand.u32 2147483647, %v712
        %v1737 = vand.u32 2147483647, %v713
        %v1738 = vand.u32 2147483647, %v714
        %v1739 = vand.u32 2147483647, %v715
        %v1740 = vand.u32 2147483647, %v716
        %v1741 = vand.u32 2147483647, %v717
        %v1742 = vand.u32 2147483647, %v718
        %v1743 = vand.u32 2147483647, %v719
        %v1744 = vand.u32 2147483647, %v720
        %v1745 = vand.u32 2147483647, %v721
        %v1746 = vand.u32 2147483647, %v722
        %v1747 = vand.u32 2147483647, %v723
        %v1748 = vand.u32 2147483647, %v724
        %v1749 = vand.u32 2147483647, %v725
        %v1750 = vand.u32 2147483647, %v726
        %v1751 = vand.u32 2147483647, %v727
        %v1752 = vand.u32 2147483647, %v728
        %v1753 = vand.u32 2147483647, %v729
        %v1754 = vand.u32 2147483647, %v730
        %v1755 = vand.u32 2147483647, %v731
        %v1756 = vand.u32 2147483647, %v732
        %v1757 = vand.u32 2147483647, %v733
        %v1758 = vand.u32 2147483647, %v734
        %v1759 = vand.u32 2147483647, %v735
        %v1760 = vand.u32 2147483647, %v736
        %v1761 = vand.u32 2147483647, %v737
        %v1762 = vand.u32 2147483647, %v738
        %v1763 = vand.u32 2147483647, %v739
        %v1764 = vand.u32 2147483647, %v740
        %v1765 = vand.u32 2147483647, %v741
        %v1766 = vand.u32 2147483647, %v742
        %v1767 = vand.u32 2147483647, %v743
        %v1768 = vand.u32 2147483647, %v744
        %v1769 = vand.u32 2147483647, %v745
        %v1770 = vand.u32 2147483647, %v746
        %v1771 = vand.u32 2147483647, %v747
        %v1772 = vand.u32 2147483647, %v748
        %v1773 = vand.u32 2147483647, %v749
        %v1774 = vand.u32 2147483647, %v750
        %v1775 = vand.u32 2147483647, %v751
        %v1776 = vand.u32 2147483647, %v752
        %v1777 = vand.u32 2147483647, %v753
        %v1778 = vand.u32 2147483647, %v754
        %v1779 = vand.u32 2147483647, %v755
        %v1780 = vand.u32 2147483647, %v756
        %v1781 = vand.u32 2147483647, %v757
        %v1782 = vand.u32 2147483647, %v758
        %v1783 = vand.u32 2147483647, %v759
        %v1784 = vand.u32 2147483647, %v760
        %v1785 = vand.u32 2147483647, %v761
        %v1786 = vand.u32 2147483647, %v762
        %v1787 = vand.u32 2147483647, %v763
        %v1788 = vand.u32 2147483647, %v764
        %v1789 = vand.u32 2147483647, %v765
        %v1790 = vand.u32 2147483647, %v766
        %v1791 = vand.u32 2147483647, %v767
        %v1792 = vand.u32 2147483647, %v768
        %v1793 = vand.u32 2147483647, %v769
        %v1794 = vand.u32 2147483647, %v770
        %v1795 = vand.u32 2147483647, %v771
        %v1796 = vand.u32 2147483647, %v772
        %v1797 = vand.u32 2147483647, %v773
        %v1798 = vand.u32 2147483647, %v774
        %v1799 = vand.u32 2147483647, %v775
        %v1800 = vand.u32 2147483647, %v776
        %v1801 = vand.u32 2147483647, %v777
        %v1802 = vand.u32 2147483647, %v778
        %v1803 = vand.u32 2147483647, %v779
        %v1804 = vand.u32 2147483647, %v780
        %v1805 = vand.u32 2147483647, %v781
        %v1806 = vand.u32 2147483647, %v782
        %v1807 = vand.u32 2147483647, %v783
        %v1808 = vand.u32 2147483647, %v784
        %v1809 = vand.u32 2147483647, %v785
        %v1810 = vand.u32 2147483647, %v786
        %v1811 = vand.u32 2147483647, %v787
        %v1812 = vand.u32 2147483647, %v788
        %v1813 = vand.u32 2147483647, %v789
        %v1814 = vand.u32 2147483647, %v790
        %v1815 = vand.u32 2147483647, %v791
        %v1816 = vand.u32 2147483647, %v792
        %v1817 = vand.u32 2147483647, %v793
        %v1818 = vand.u32 2147483647, %v794
        %v1819 = vand.u32 2147483647, %v795
        %v1820 = vand.u32 2147483647, %v796
        %v1821 = vand.u32 2147483647, %v797
        %v1822 = vand.u32 2147483647, %v798
        %v1823 = vand.u32 2147483647, %v799
        %v1824 = vand.u32 2147483647, %v800
        %v1825 = vand.u32 2147483647, %v801
        %v1826 = vand.u32 2147483647, %v802
        %v1827 = vand.u32 2147483647, %v803
        %v1828 = vand.u32 2147483647, %v804
        %v1829 = vand.u32 2147483647, %v805
        %v1830 = vand.u32 2147483647, %v806
        %v1831 = vand.u32 2147483647, %v807
        %v1832 = vand.u32 2147483647, %v808
        %v1833 = vand.u32 2147483647, %v809
        %v1834 = vand.u32 2147483647, %v810
        %v1835 = vand.u32 2147483647, %v811
        %v1836 = vand.u32 2147483647, %v812
        %v1837 = vand.u32 2147483647, %v813
        %v1838 = vand.u32 2147483647, %v814
        %v1839 = vand.u32 2147483647, %v815
        %v1840 = vand.u32 2147483647, %v816
        %v1841 = vand.u32 2147483647, %v817
        %v1842 = vand.u32 2147483647, %v818
        %v1843 = vand.u32 2147483647, %v819
        %v1844 = vand.u32 2147483647, %v820
        %v1845 = vand.u32 2147483647, %v821
        %v1846 = vand.u32 2147483647, %v822
        %v1847 = vand.u32 2147483647, %v823
        %v1848 = vand.u32 2147483647, %v824
        %v1849 = vand.u32 2147483647, %v825
        %v1850 = vand.u32 2147483647, %v826
        %v1851 = vand.u32 2147483647, %v827
        %v1852 = vand.u32 2147483647, %v828
        %v1853 = vand.u32 2147483647, %v829
        %v1854 = vand.u32 2147483647, %v830
        %v1855 = vand.u32 2147483647, %v831
        %v1856 = vand.u32 2147483647, %v832
        %v1857 = vand.u32 2147483647, %v833
        %v1858 = vand.u32 2147483647, %v834
        %v1859 = vand.u32 2147483647, %v835
        %v1860 = vand.u32 2147483647, %v836
        %v1861 = vand.u32 2147483647, %v837
        %v1862 = vand.u32 2147483647, %v838
        %v1863 = vand.u32 2147483647, %v839
        %v1864 = vand.u32 2147483647, %v840
        %v1865 = vand.u32 2147483647, %v841
        %v1866 = vand.u32 2147483647, %v842
        %v1867 = vand.u32 2147483647, %v843
        %v1868 = vand.u32 2147483647, %v844
        %v1869 = vand.u32 2147483647, %v845
        %v1870 = vand.u32 2147483647, %v846
        %v1871 = vand.u32 2147483647, %v847
        %v1872 = vand.u32 2147483647, %v848
        %v1873 = vand.u32 2147483647, %v849
        %v1874 = vand.u32 2147483647, %v850
        %v1875 = vand.u32 2147483647, %v851
        %v1876 = vand.u32 2147483647, %v852
        %v1877 = vand.u32 2147483647, %v853
        %v1878 = vand.u32 2147483647, %v854
        %v1879 = vand.u32 2147483647, %v855
        %v1880 = vand.u32 2147483647, %v856
        %v1881 = vand.u32 2147483647, %v857
        %v1882 = vand.u32 2147483647, %v858
        %v1883 = vand.u32 2147483647, %v859
        %v1884 = vand.u32 2147483647, %v860
        %v1885 = vand.u32 2147483647, %v861
        %v1886 = vand.u32 2147483647, %v862
        %v1887 = vand.u32 2147483647, %v863
        %v1888 = vand.u32 2147483647, %v864
        %v1889 = vand.u32 2147483647, %v865
        %v1890 = vand.u32 2147483647, %v866
        %v1891 = vand.u32 2147483647, %v867
        %v1892 = vand.u32 2147483647, %v868
        %v1893 = vand.u32 2147483647, %v869
        %v1894 = vand.u32 2147483647, %v870
        %v1895 = vand.u32 2147483647, %v871
        %v1896 = vand.u32 2147483647, %v872
        %v1897 = vand.u32 2147483647, %v873
        %v1898 = vand.u32 2147483647, %v874
        %v1899 = vand.u32 2147483647, %v875
        %v1900 = vand.u32 2147483647, %v876
        %v1901 = vand.u32 2147483647, %v877
        %v1902 = vand.u32 2147483647, %v878
        %v1903 = vand.u32 2147483647, %v879
        %v1904 = vand.u32 2147483647, %v880
        %v1905 = vand.u32 2147483647, %v881
        %v1906 = vand.u32 2147483647, %v882
        %v1907 = vand.u32 2147483647, %v883
        %v1908 = vand.u32 2147483647, %v884
        %v1909 = vand.u32 2147483647, %v885
        %v1910 = vand.u32 2147483647, %v886
        %v1911 = vand.u32 2147483647, %v887
        %v1912 = vand.u32 2147483647, %v888
        %v1913 = vand.u32 2147483647, %v889
        %v1914 = vand.u32 2147483647, %v890
        %v1915 = vand.u32 2147483647, %v891
        %v1916 = vand.u32 2147483647, %v892
        %v1917 = vand.u32 2147483647, %v893
        %v1918 = vand.u32 2147483647, %v894
        %v1919 = vand.u32 2147483647, %v895
        %v1920 = vand.u32 2147483647, %v896
        %v1921 = vand.u32 2147483647, %v897
        %v1922 = vand.u32 2147483647, %v898
        %v1923 = vand.u32 2147483647, %v899
        %v1924 = vand.u32 2147483647, %v900
        %v1925 = vand.u32 2147483647, %v901
        %v1926 = vand.u32 2147483647, %v902
        %v1927 = vand.u32 2147483647, %v903
        %v1928 = vand.u32 2147483647, %v904
        %v1929 = vand.u32 2147483647, %v905
        %v1930 = vand.u32 2147483647, %v906
        %v1931 = vand.u32 2147483647, %v907
        %v1932 = vand.u32 2147483647, %v908
        %v1933 = vand.u32 2147483647, %v909
        %v1934 = vand.u32 2147483647, %v910
        %v1935 = vand.u32 2147483647, %v911
        %v1936 = vand.u32 2147483647, %v912
        %v1937 = vand.u32 2147483647, %v913
        %v1938 = vand.u32 2147483647, %v914
        %v1939 = vand.u32 2147483647, %v915
        %v1940 = vand.u32 2147483647, %v916
        %v1941 = vand.u32 2147483647, %v917
        %v1942 = vand.u32 2147483647, %v918
        %v1943 = vand.u32 2147483647, %v919
        %v1944 = vand.u32 2147483647, %v920
        %v1945 = vand.u32 2147483647, %v921
        %v1946 = vand.u32 2147483647, %v922
        %v1947 = vand.u32 2147483647, %v923
        %v1948 = vand.u32 2147483647, %v924
        %v1949 = vand.u32 2147483647, %v925
        %v1950 = vand.u32 2147483647, %v926
        %v1951 = vand.u32 2147483647, %v927
        %v1952 = vand.u32 2147483647, %v928
        %v1953 = vand.u32 2147483647, %v929
        %v1954 = vand.u32 2147483647, %v930
        %v1955 = vand.u32 2147483647, %v931
        %v1956 = vand.u32 2147483647, %v932
        %v1957 = vand.u32 2147483647, %v933
        %v1958 = vand.u32 2147483647, %v934
        %v1959 = vand.u32 2147483647, %v935
        %v1960 = vand.u32 2147483647, %v936
        %v1961 = vand.u32 2147483647, %v937
        %v1962 = vand.u32 2147483647, %v938
        %v1963 = vand.u32 2147483647, %v939
        %v1964 = vand.u32 2147483647, %v940
        %v1965 = vand.u32 2147483647, %v941
        %v1966 = vand.u32 2147483647, %v942
        %v1967 = vand.u32 2147483647, %v943
        %v1968 = vand.u32 2147483647, %v944
        %v1969 = vand.u32 2147483647, %v945
        %v1970 = vand.u32 2147483647, %v946
        %v1971 = vand.u32 2147483647, %v947
        %v1972 = vand.u32 2147483647, %v948
        %v1973 = vand.u32 2147483647, %v949
        %v1974 = vand.u32 2147483647, %v950
        %v1975 = vand.u32 2147483647, %v951
        %v1976 = vand.u32 2147483647, %v952
        %v1977 = vand.u32 2147483647, %v953
        %v1978 = vand.u32 2147483647, %v954
        %v1979 = vand.u32 2147483647, %v955
        %v1980 = vand.u32 2147483647, %v956
        %v1981 = vand.u32 2147483647, %v957
        %v1982 = vand.u32 2147483647, %v958
        %v1983 = vand.u32 2147483647, %v959
        %v1984 = vand.u32 2147483647, %v960
        %v1985 = vand.u32 2147483647, %v961
        %v1986 = vand.u32 2147483647, %v962
        %v1987 = vand.u32 2147483647, %v963
        %v1988 = vand.u32 2147483647, %v964
        %v1989 = vand.u32 2147483647, %v965
        %v1990 = vand.u32 2147483647, %v966
        %v1991 = vand.u32 2147483647, %v967
        %v1992 = vand.u32 2147483647, %v968
        %v1993 = vand.u32 2147483647, %v969
        %v1994 = vand.u32 2147483647, %v970
        %v1995 = vand.u32 2147483647, %v971
        %v1996 = vand.u32 2147483647, %v972
        %v1997 = vand.u32 2147483647, %v973
        %v1998 = vand.u32 2147483647, %v974
        %v1999 = vand.u32 2147483647, %v975
        %v2000 = vand.u32 2147483647, %v976
        %v2001 = vand.u32 2147483647, %v977
        %v2002 = vand.u32 2147483647, %v978
        %v2003 = vand.u32 2147483647, %v979
        %v2004 = vand.u32 2147483647, %v980
        %v2005 = vand.u32 2147483647, %v981
        %v2006 = vand.u32 2147483647, %v982
        %v2007 = vand.u32 2147483647, %v983
        %v2008 = vand.u32 2147483647, %v984
        %v2009 = vand.u32 2147483647, %v985
        %v2010 = vand.u32 2147483647, %v986
        %v2011 = vand.u32 2147483647, %v987
        %v2012 = vand.u32 2147483647, %v988
        %v2013 = vand.u32 2147483647, %v989
        %v2014 = vand.u32 2147483647, %v990
        %v2015 = vand.u32 2147483647, %v991
        %v2016 = vand.u32 2147483647, %v992
        %v2017 = vand.u32 2147483647, %v993
        %v2018 = vand.u32 2147483647, %v994
        %v2019 = vand.u32 2147483647, %v995
        %v2020 = vand.u32 2147483647, %v996
        %v2021 = vand.u32 2147483647, %v997
        %v2022 = vand.u32 2147483647, %v998
        %v2023 = vand.u32 2147483647, %v999
        %v2024 = vand.u32 2147483647, %v1000
        %v2025 = vand.u32 2147483647, %v1001
        %v2026 = vand.u32 2147483647, %v1002
        %v2027 = vand.u32 2147483647, %v1003
        %v2028 = vand.u32 2147483647, %v1004
        %v2029 = vand.u32 2147483647, %v1005
        %v2030 = vand.u32 2147483647, %v1006
        %v2031 = vand.u32 2147483647, %v1007
        %v2032 = vand.u32 2147483647, %v1008
        %v2033 = vand.u32 2147483647, %v1009
        %v2034 = vand.u32 2147483647, %v1010
        %v2035 = vand.u32 2147483647, %v1011
        %v2036 = vand.u32 2147483647, %v1012
        %v2037 = vand.u32 2147483647, %v1013
        %v2038 = vand.u32 2147483647, %v1014
        %v2039 = vand.u32 2147483647, %v1015
        %v2040 = vand.u32 2147483647, %v1016
        %v2041 = vand.u32 2147483647, %v1017
        %v2042 = vand.u32 2147483647, %v1018
        %v2043 = vand.u32 2147483647, %v1019
        %v2044 = vand.u32 2147483647, %v1020
        %v2045 = vand.u32 2147483647, %v1021
        %v2046 = vand.u32 2147483647, %v1022
        %v2047 = vand.u32 2147483647, %v1023
        %v2048 = vand.u32 2147483647, %v1024
        %v2049 = vand.u32 2147483647, %v1025
        %v2050 = vand.u32 2147483647, %v1026
        %v2051 = vand.u32 2147483647, %v1027
        %v2052 = vand.u32 2147483647, %v1028
        %v2053 = vand.u32 2147483647, %v1029
        %v2054 = vand.u32 2147483647, %v1030
        %v2055 = vand.u32 2147483647, %v1031
        %v2056 = vand.u32 2147483647, %v1032
        %v2057 = vand.u32 2147483647, %v1033
        %v2058 = vand.u32 2147483647, %v1034
        %v2059 = vand.u32 2147483647, %v1035
        %v2060 = vand.u32 2147483647, %v1036
        %v2061 = vand.u32 2147483647, %v1037
        %v2062 = vand.u32 2147483647, %v1038
        %v2063 = vand.u32 2147483647, %v1039
        %v2064 = vand.u32 2147483647, %v1040
        %v2065 = vand.u32 2147483647, %v1041
        %v2066 = vand.u32 2147483647, %v1042
        %v2067 = vand.u32 2147483647, %v1043
        %v2068 = vand.u32 2147483647, %v1044
        %v2069 = vand.u32 2147483647, %v1045
        %v2070 = vand.u32 2147483647, %v1046
        %v2071 = vand.u32 2147483647, %v1047
        %v2072 = vand.u32 2147483647, %v1048
        %v2073 = vand.u32 2147483647, %v1049
        %v2074 = vand.u32 2147483647, %v1050
        %v2075 = vand.u32 2147483647, %v1051
        %v2076 = vand.u32 2147483647, %v1052
        %v2077 = vand.u32 2147483647, %v1053
        %v2078 = vand.u32 2147483647, %v1054
        %v2079 = vand.u32 2147483647, %v1055
        %v2080 = vand.u32 2147483647, %v1056
        %v2081 = vand.u32 2147483647, %v1057
        %v2082 = vand.u32 2147483647, %v1058
        %v2083 = vand.u32 2147483647, %v1059
        %v2084 = vand.u32 2147483647, %v1060
        %v2085 = vand.u32 2147483647, %v1061
        %v2086 = vand.u32 2147483647, %v1062
        %v2087 = vand.u32 2147483647, %v1063
        %v2088 = vand.u32 2147483647, %v1064
        %v2089 = vand.u32 2147483647, %v1065
        %v2090 = vand.u32 2147483647, %v1066
        %v2091 = vand.u32 2147483647, %v1067
        %v2092 = vand.u32 2147483647, %v1068
        %v2093 = vand.u32 2147483647, %v1069
        %v2094 = vand.u32 2147483647, %v1070
        %v2095 = vand.u32 2147483647, %v1071
        %v2096 = vand.u32 2147483647, %v1072
        %v2097 = vand.u32 2147483647, %v1073
        %v2098 = vand.u32 2147483647, %v1074
        %v2099 = vand.u32 2147483647, %v1075
        %v2100 = vand.u32 2147483647, %v1076
        %v2101 = vand.u32 2147483647, %v1077
        %v2102 = vand.u32 2147483647, %v1078
        %v2103 = vand.u32 2147483647, %v1079
        %v2104 = vand.u32 2147483647, %v1080
        %v2105 = vand.u32 2147483647, %v1081
        %v2106 = vand.u32 2147483647, %v1082
        %v2107 = vand.u32 2147483647, %v1083
        %v2108 = vand.u32 2147483647, %v1084
        %v2109 = vand.u32 2147483647, %v1085
        %v2110 = vand.u32 2147483647, %v1086
        %v2111 = vand.u32 2147483647, %v1087
        %v2112 = vand.u32 2147483647, %v1088
        %v2113 = vand.u32 2147483647, %v1089
        %v2114 = vand.u32 2147483647, %v1090
        %v2115 = vand.u32 2147483647, %v1091
        %v2116 = vand.u32 2147483647, %v1092
        %v2117 = vand.u32 2147483647, %v1093
        %v2118 = vand.u32 2147483647, %v1094
        %v2119 = vand.u32 2147483647, %v1095
        %v2120 = vand.u32 2147483647, %v1096
        %v2121 = vand.u32 2147483647, %v1097
        %v2122 = vand.u32 2147483647, %v1098
        %v2123 = vand.u32 2147483647, %v1099
        %v2124 = vand.u32 2147483647, %v1100
        %v2125 = vand.u32 2147483647, %v1101
        %v2126 = vand.u32 2147483647, %v1102
        %v2127 = vand.u32 2147483647, %v1103
        %v2128 = vand.u32 2147483647, %v1104
        %v2129 = vand.u32 2147483647, %v1105
        %v2130 = vand.u32 2147483647, %v1106
        %v2131 = vand.u32 2147483647, %v1107
        %v2132 = vand.u32 2147483647, %v1108
        %v2133 = vand.u32 2147483647, %v1109
        %v2134 = vand.u32 2147483647, %v1110
        %v2135 = vand.u32 2147483647, %v1111
        %v2136 = vand.u32 2147483647, %v1112
        %v2137 = vand.u32 2147483647, %v1113
        %v2138 = vand.u32 2147483647, %v1114
        %v2139 = vand.u32 2147483647, %v1115
        %v2140 = vand.u32 2147483647, %v1116
        %v2141 = vand.u32 2147483647, %v1117
        %v2142 = vand.u32 2147483647, %v1118
        %v2143 = vand.u32 2147483647, %v1119
        %v2144 = vand.u32 2147483647, %v1120
        %v2145 = vand.u32 2147483647, %v1121
        %v2146 = vand.u32 2147483647, %v1122
        %v2147 = vand.u32 2147483647, %v1123
        %v2148 = vand.u32 2147483647, %v1124
        %v2149 = vand.u32 2147483647, %v1125
        %v2150 = vand.u32 2147483647, %v1126
        %v2151 = vand.u32 2147483647, %v1127
        %v2152 = vand.u32 2147483647, %v1128
        %v2153 = vand.u32 2147483647, %v1129
        %v2154 = vand.u32 2147483647, %v1130
        %v2155 = vand.u32 2147483647, %v1131
        %v2156 = vand.u32 2147483647, %v1132
        %v2157 = vand.u32 2147483647, %v1133
        %v2158 = vand.u32 2147483647, %v1134
        %v2159 = vand.u32 2147483647, %v1135
        %v2160 = vand.u32 2147483647, %v1136
        %v2161 = vand.u32 2147483647, %v1137
        %v2162 = vand.u32 2147483647, %v1138
        %v2163 = vand.u32 2147483647, %v1139
        %v2164 = vand.u32 2147483647, %v1140
        %v2165 = vand.u32 2147483647, %v1141
        %v2166 = vand.u32 2147483647, %v1142
        %v2167 = vand.u32 2147483647, %v1143
        %v2168 = vand.u32 2147483647, %v1144
        %v2169 = vand.u32 2147483647, %v1145
        %v2170 = vand.u32 2147483647, %v1146
        %v2171 = vand.u32 2147483647, %v1147
        %v2172 = vand.u32 2147483647, %v1148
        %v2173 = vand.u32 2147483647, %v1149
        %v2174 = vand.u32 2147483647, %v1150
        %v2175 = vand.u32 2147483647, %v1151
        %v2176 = vand.u32 2147483647, %v1152
        %v2177 = vand.u32 2147483647, %v1153
        %v2178 = vand.u32 2147483647, %v1154
        %v2179 = vand.u32 2147483647, %v1155
        %v2180 = vand.u32 2147483647, %v1156
        %v2181 = vand.u32 2147483647, %v1157
        %v2182 = vand.u32 2147483647, %v1158
        %v2183 = vand.u32 2147483647, %v1159
        %v2184 = vand.u32 2147483647, %v1160
        %v2185 = vand.u32 2147483647, %v1161
        %v2186 = vand.u32 2147483647, %v1162
        %v2187 = vand.u32 2147483647, %v1163
        %2188 = vst [vmem:[%s137] sm:$0xff] %v1164
        %2189 = vst [vmem:[%s137 + $0x8] sm:$0xff] %v1165
        %2190 = vst [vmem:[%s137 + $0x10] sm:$0xff] %v1166
        %2191 = vst [vmem:[%s137 + $0x18] sm:$0xff] %v1167
        %2192 = vst [vmem:[%s137 + $0x20] sm:$0xff] %v1168
        %2193 = vst [vmem:[%s137 + $0x28] sm:$0xff] %v1169
        %2194 = vst [vmem:[%s137 + $0x30] sm:$0xff] %v1170
        %2195 = vst [vmem:[%s137 + $0x38] sm:$0xff] %v1171
        %2196 = vst [vmem:[%s137 + $0x40] sm:$0xff] %v1172
        %2197 = vst [vmem:[%s137 + $0x48] sm:$0xff] %v1173
        %2198 = vst [vmem:[%s137 + $0x50] sm:$0xff] %v1174
        %2199 = vst [vmem:[%s137 + $0x58] sm:$0xff] %v1175
        %2200 = vst [vmem:[%s137 + $0x60] sm:$0xff] %v1176
        %2201 = vst [vmem:[%s137 + $0x68] sm:$0xff] %v1177
        %2202 = vst [vmem:[%s137 + $0x70] sm:$0xff] %v1178
        %2203 = vst [vmem:[%s137 + $0x78] sm:$0xff] %v1179
        %2204 = vst [vmem:[%s137 + $0x80] sm:$0xff] %v1180
        %2205 = vst [vmem:[%s137 + $0x88] sm:$0xff] %v1181
        %2206 = vst [vmem:[%s137 + $0x90] sm:$0xff] %v1182
        %2207 = vst [vmem:[%s137 + $0x98] sm:$0xff] %v1183
        %2208 = vst [vmem:[%s137 + $0xa0] sm:$0xff] %v1184
        %2209 = vst [vmem:[%s137 + $0xa8] sm:$0xff] %v1185
        %2210 = vst [vmem:[%s137 + $0xb0] sm:$0xff] %v1186
        %2211 = vst [vmem:[%s137 + $0xb8] sm:$0xff] %v1187
        %2212 = vst [vmem:[%s137 + $0xc0] sm:$0xff] %v1188
        %2213 = vst [vmem:[%s137 + $0xc8] sm:$0xff] %v1189
        %2214 = vst [vmem:[%s137 + $0xd0] sm:$0xff] %v1190
        %2215 = vst [vmem:[%s137 + $0xd8] sm:$0xff] %v1191
        %2216 = vst [vmem:[%s137 + $0xe0] sm:$0xff] %v1192
        %2217 = vst [vmem:[%s137 + $0xe8] sm:$0xff] %v1193
        %2218 = vst [vmem:[%s137 + $0xf0] sm:$0xff] %v1194
        %2219 = vst [vmem:[%s137 + $0xf8] sm:$0xff] %v1195
        %2220 = vst [vmem:[%s137 + $0x100] sm:$0xff] %v1196
        %2221 = vst [vmem:[%s137 + $0x108] sm:$0xff] %v1197
        %2222 = vst [vmem:[%s137 + $0x110] sm:$0xff] %v1198
        %2223 = vst [vmem:[%s137 + $0x118] sm:$0xff] %v1199
        %2224 = vst [vmem:[%s137 + $0x120] sm:$0xff] %v1200
        %2225 = vst [vmem:[%s137 + $0x128] sm:$0xff] %v1201
        %2226 = vst [vmem:[%s137 + $0x130] sm:$0xff] %v1202
        %2227 = vst [vmem:[%s137 + $0x138] sm:$0xff] %v1203
        %2228 = vst [vmem:[%s137 + $0x140] sm:$0xff] %v1204
        %2229 = vst [vmem:[%s137 + $0x148] sm:$0xff] %v1205
        %2230 = vst [vmem:[%s137 + $0x150] sm:$0xff] %v1206
        %2231 = vst [vmem:[%s137 + $0x158] sm:$0xff] %v1207
        %2232 = vst [vmem:[%s137 + $0x160] sm:$0xff] %v1208
        %2233 = vst [vmem:[%s137 + $0x168] sm:$0xff] %v1209
        %2234 = vst [vmem:[%s137 + $0x170] sm:$0xff] %v1210
        %2235 = vst [vmem:[%s137 + $0x178] sm:$0xff] %v1211
        %2236 = vst [vmem:[%s137 + $0x180] sm:$0xff] %v1212
        %2237 = vst [vmem:[%s137 + $0x188] sm:$0xff] %v1213
        %2238 = vst [vmem:[%s137 + $0x190] sm:$0xff] %v1214
        %2239 = vst [vmem:[%s137 + $0x198] sm:$0xff] %v1215
        %2240 = vst [vmem:[%s137 + $0x1a0] sm:$0xff] %v1216
        %2241 = vst [vmem:[%s137 + $0x1a8] sm:$0xff] %v1217
        %2242 = vst [vmem:[%s137 + $0x1b0] sm:$0xff] %v1218
        %2243 = vst [vmem:[%s137 + $0x1b8] sm:$0xff] %v1219
        %2244 = vst [vmem:[%s137 + $0x1c0] sm:$0xff] %v1220
        %2245 = vst [vmem:[%s137 + $0x1c8] sm:$0xff] %v1221
        %2246 = vst [vmem:[%s137 + $0x1d0] sm:$0xff] %v1222
        %2247 = vst [vmem:[%s137 + $0x1d8] sm:$0xff] %v1223
        %2248 = vst [vmem:[%s137 + $0x1e0] sm:$0xff] %v1224
        %2249 = vst [vmem:[%s137 + $0x1e8] sm:$0xff] %v1225
        %2250 = vst [vmem:[%s137 + $0x1f0] sm:$0xff] %v1226
        %2251 = vst [vmem:[%s137 + $0x1f8] sm:$0xff] %v1227
        %2252 = vst [vmem:[%s137 + $0x200] sm:$0xff] %v1228
        %2253 = vst [vmem:[%s137 + $0x208] sm:$0xff] %v1229
        %2254 = vst [vmem:[%s137 + $0x210] sm:$0xff] %v1230
        %2255 = vst [vmem:[%s137 + $0x218] sm:$0xff] %v1231
        %2256 = vst [vmem:[%s137 + $0x220] sm:$0xff] %v1232
        %2257 = vst [vmem:[%s137 + $0x228] sm:$0xff] %v1233
        %2258 = vst [vmem:[%s137 + $0x230] sm:$0xff] %v1234
        %2259 = vst [vmem:[%s137 + $0x238] sm:$0xff] %v1235
        %2260 = vst [vmem:[%s137 + $0x240] sm:$0xff] %v1236
        %2261 = vst [vmem:[%s137 + $0x248] sm:$0xff] %v1237
        %2262 = vst [vmem:[%s137 + $0x250] sm:$0xff] %v1238
        %2263 = vst [vmem:[%s137 + $0x258] sm:$0xff] %v1239
        %2264 = vst [vmem:[%s137 + $0x260] sm:$0xff] %v1240
        %2265 = vst [vmem:[%s137 + $0x268] sm:$0xff] %v1241
        %2266 = vst [vmem:[%s137 + $0x270] sm:$0xff] %v1242
        %2267 = vst [vmem:[%s137 + $0x278] sm:$0xff] %v1243
        %2268 = vst [vmem:[%s137 + $0x280] sm:$0xff] %v1244
        %2269 = vst [vmem:[%s137 + $0x288] sm:$0xff] %v1245
        %2270 = vst [vmem:[%s137 + $0x290] sm:$0xff] %v1246
        %2271 = vst [vmem:[%s137 + $0x298] sm:$0xff] %v1247
        %2272 = vst [vmem:[%s137 + $0x2a0] sm:$0xff] %v1248
        %2273 = vst [vmem:[%s137 + $0x2a8] sm:$0xff] %v1249
        %2274 = vst [vmem:[%s137 + $0x2b0] sm:$0xff] %v1250
        %2275 = vst [vmem:[%s137 + $0x2b8] sm:$0xff] %v1251
        %2276 = vst [vmem:[%s137 + $0x2c0] sm:$0xff] %v1252
        %2277 = vst [vmem:[%s137 + $0x2c8] sm:$0xff] %v1253
        %2278 = vst [vmem:[%s137 + $0x2d0] sm:$0xff] %v1254
        %2279 = vst [vmem:[%s137 + $0x2d8] sm:$0xff] %v1255
        %2280 = vst [vmem:[%s137 + $0x2e0] sm:$0xff] %v1256
        %2281 = vst [vmem:[%s137 + $0x2e8] sm:$0xff] %v1257
        %2282 = vst [vmem:[%s137 + $0x2f0] sm:$0xff] %v1258
        %2283 = vst [vmem:[%s137 + $0x2f8] sm:$0xff] %v1259
        %2284 = vst [vmem:[%s137 + $0x300] sm:$0xff] %v1260
        %2285 = vst [vmem:[%s137 + $0x308] sm:$0xff] %v1261
        %2286 = vst [vmem:[%s137 + $0x310] sm:$0xff] %v1262
        %2287 = vst [vmem:[%s137 + $0x318] sm:$0xff] %v1263
        %2288 = vst [vmem:[%s137 + $0x320] sm:$0xff] %v1264
        %2289 = vst [vmem:[%s137 + $0x328] sm:$0xff] %v1265
        %2290 = vst [vmem:[%s137 + $0x330] sm:$0xff] %v1266
        %2291 = vst [vmem:[%s137 + $0x338] sm:$0xff] %v1267
        %2292 = vst [vmem:[%s137 + $0x340] sm:$0xff] %v1268
        %2293 = vst [vmem:[%s137 + $0x348] sm:$0xff] %v1269
        %2294 = vst [vmem:[%s137 + $0x350] sm:$0xff] %v1270
        %2295 = vst [vmem:[%s137 + $0x358] sm:$0xff] %v1271
        %2296 = vst [vmem:[%s137 + $0x360] sm:$0xff] %v1272
        %2297 = vst [vmem:[%s137 + $0x368] sm:$0xff] %v1273
        %2298 = vst [vmem:[%s137 + $0x370] sm:$0xff] %v1274
        %2299 = vst [vmem:[%s137 + $0x378] sm:$0xff] %v1275
        %2300 = vst [vmem:[%s137 + $0x380] sm:$0xff] %v1276
        %2301 = vst [vmem:[%s137 + $0x388] sm:$0xff] %v1277
        %2302 = vst [vmem:[%s137 + $0x390] sm:$0xff] %v1278
        %2303 = vst [vmem:[%s137 + $0x398] sm:$0xff] %v1279
        %2304 = vst [vmem:[%s137 + $0x3a0] sm:$0xff] %v1280
        %2305 = vst [vmem:[%s137 + $0x3a8] sm:$0xff] %v1281
        %2306 = vst [vmem:[%s137 + $0x3b0] sm:$0xff] %v1282
        %2307 = vst [vmem:[%s137 + $0x3b8] sm:$0xff] %v1283
        %2308 = vst [vmem:[%s137 + $0x3c0] sm:$0xff] %v1284
        %2309 = vst [vmem:[%s137 + $0x3c8] sm:$0xff] %v1285
        %2310 = vst [vmem:[%s137 + $0x3d0] sm:$0xff] %v1286
        %2311 = vst [vmem:[%s137 + $0x3d8] sm:$0xff] %v1287
        %2312 = vst [vmem:[%s137 + $0x3e0] sm:$0xff] %v1288
        %2313 = vst [vmem:[%s137 + $0x3e8] sm:$0xff] %v1289
        %2314 = vst [vmem:[%s137 + $0x3f0] sm:$0xff] %v1290
        %2315 = vst [vmem:[%s137 + $0x3f8] sm:$0xff] %v1291
        %2316 = vst [vmem:[%s137 + $0x400] sm:$0xff] %v1292
        %2317 = vst [vmem:[%s137 + $0x408] sm:$0xff] %v1293
        %2318 = vst [vmem:[%s137 + $0x410] sm:$0xff] %v1294
        %2319 = vst [vmem:[%s137 + $0x418] sm:$0xff] %v1295
        %2320 = vst [vmem:[%s137 + $0x420] sm:$0xff] %v1296
        %2321 = vst [vmem:[%s137 + $0x428] sm:$0xff] %v1297
        %2322 = vst [vmem:[%s137 + $0x430] sm:$0xff] %v1298
        %2323 = vst [vmem:[%s137 + $0x438] sm:$0xff] %v1299
        %2324 = vst [vmem:[%s137 + $0x440] sm:$0xff] %v1300
        %2325 = vst [vmem:[%s137 + $0x448] sm:$0xff] %v1301
        %2326 = vst [vmem:[%s137 + $0x450] sm:$0xff] %v1302
        %2327 = vst [vmem:[%s137 + $0x458] sm:$0xff] %v1303
        %2328 = vst [vmem:[%s137 + $0x460] sm:$0xff] %v1304
        %2329 = vst [vmem:[%s137 + $0x468] sm:$0xff] %v1305
        %2330 = vst [vmem:[%s137 + $0x470] sm:$0xff] %v1306
        %2331 = vst [vmem:[%s137 + $0x478] sm:$0xff] %v1307
        %2332 = vst [vmem:[%s137 + $0x480] sm:$0xff] %v1308
        %2333 = vst [vmem:[%s137 + $0x488] sm:$0xff] %v1309
        %2334 = vst [vmem:[%s137 + $0x490] sm:$0xff] %v1310
        %2335 = vst [vmem:[%s137 + $0x498] sm:$0xff] %v1311
        %2336 = vst [vmem:[%s137 + $0x4a0] sm:$0xff] %v1312
        %2337 = vst [vmem:[%s137 + $0x4a8] sm:$0xff] %v1313
        %2338 = vst [vmem:[%s137 + $0x4b0] sm:$0xff] %v1314
        %2339 = vst [vmem:[%s137 + $0x4b8] sm:$0xff] %v1315
        %2340 = vst [vmem:[%s137 + $0x4c0] sm:$0xff] %v1316
        %2341 = vst [vmem:[%s137 + $0x4c8] sm:$0xff] %v1317
        %2342 = vst [vmem:[%s137 + $0x4d0] sm:$0xff] %v1318
        %2343 = vst [vmem:[%s137 + $0x4d8] sm:$0xff] %v1319
        %2344 = vst [vmem:[%s137 + $0x4e0] sm:$0xff] %v1320
        %2345 = vst [vmem:[%s137 + $0x4e8] sm:$0xff] %v1321
        %2346 = vst [vmem:[%s137 + $0x4f0] sm:$0xff] %v1322
        %2347 = vst [vmem:[%s137 + $0x4f8] sm:$0xff] %v1323
        %2348 = vst [vmem:[%s137 + $0x500] sm:$0xff] %v1324
        %2349 = vst [vmem:[%s137 + $0x508] sm:$0xff] %v1325
        %2350 = vst [vmem:[%s137 + $0x510] sm:$0xff] %v1326
        %2351 = vst [vmem:[%s137 + $0x518] sm:$0xff] %v1327
        %2352 = vst [vmem:[%s137 + $0x520] sm:$0xff] %v1328
        %2353 = vst [vmem:[%s137 + $0x528] sm:$0xff] %v1329
        %2354 = vst [vmem:[%s137 + $0x530] sm:$0xff] %v1330
        %2355 = vst [vmem:[%s137 + $0x538] sm:$0xff] %v1331
        %2356 = vst [vmem:[%s137 + $0x540] sm:$0xff] %v1332
        %2357 = vst [vmem:[%s137 + $0x548] sm:$0xff] %v1333
        %2358 = vst [vmem:[%s137 + $0x550] sm:$0xff] %v1334
        %2359 = vst [vmem:[%s137 + $0x558] sm:$0xff] %v1335
        %2360 = vst [vmem:[%s137 + $0x560] sm:$0xff] %v1336
        %2361 = vst [vmem:[%s137 + $0x568] sm:$0xff] %v1337
        %2362 = vst [vmem:[%s137 + $0x570] sm:$0xff] %v1338
        %2363 = vst [vmem:[%s137 + $0x578] sm:$0xff] %v1339
        %2364 = vst [vmem:[%s137 + $0x580] sm:$0xff] %v1340
        %2365 = vst [vmem:[%s137 + $0x588] sm:$0xff] %v1341
        %2366 = vst [vmem:[%s137 + $0x590] sm:$0xff] %v1342
        %2367 = vst [vmem:[%s137 + $0x598] sm:$0xff] %v1343
        %2368 = vst [vmem:[%s137 + $0x5a0] sm:$0xff] %v1344
        %2369 = vst [vmem:[%s137 + $0x5a8] sm:$0xff] %v1345
        %2370 = vst [vmem:[%s137 + $0x5b0] sm:$0xff] %v1346
        %2371 = vst [vmem:[%s137 + $0x5b8] sm:$0xff] %v1347
        %2372 = vst [vmem:[%s137 + $0x5c0] sm:$0xff] %v1348
        %2373 = vst [vmem:[%s137 + $0x5c8] sm:$0xff] %v1349
        %2374 = vst [vmem:[%s137 + $0x5d0] sm:$0xff] %v1350
        %2375 = vst [vmem:[%s137 + $0x5d8] sm:$0xff] %v1351
        %2376 = vst [vmem:[%s137 + $0x5e0] sm:$0xff] %v1352
        %2377 = vst [vmem:[%s137 + $0x5e8] sm:$0xff] %v1353
        %2378 = vst [vmem:[%s137 + $0x5f0] sm:$0xff] %v1354
        %2379 = vst [vmem:[%s137 + $0x5f8] sm:$0xff] %v1355
        %2380 = vst [vmem:[%s137 + $0x600] sm:$0xff] %v1356
        %2381 = vst [vmem:[%s137 + $0x608] sm:$0xff] %v1357
        %2382 = vst [vmem:[%s137 + $0x610] sm:$0xff] %v1358
        %2383 = vst [vmem:[%s137 + $0x618] sm:$0xff] %v1359
        %2384 = vst [vmem:[%s137 + $0x620] sm:$0xff] %v1360
        %2385 = vst [vmem:[%s137 + $0x628] sm:$0xff] %v1361
        %2386 = vst [vmem:[%s137 + $0x630] sm:$0xff] %v1362
        %2387 = vst [vmem:[%s137 + $0x638] sm:$0xff] %v1363
        %2388 = vst [vmem:[%s137 + $0x640] sm:$0xff] %v1364
        %2389 = vst [vmem:[%s137 + $0x648] sm:$0xff] %v1365
        %2390 = vst [vmem:[%s137 + $0x650] sm:$0xff] %v1366
        %2391 = vst [vmem:[%s137 + $0x658] sm:$0xff] %v1367
        %2392 = vst [vmem:[%s137 + $0x660] sm:$0xff] %v1368
        %2393 = vst [vmem:[%s137 + $0x668] sm:$0xff] %v1369
        %2394 = vst [vmem:[%s137 + $0x670] sm:$0xff] %v1370
        %2395 = vst [vmem:[%s137 + $0x678] sm:$0xff] %v1371
        %2396 = vst [vmem:[%s137 + $0x680] sm:$0xff] %v1372
        %2397 = vst [vmem:[%s137 + $0x688] sm:$0xff] %v1373
        %2398 = vst [vmem:[%s137 + $0x690] sm:$0xff] %v1374
        %2399 = vst [vmem:[%s137 + $0x698] sm:$0xff] %v1375
        %2400 = vst [vmem:[%s137 + $0x6a0] sm:$0xff] %v1376
        %2401 = vst [vmem:[%s137 + $0x6a8] sm:$0xff] %v1377
        %2402 = vst [vmem:[%s137 + $0x6b0] sm:$0xff] %v1378
        %2403 = vst [vmem:[%s137 + $0x6b8] sm:$0xff] %v1379
        %2404 = vst [vmem:[%s137 + $0x6c0] sm:$0xff] %v1380
        %2405 = vst [vmem:[%s137 + $0x6c8] sm:$0xff] %v1381
        %2406 = vst [vmem:[%s137 + $0x6d0] sm:$0xff] %v1382
        %2407 = vst [vmem:[%s137 + $0x6d8] sm:$0xff] %v1383
        %2408 = vst [vmem:[%s137 + $0x6e0] sm:$0xff] %v1384
        %2409 = vst [vmem:[%s137 + $0x6e8] sm:$0xff] %v1385
        %2410 = vst [vmem:[%s137 + $0x6f0] sm:$0xff] %v1386
        %2411 = vst [vmem:[%s137 + $0x6f8] sm:$0xff] %v1387
        %2412 = vst [vmem:[%s137 + $0x700] sm:$0xff] %v1388
        %2413 = vst [vmem:[%s137 + $0x708] sm:$0xff] %v1389
        %2414 = vst [vmem:[%s137 + $0x710] sm:$0xff] %v1390
        %2415 = vst [vmem:[%s137 + $0x718] sm:$0xff] %v1391
        %2416 = vst [vmem:[%s137 + $0x720] sm:$0xff] %v1392
        %2417 = vst [vmem:[%s137 + $0x728] sm:$0xff] %v1393
        %2418 = vst [vmem:[%s137 + $0x730] sm:$0xff] %v1394
        %2419 = vst [vmem:[%s137 + $0x738] sm:$0xff] %v1395
        %2420 = vst [vmem:[%s137 + $0x740] sm:$0xff] %v1396
        %2421 = vst [vmem:[%s137 + $0x748] sm:$0xff] %v1397
        %2422 = vst [vmem:[%s137 + $0x750] sm:$0xff] %v1398
        %2423 = vst [vmem:[%s137 + $0x758] sm:$0xff] %v1399
        %2424 = vst [vmem:[%s137 + $0x760] sm:$0xff] %v1400
        %2425 = vst [vmem:[%s137 + $0x768] sm:$0xff] %v1401
        %2426 = vst [vmem:[%s137 + $0x770] sm:$0xff] %v1402
        %2427 = vst [vmem:[%s137 + $0x778] sm:$0xff] %v1403
        %2428 = vst [vmem:[%s137 + $0x780] sm:$0xff] %v1404
        %2429 = vst [vmem:[%s137 + $0x788] sm:$0xff] %v1405
        %2430 = vst [vmem:[%s137 + $0x790] sm:$0xff] %v1406
        %2431 = vst [vmem:[%s137 + $0x798] sm:$0xff] %v1407
        %2432 = vst [vmem:[%s137 + $0x7a0] sm:$0xff] %v1408
        %2433 = vst [vmem:[%s137 + $0x7a8] sm:$0xff] %v1409
        %2434 = vst [vmem:[%s137 + $0x7b0] sm:$0xff] %v1410
        %2435 = vst [vmem:[%s137 + $0x7b8] sm:$0xff] %v1411
        %2436 = vst [vmem:[%s137 + $0x7c0] sm:$0xff] %v1412
        %2437 = vst [vmem:[%s137 + $0x7c8] sm:$0xff] %v1413
        %2438 = vst [vmem:[%s137 + $0x7d0] sm:$0xff] %v1414
        %2439 = vst [vmem:[%s137 + $0x7d8] sm:$0xff] %v1415
        %2440 = vst [vmem:[%s137 + $0x7e0] sm:$0xff] %v1416
        %2441 = vst [vmem:[%s137 + $0x7e8] sm:$0xff] %v1417
        %2442 = vst [vmem:[%s137 + $0x7f0] sm:$0xff] %v1418
        %2443 = vst [vmem:[%s137 + $0x7f8] sm:$0xff] %v1419
        %2444 = vst [vmem:[%s137 + $0x800] sm:$0xff] %v1420
        %2445 = vst [vmem:[%s137 + $0x808] sm:$0xff] %v1421
        %2446 = vst [vmem:[%s137 + $0x810] sm:$0xff] %v1422
        %2447 = vst [vmem:[%s137 + $0x818] sm:$0xff] %v1423
        %2448 = vst [vmem:[%s137 + $0x820] sm:$0xff] %v1424
        %2449 = vst [vmem:[%s137 + $0x828] sm:$0xff] %v1425
        %2450 = vst [vmem:[%s137 + $0x830] sm:$0xff] %v1426
        %2451 = vst [vmem:[%s137 + $0x838] sm:$0xff] %v1427
        %2452 = vst [vmem:[%s137 + $0x840] sm:$0xff] %v1428
        %2453 = vst [vmem:[%s137 + $0x848] sm:$0xff] %v1429
        %2454 = vst [vmem:[%s137 + $0x850] sm:$0xff] %v1430
        %2455 = vst [vmem:[%s137 + $0x858] sm:$0xff] %v1431
        %2456 = vst [vmem:[%s137 + $0x860] sm:$0xff] %v1432
        %2457 = vst [vmem:[%s137 + $0x868] sm:$0xff] %v1433
        %2458 = vst [vmem:[%s137 + $0x870] sm:$0xff] %v1434
        %2459 = vst [vmem:[%s137 + $0x878] sm:$0xff] %v1435
        %2460 = vst [vmem:[%s137 + $0x880] sm:$0xff] %v1436
        %2461 = vst [vmem:[%s137 + $0x888] sm:$0xff] %v1437
        %2462 = vst [vmem:[%s137 + $0x890] sm:$0xff] %v1438
        %2463 = vst [vmem:[%s137 + $0x898] sm:$0xff] %v1439
        %2464 = vst [vmem:[%s137 + $0x8a0] sm:$0xff] %v1440
        %2465 = vst [vmem:[%s137 + $0x8a8] sm:$0xff] %v1441
        %2466 = vst [vmem:[%s137 + $0x8b0] sm:$0xff] %v1442
        %2467 = vst [vmem:[%s137 + $0x8b8] sm:$0xff] %v1443
        %2468 = vst [vmem:[%s137 + $0x8c0] sm:$0xff] %v1444
        %2469 = vst [vmem:[%s137 + $0x8c8] sm:$0xff] %v1445
        %2470 = vst [vmem:[%s137 + $0x8d0] sm:$0xff] %v1446
        %2471 = vst [vmem:[%s137 + $0x8d8] sm:$0xff] %v1447
        %2472 = vst [vmem:[%s137 + $0x8e0] sm:$0xff] %v1448
        %2473 = vst [vmem:[%s137 + $0x8e8] sm:$0xff] %v1449
        %2474 = vst [vmem:[%s137 + $0x8f0] sm:$0xff] %v1450
        %2475 = vst [vmem:[%s137 + $0x8f8] sm:$0xff] %v1451
        %2476 = vst [vmem:[%s137 + $0x900] sm:$0xff] %v1452
        %2477 = vst [vmem:[%s137 + $0x908] sm:$0xff] %v1453
        %2478 = vst [vmem:[%s137 + $0x910] sm:$0xff] %v1454
        %2479 = vst [vmem:[%s137 + $0x918] sm:$0xff] %v1455
        %2480 = vst [vmem:[%s137 + $0x920] sm:$0xff] %v1456
        %2481 = vst [vmem:[%s137 + $0x928] sm:$0xff] %v1457
        %2482 = vst [vmem:[%s137 + $0x930] sm:$0xff] %v1458
        %2483 = vst [vmem:[%s137 + $0x938] sm:$0xff] %v1459
        %2484 = vst [vmem:[%s137 + $0x940] sm:$0xff] %v1460
        %2485 = vst [vmem:[%s137 + $0x948] sm:$0xff] %v1461
        %2486 = vst [vmem:[%s137 + $0x950] sm:$0xff] %v1462
        %2487 = vst [vmem:[%s137 + $0x958] sm:$0xff] %v1463
        %2488 = vst [vmem:[%s137 + $0x960] sm:$0xff] %v1464
        %2489 = vst [vmem:[%s137 + $0x968] sm:$0xff] %v1465
        %2490 = vst [vmem:[%s137 + $0x970] sm:$0xff] %v1466
        %2491 = vst [vmem:[%s137 + $0x978] sm:$0xff] %v1467
        %2492 = vst [vmem:[%s137 + $0x980] sm:$0xff] %v1468
        %2493 = vst [vmem:[%s137 + $0x988] sm:$0xff] %v1469
        %2494 = vst [vmem:[%s137 + $0x990] sm:$0xff] %v1470
        %2495 = vst [vmem:[%s137 + $0x998] sm:$0xff] %v1471
        %2496 = vst [vmem:[%s137 + $0x9a0] sm:$0xff] %v1472
        %2497 = vst [vmem:[%s137 + $0x9a8] sm:$0xff] %v1473
        %2498 = vst [vmem:[%s137 + $0x9b0] sm:$0xff] %v1474
        %2499 = vst [vmem:[%s137 + $0x9b8] sm:$0xff] %v1475
        %2500 = vst [vmem:[%s137 + $0x9c0] sm:$0xff] %v1476
        %2501 = vst [vmem:[%s137 + $0x9c8] sm:$0xff] %v1477
        %2502 = vst [vmem:[%s137 + $0x9d0] sm:$0xff] %v1478
        %2503 = vst [vmem:[%s137 + $0x9d8] sm:$0xff] %v1479
        %2504 = vst [vmem:[%s137 + $0x9e0] sm:$0xff] %v1480
        %2505 = vst [vmem:[%s137 + $0x9e8] sm:$0xff] %v1481
        %2506 = vst [vmem:[%s137 + $0x9f0] sm:$0xff] %v1482
        %2507 = vst [vmem:[%s137 + $0x9f8] sm:$0xff] %v1483
        %2508 = vst [vmem:[%s137 + $0xa00] sm:$0xff] %v1484
        %2509 = vst [vmem:[%s137 + $0xa08] sm:$0xff] %v1485
        %2510 = vst [vmem:[%s137 + $0xa10] sm:$0xff] %v1486
        %2511 = vst [vmem:[%s137 + $0xa18] sm:$0xff] %v1487
        %2512 = vst [vmem:[%s137 + $0xa20] sm:$0xff] %v1488
        %2513 = vst [vmem:[%s137 + $0xa28] sm:$0xff] %v1489
        %2514 = vst [vmem:[%s137 + $0xa30] sm:$0xff] %v1490
        %2515 = vst [vmem:[%s137 + $0xa38] sm:$0xff] %v1491
        %2516 = vst [vmem:[%s137 + $0xa40] sm:$0xff] %v1492
        %2517 = vst [vmem:[%s137 + $0xa48] sm:$0xff] %v1493
        %2518 = vst [vmem:[%s137 + $0xa50] sm:$0xff] %v1494
        %2519 = vst [vmem:[%s137 + $0xa58] sm:$0xff] %v1495
        %2520 = vst [vmem:[%s137 + $0xa60] sm:$0xff] %v1496
        %2521 = vst [vmem:[%s137 + $0xa68] sm:$0xff] %v1497
        %2522 = vst [vmem:[%s137 + $0xa70] sm:$0xff] %v1498
        %2523 = vst [vmem:[%s137 + $0xa78] sm:$0xff] %v1499
        %2524 = vst [vmem:[%s137 + $0xa80] sm:$0xff] %v1500
        %2525 = vst [vmem:[%s137 + $0xa88] sm:$0xff] %v1501
        %2526 = vst [vmem:[%s137 + $0xa90] sm:$0xff] %v1502
        %2527 = vst [vmem:[%s137 + $0xa98] sm:$0xff] %v1503
        %2528 = vst [vmem:[%s137 + $0xaa0] sm:$0xff] %v1504
        %2529 = vst [vmem:[%s137 + $0xaa8] sm:$0xff] %v1505
        %2530 = vst [vmem:[%s137 + $0xab0] sm:$0xff] %v1506
        %2531 = vst [vmem:[%s137 + $0xab8] sm:$0xff] %v1507
        %2532 = vst [vmem:[%s137 + $0xac0] sm:$0xff] %v1508
        %2533 = vst [vmem:[%s137 + $0xac8] sm:$0xff] %v1509
        %2534 = vst [vmem:[%s137 + $0xad0] sm:$0xff] %v1510
        %2535 = vst [vmem:[%s137 + $0xad8] sm:$0xff] %v1511
        %2536 = vst [vmem:[%s137 + $0xae0] sm:$0xff] %v1512
        %2537 = vst [vmem:[%s137 + $0xae8] sm:$0xff] %v1513
        %2538 = vst [vmem:[%s137 + $0xaf0] sm:$0xff] %v1514
        %2539 = vst [vmem:[%s137 + $0xaf8] sm:$0xff] %v1515
        %2540 = vst [vmem:[%s137 + $0xb00] sm:$0xff] %v1516
        %2541 = vst [vmem:[%s137 + $0xb08] sm:$0xff] %v1517
        %2542 = vst [vmem:[%s137 + $0xb10] sm:$0xff] %v1518
        %2543 = vst [vmem:[%s137 + $0xb18] sm:$0xff] %v1519
        %2544 = vst [vmem:[%s137 + $0xb20] sm:$0xff] %v1520
        %2545 = vst [vmem:[%s137 + $0xb28] sm:$0xff] %v1521
        %2546 = vst [vmem:[%s137 + $0xb30] sm:$0xff] %v1522
        %2547 = vst [vmem:[%s137 + $0xb38] sm:$0xff] %v1523
        %2548 = vst [vmem:[%s137 + $0xb40] sm:$0xff] %v1524
        %2549 = vst [vmem:[%s137 + $0xb48] sm:$0xff] %v1525
        %2550 = vst [vmem:[%s137 + $0xb50] sm:$0xff] %v1526
        %2551 = vst [vmem:[%s137 + $0xb58] sm:$0xff] %v1527
        %2552 = vst [vmem:[%s137 + $0xb60] sm:$0xff] %v1528
        %2553 = vst [vmem:[%s137 + $0xb68] sm:$0xff] %v1529
        %2554 = vst [vmem:[%s137 + $0xb70] sm:$0xff] %v1530
        %2555 = vst [vmem:[%s137 + $0xb78] sm:$0xff] %v1531
        %2556 = vst [vmem:[%s137 + $0xb80] sm:$0xff] %v1532
        %2557 = vst [vmem:[%s137 + $0xb88] sm:$0xff] %v1533
        %2558 = vst [vmem:[%s137 + $0xb90] sm:$0xff] %v1534
        %2559 = vst [vmem:[%s137 + $0xb98] sm:$0xff] %v1535
        %2560 = vst [vmem:[%s137 + $0xba0] sm:$0xff] %v1536
        %2561 = vst [vmem:[%s137 + $0xba8] sm:$0xff] %v1537
        %2562 = vst [vmem:[%s137 + $0xbb0] sm:$0xff] %v1538
        %2563 = vst [vmem:[%s137 + $0xbb8] sm:$0xff] %v1539
        %2564 = vst [vmem:[%s137 + $0xbc0] sm:$0xff] %v1540
        %2565 = vst [vmem:[%s137 + $0xbc8] sm:$0xff] %v1541
        %2566 = vst [vmem:[%s137 + $0xbd0] sm:$0xff] %v1542
        %2567 = vst [vmem:[%s137 + $0xbd8] sm:$0xff] %v1543
        %2568 = vst [vmem:[%s137 + $0xbe0] sm:$0xff] %v1544
        %2569 = vst [vmem:[%s137 + $0xbe8] sm:$0xff] %v1545
        %2570 = vst [vmem:[%s137 + $0xbf0] sm:$0xff] %v1546
        %2571 = vst [vmem:[%s137 + $0xbf8] sm:$0xff] %v1547
        %2572 = vst [vmem:[%s137 + $0xc00] sm:$0xff] %v1548
        %2573 = vst [vmem:[%s137 + $0xc08] sm:$0xff] %v1549
        %2574 = vst [vmem:[%s137 + $0xc10] sm:$0xff] %v1550
        %2575 = vst [vmem:[%s137 + $0xc18] sm:$0xff] %v1551
        %2576 = vst [vmem:[%s137 + $0xc20] sm:$0xff] %v1552
        %2577 = vst [vmem:[%s137 + $0xc28] sm:$0xff] %v1553
        %2578 = vst [vmem:[%s137 + $0xc30] sm:$0xff] %v1554
        %2579 = vst [vmem:[%s137 + $0xc38] sm:$0xff] %v1555
        %2580 = vst [vmem:[%s137 + $0xc40] sm:$0xff] %v1556
        %2581 = vst [vmem:[%s137 + $0xc48] sm:$0xff] %v1557
        %2582 = vst [vmem:[%s137 + $0xc50] sm:$0xff] %v1558
        %2583 = vst [vmem:[%s137 + $0xc58] sm:$0xff] %v1559
        %2584 = vst [vmem:[%s137 + $0xc60] sm:$0xff] %v1560
        %2585 = vst [vmem:[%s137 + $0xc68] sm:$0xff] %v1561
        %2586 = vst [vmem:[%s137 + $0xc70] sm:$0xff] %v1562
        %2587 = vst [vmem:[%s137 + $0xc78] sm:$0xff] %v1563
        %2588 = vst [vmem:[%s137 + $0xc80] sm:$0xff] %v1564
        %2589 = vst [vmem:[%s137 + $0xc88] sm:$0xff] %v1565
        %2590 = vst [vmem:[%s137 + $0xc90] sm:$0xff] %v1566
        %2591 = vst [vmem:[%s137 + $0xc98] sm:$0xff] %v1567
        %2592 = vst [vmem:[%s137 + $0xca0] sm:$0xff] %v1568
        %2593 = vst [vmem:[%s137 + $0xca8] sm:$0xff] %v1569
        %2594 = vst [vmem:[%s137 + $0xcb0] sm:$0xff] %v1570
        %2595 = vst [vmem:[%s137 + $0xcb8] sm:$0xff] %v1571
        %2596 = vst [vmem:[%s137 + $0xcc0] sm:$0xff] %v1572
        %2597 = vst [vmem:[%s137 + $0xcc8] sm:$0xff] %v1573
        %2598 = vst [vmem:[%s137 + $0xcd0] sm:$0xff] %v1574
        %2599 = vst [vmem:[%s137 + $0xcd8] sm:$0xff] %v1575
        %2600 = vst [vmem:[%s137 + $0xce0] sm:$0xff] %v1576
        %2601 = vst [vmem:[%s137 + $0xce8] sm:$0xff] %v1577
        %2602 = vst [vmem:[%s137 + $0xcf0] sm:$0xff] %v1578
        %2603 = vst [vmem:[%s137 + $0xcf8] sm:$0xff] %v1579
        %2604 = vst [vmem:[%s137 + $0xd00] sm:$0xff] %v1580
        %2605 = vst [vmem:[%s137 + $0xd08] sm:$0xff] %v1581
        %2606 = vst [vmem:[%s137 + $0xd10] sm:$0xff] %v1582
        %2607 = vst [vmem:[%s137 + $0xd18] sm:$0xff] %v1583
        %2608 = vst [vmem:[%s137 + $0xd20] sm:$0xff] %v1584
        %2609 = vst [vmem:[%s137 + $0xd28] sm:$0xff] %v1585
        %2610 = vst [vmem:[%s137 + $0xd30] sm:$0xff] %v1586
        %2611 = vst [vmem:[%s137 + $0xd38] sm:$0xff] %v1587
        %2612 = vst [vmem:[%s137 + $0xd40] sm:$0xff] %v1588
        %2613 = vst [vmem:[%s137 + $0xd48] sm:$0xff] %v1589
        %2614 = vst [vmem:[%s137 + $0xd50] sm:$0xff] %v1590
        %2615 = vst [vmem:[%s137 + $0xd58] sm:$0xff] %v1591
        %2616 = vst [vmem:[%s137 + $0xd60] sm:$0xff] %v1592
        %2617 = vst [vmem:[%s137 + $0xd68] sm:$0xff] %v1593
        %2618 = vst [vmem:[%s137 + $0xd70] sm:$0xff] %v1594
        %2619 = vst [vmem:[%s137 + $0xd78] sm:$0xff] %v1595
        %2620 = vst [vmem:[%s137 + $0xd80] sm:$0xff] %v1596
        %2621 = vst [vmem:[%s137 + $0xd88] sm:$0xff] %v1597
        %2622 = vst [vmem:[%s137 + $0xd90] sm:$0xff] %v1598
        %2623 = vst [vmem:[%s137 + $0xd98] sm:$0xff] %v1599
        %2624 = vst [vmem:[%s137 + $0xda0] sm:$0xff] %v1600
        %2625 = vst [vmem:[%s137 + $0xda8] sm:$0xff] %v1601
        %2626 = vst [vmem:[%s137 + $0xdb0] sm:$0xff] %v1602
        %2627 = vst [vmem:[%s137 + $0xdb8] sm:$0xff] %v1603
        %2628 = vst [vmem:[%s137 + $0xdc0] sm:$0xff] %v1604
        %2629 = vst [vmem:[%s137 + $0xdc8] sm:$0xff] %v1605
        %2630 = vst [vmem:[%s137 + $0xdd0] sm:$0xff] %v1606
        %2631 = vst [vmem:[%s137 + $0xdd8] sm:$0xff] %v1607
        %2632 = vst [vmem:[%s137 + $0xde0] sm:$0xff] %v1608
        %2633 = vst [vmem:[%s137 + $0xde8] sm:$0xff] %v1609
        %2634 = vst [vmem:[%s137 + $0xdf0] sm:$0xff] %v1610
        %2635 = vst [vmem:[%s137 + $0xdf8] sm:$0xff] %v1611
        %2636 = vst [vmem:[%s137 + $0xe00] sm:$0xff] %v1612
        %2637 = vst [vmem:[%s137 + $0xe08] sm:$0xff] %v1613
        %2638 = vst [vmem:[%s137 + $0xe10] sm:$0xff] %v1614
        %2639 = vst [vmem:[%s137 + $0xe18] sm:$0xff] %v1615
        %2640 = vst [vmem:[%s137 + $0xe20] sm:$0xff] %v1616
        %2641 = vst [vmem:[%s137 + $0xe28] sm:$0xff] %v1617
        %2642 = vst [vmem:[%s137 + $0xe30] sm:$0xff] %v1618
        %2643 = vst [vmem:[%s137 + $0xe38] sm:$0xff] %v1619
        %2644 = vst [vmem:[%s137 + $0xe40] sm:$0xff] %v1620
        %2645 = vst [vmem:[%s137 + $0xe48] sm:$0xff] %v1621
        %2646 = vst [vmem:[%s137 + $0xe50] sm:$0xff] %v1622
        %2647 = vst [vmem:[%s137 + $0xe58] sm:$0xff] %v1623
        %2648 = vst [vmem:[%s137 + $0xe60] sm:$0xff] %v1624
        %2649 = vst [vmem:[%s137 + $0xe68] sm:$0xff] %v1625
        %2650 = vst [vmem:[%s137 + $0xe70] sm:$0xff] %v1626
        %2651 = vst [vmem:[%s137 + $0xe78] sm:$0xff] %v1627
        %2652 = vst [vmem:[%s137 + $0xe80] sm:$0xff] %v1628
        %2653 = vst [vmem:[%s137 + $0xe88] sm:$0xff] %v1629
        %2654 = vst [vmem:[%s137 + $0xe90] sm:$0xff] %v1630
        %2655 = vst [vmem:[%s137 + $0xe98] sm:$0xff] %v1631
        %2656 = vst [vmem:[%s137 + $0xea0] sm:$0xff] %v1632
        %2657 = vst [vmem:[%s137 + $0xea8] sm:$0xff] %v1633
        %2658 = vst [vmem:[%s137 + $0xeb0] sm:$0xff] %v1634
        %2659 = vst [vmem:[%s137 + $0xeb8] sm:$0xff] %v1635
        %2660 = vst [vmem:[%s137 + $0xec0] sm:$0xff] %v1636
        %2661 = vst [vmem:[%s137 + $0xec8] sm:$0xff] %v1637
        %2662 = vst [vmem:[%s137 + $0xed0] sm:$0xff] %v1638
        %2663 = vst [vmem:[%s137 + $0xed8] sm:$0xff] %v1639
        %2664 = vst [vmem:[%s137 + $0xee0] sm:$0xff] %v1640
        %2665 = vst [vmem:[%s137 + $0xee8] sm:$0xff] %v1641
        %2666 = vst [vmem:[%s137 + $0xef0] sm:$0xff] %v1642
        %2667 = vst [vmem:[%s137 + $0xef8] sm:$0xff] %v1643
        %2668 = vst [vmem:[%s137 + $0xf00] sm:$0xff] %v1644
        %2669 = vst [vmem:[%s137 + $0xf08] sm:$0xff] %v1645
        %2670 = vst [vmem:[%s137 + $0xf10] sm:$0xff] %v1646
        %2671 = vst [vmem:[%s137 + $0xf18] sm:$0xff] %v1647
        %2672 = vst [vmem:[%s137 + $0xf20] sm:$0xff] %v1648
        %2673 = vst [vmem:[%s137 + $0xf28] sm:$0xff] %v1649
        %2674 = vst [vmem:[%s137 + $0xf30] sm:$0xff] %v1650
        %2675 = vst [vmem:[%s137 + $0xf38] sm:$0xff] %v1651
        %2676 = vst [vmem:[%s137 + $0xf40] sm:$0xff] %v1652
        %2677 = vst [vmem:[%s137 + $0xf48] sm:$0xff] %v1653
        %2678 = vst [vmem:[%s137 + $0xf50] sm:$0xff] %v1654
        %2679 = vst [vmem:[%s137 + $0xf58] sm:$0xff] %v1655
        %2680 = vst [vmem:[%s137 + $0xf60] sm:$0xff] %v1656
        %2681 = vst [vmem:[%s137 + $0xf68] sm:$0xff] %v1657
        %2682 = vst [vmem:[%s137 + $0xf70] sm:$0xff] %v1658
        %2683 = vst [vmem:[%s137 + $0xf78] sm:$0xff] %v1659
        %2684 = vst [vmem:[%s137 + $0xf80] sm:$0xff] %v1660
        %2685 = vst [vmem:[%s137 + $0xf88] sm:$0xff] %v1661
        %2686 = vst [vmem:[%s137 + $0xf90] sm:$0xff] %v1662
        %2687 = vst [vmem:[%s137 + $0xf98] sm:$0xff] %v1663
        %2688 = vst [vmem:[%s137 + $0xfa0] sm:$0xff] %v1664
        %2689 = vst [vmem:[%s137 + $0xfa8] sm:$0xff] %v1665
        %2690 = vst [vmem:[%s137 + $0xfb0] sm:$0xff] %v1666
        %2691 = vst [vmem:[%s137 + $0xfb8] sm:$0xff] %v1667
        %2692 = vst [vmem:[%s137 + $0xfc0] sm:$0xff] %v1668
        %2693 = vst [vmem:[%s137 + $0xfc8] sm:$0xff] %v1669
        %2694 = vst [vmem:[%s137 + $0xfd0] sm:$0xff] %v1670
        %2695 = vst [vmem:[%s137 + $0xfd8] sm:$0xff] %v1671
        %2696 = vst [vmem:[%s137 + $0xfe0] sm:$0xff] %v1672
        %2697 = vst [vmem:[%s137 + $0xfe8] sm:$0xff] %v1673
        %2698 = vst [vmem:[%s137 + $0xff0] sm:$0xff] %v1674
        %2699 = vst [vmem:[%s137 + $0xff8] sm:$0xff] %v1675
        %2700 = vst [vmem:[%s137 + $0x1000] sm:$0xff] %v1676
        %2701 = vst [vmem:[%s137 + $0x1008] sm:$0xff] %v1677
        %2702 = vst [vmem:[%s137 + $0x1010] sm:$0xff] %v1678
        %2703 = vst [vmem:[%s137 + $0x1018] sm:$0xff] %v1679
        %2704 = vst [vmem:[%s137 + $0x1020] sm:$0xff] %v1680
        %2705 = vst [vmem:[%s137 + $0x1028] sm:$0xff] %v1681
        %2706 = vst [vmem:[%s137 + $0x1030] sm:$0xff] %v1682
        %2707 = vst [vmem:[%s137 + $0x1038] sm:$0xff] %v1683
        %2708 = vst [vmem:[%s137 + $0x1040] sm:$0xff] %v1684
        %2709 = vst [vmem:[%s137 + $0x1048] sm:$0xff] %v1685
        %2710 = vst [vmem:[%s137 + $0x1050] sm:$0xff] %v1686
        %2711 = vst [vmem:[%s137 + $0x1058] sm:$0xff] %v1687
        %2712 = vst [vmem:[%s137 + $0x1060] sm:$0xff] %v1688
        %2713 = vst [vmem:[%s137 + $0x1068] sm:$0xff] %v1689
        %2714 = vst [vmem:[%s137 + $0x1070] sm:$0xff] %v1690
        %2715 = vst [vmem:[%s137 + $0x1078] sm:$0xff] %v1691
        %2716 = vst [vmem:[%s137 + $0x1080] sm:$0xff] %v1692
        %2717 = vst [vmem:[%s137 + $0x1088] sm:$0xff] %v1693
        %2718 = vst [vmem:[%s137 + $0x1090] sm:$0xff] %v1694
        %2719 = vst [vmem:[%s137 + $0x1098] sm:$0xff] %v1695
        %2720 = vst [vmem:[%s137 + $0x10a0] sm:$0xff] %v1696
        %2721 = vst [vmem:[%s137 + $0x10a8] sm:$0xff] %v1697
        %2722 = vst [vmem:[%s137 + $0x10b0] sm:$0xff] %v1698
        %2723 = vst [vmem:[%s137 + $0x10b8] sm:$0xff] %v1699
        %2724 = vst [vmem:[%s137 + $0x10c0] sm:$0xff] %v1700
        %2725 = vst [vmem:[%s137 + $0x10c8] sm:$0xff] %v1701
        %2726 = vst [vmem:[%s137 + $0x10d0] sm:$0xff] %v1702
        %2727 = vst [vmem:[%s137 + $0x10d8] sm:$0xff] %v1703
        %2728 = vst [vmem:[%s137 + $0x10e0] sm:$0xff] %v1704
        %2729 = vst [vmem:[%s137 + $0x10e8] sm:$0xff] %v1705
        %2730 = vst [vmem:[%s137 + $0x10f0] sm:$0xff] %v1706
        %2731 = vst [vmem:[%s137 + $0x10f8] sm:$0xff] %v1707
        %2732 = vst [vmem:[%s137 + $0x1100] sm:$0xff] %v1708
        %2733 = vst [vmem:[%s137 + $0x1108] sm:$0xff] %v1709
        %2734 = vst [vmem:[%s137 + $0x1110] sm:$0xff] %v1710
        %2735 = vst [vmem:[%s137 + $0x1118] sm:$0xff] %v1711
        %2736 = vst [vmem:[%s137 + $0x1120] sm:$0xff] %v1712
        %2737 = vst [vmem:[%s137 + $0x1128] sm:$0xff] %v1713
        %2738 = vst [vmem:[%s137 + $0x1130] sm:$0xff] %v1714
        %2739 = vst [vmem:[%s137 + $0x1138] sm:$0xff] %v1715
        %2740 = vst [vmem:[%s137 + $0x1140] sm:$0xff] %v1716
        %2741 = vst [vmem:[%s137 + $0x1148] sm:$0xff] %v1717
        %2742 = vst [vmem:[%s137 + $0x1150] sm:$0xff] %v1718
        %2743 = vst [vmem:[%s137 + $0x1158] sm:$0xff] %v1719
        %2744 = vst [vmem:[%s137 + $0x1160] sm:$0xff] %v1720
        %2745 = vst [vmem:[%s137 + $0x1168] sm:$0xff] %v1721
        %2746 = vst [vmem:[%s137 + $0x1170] sm:$0xff] %v1722
        %2747 = vst [vmem:[%s137 + $0x1178] sm:$0xff] %v1723
        %2748 = vst [vmem:[%s137 + $0x1180] sm:$0xff] %v1724
        %2749 = vst [vmem:[%s137 + $0x1188] sm:$0xff] %v1725
        %2750 = vst [vmem:[%s137 + $0x1190] sm:$0xff] %v1726
        %2751 = vst [vmem:[%s137 + $0x1198] sm:$0xff] %v1727
        %2752 = vst [vmem:[%s137 + $0x11a0] sm:$0xff] %v1728
        %2753 = vst [vmem:[%s137 + $0x11a8] sm:$0xff] %v1729
        %2754 = vst [vmem:[%s137 + $0x11b0] sm:$0xff] %v1730
        %2755 = vst [vmem:[%s137 + $0x11b8] sm:$0xff] %v1731
        %2756 = vst [vmem:[%s137 + $0x11c0] sm:$0xff] %v1732
        %2757 = vst [vmem:[%s137 + $0x11c8] sm:$0xff] %v1733
        %2758 = vst [vmem:[%s137 + $0x11d0] sm:$0xff] %v1734
        %2759 = vst [vmem:[%s137 + $0x11d8] sm:$0xff] %v1735
        %2760 = vst [vmem:[%s137 + $0x11e0] sm:$0xff] %v1736
        %2761 = vst [vmem:[%s137 + $0x11e8] sm:$0xff] %v1737
        %2762 = vst [vmem:[%s137 + $0x11f0] sm:$0xff] %v1738
        %2763 = vst [vmem:[%s137 + $0x11f8] sm:$0xff] %v1739
        %2764 = vst [vmem:[%s137 + $0x1200] sm:$0xff] %v1740
        %2765 = vst [vmem:[%s137 + $0x1208] sm:$0xff] %v1741
        %2766 = vst [vmem:[%s137 + $0x1210] sm:$0xff] %v1742
        %2767 = vst [vmem:[%s137 + $0x1218] sm:$0xff] %v1743
        %2768 = vst [vmem:[%s137 + $0x1220] sm:$0xff] %v1744
        %2769 = vst [vmem:[%s137 + $0x1228] sm:$0xff] %v1745
        %2770 = vst [vmem:[%s137 + $0x1230] sm:$0xff] %v1746
        %2771 = vst [vmem:[%s137 + $0x1238] sm:$0xff] %v1747
        %2772 = vst [vmem:[%s137 + $0x1240] sm:$0xff] %v1748
        %2773 = vst [vmem:[%s137 + $0x1248] sm:$0xff] %v1749
        %2774 = vst [vmem:[%s137 + $0x1250] sm:$0xff] %v1750
        %2775 = vst [vmem:[%s137 + $0x1258] sm:$0xff] %v1751
        %2776 = vst [vmem:[%s137 + $0x1260] sm:$0xff] %v1752
        %2777 = vst [vmem:[%s137 + $0x1268] sm:$0xff] %v1753
        %2778 = vst [vmem:[%s137 + $0x1270] sm:$0xff] %v1754
        %2779 = vst [vmem:[%s137 + $0x1278] sm:$0xff] %v1755
        %2780 = vst [vmem:[%s137 + $0x1280] sm:$0xff] %v1756
        %2781 = vst [vmem:[%s137 + $0x1288] sm:$0xff] %v1757
        %2782 = vst [vmem:[%s137 + $0x1290] sm:$0xff] %v1758
        %2783 = vst [vmem:[%s137 + $0x1298] sm:$0xff] %v1759
        %2784 = vst [vmem:[%s137 + $0x12a0] sm:$0xff] %v1760
        %2785 = vst [vmem:[%s137 + $0x12a8] sm:$0xff] %v1761
        %2786 = vst [vmem:[%s137 + $0x12b0] sm:$0xff] %v1762
        %2787 = vst [vmem:[%s137 + $0x12b8] sm:$0xff] %v1763
        %2788 = vst [vmem:[%s137 + $0x12c0] sm:$0xff] %v1764
        %2789 = vst [vmem:[%s137 + $0x12c8] sm:$0xff] %v1765
        %2790 = vst [vmem:[%s137 + $0x12d0] sm:$0xff] %v1766
        %2791 = vst [vmem:[%s137 + $0x12d8] sm:$0xff] %v1767
        %2792 = vst [vmem:[%s137 + $0x12e0] sm:$0xff] %v1768
        %2793 = vst [vmem:[%s137 + $0x12e8] sm:$0xff] %v1769
        %2794 = vst [vmem:[%s137 + $0x12f0] sm:$0xff] %v1770
        %2795 = vst [vmem:[%s137 + $0x12f8] sm:$0xff] %v1771
        %2796 = vst [vmem:[%s137 + $0x1300] sm:$0xff] %v1772
        %2797 = vst [vmem:[%s137 + $0x1308] sm:$0xff] %v1773
        %2798 = vst [vmem:[%s137 + $0x1310] sm:$0xff] %v1774
        %2799 = vst [vmem:[%s137 + $0x1318] sm:$0xff] %v1775
        %2800 = vst [vmem:[%s137 + $0x1320] sm:$0xff] %v1776
        %2801 = vst [vmem:[%s137 + $0x1328] sm:$0xff] %v1777
        %2802 = vst [vmem:[%s137 + $0x1330] sm:$0xff] %v1778
        %2803 = vst [vmem:[%s137 + $0x1338] sm:$0xff] %v1779
        %2804 = vst [vmem:[%s137 + $0x1340] sm:$0xff] %v1780
        %2805 = vst [vmem:[%s137 + $0x1348] sm:$0xff] %v1781
        %2806 = vst [vmem:[%s137 + $0x1350] sm:$0xff] %v1782
        %2807 = vst [vmem:[%s137 + $0x1358] sm:$0xff] %v1783
        %2808 = vst [vmem:[%s137 + $0x1360] sm:$0xff] %v1784
        %2809 = vst [vmem:[%s137 + $0x1368] sm:$0xff] %v1785
        %2810 = vst [vmem:[%s137 + $0x1370] sm:$0xff] %v1786
        %2811 = vst [vmem:[%s137 + $0x1378] sm:$0xff] %v1787
        %2812 = vst [vmem:[%s137 + $0x1380] sm:$0xff] %v1788
        %2813 = vst [vmem:[%s137 + $0x1388] sm:$0xff] %v1789
        %2814 = vst [vmem:[%s137 + $0x1390] sm:$0xff] %v1790
        %2815 = vst [vmem:[%s137 + $0x1398] sm:$0xff] %v1791
        %2816 = vst [vmem:[%s137 + $0x13a0] sm:$0xff] %v1792
        %2817 = vst [vmem:[%s137 + $0x13a8] sm:$0xff] %v1793
        %2818 = vst [vmem:[%s137 + $0x13b0] sm:$0xff] %v1794
        %2819 = vst [vmem:[%s137 + $0x13b8] sm:$0xff] %v1795
        %2820 = vst [vmem:[%s137 + $0x13c0] sm:$0xff] %v1796
        %2821 = vst [vmem:[%s137 + $0x13c8] sm:$0xff] %v1797
        %2822 = vst [vmem:[%s137 + $0x13d0] sm:$0xff] %v1798
        %2823 = vst [vmem:[%s137 + $0x13d8] sm:$0xff] %v1799
        %2824 = vst [vmem:[%s137 + $0x13e0] sm:$0xff] %v1800
        %2825 = vst [vmem:[%s137 + $0x13e8] sm:$0xff] %v1801
        %2826 = vst [vmem:[%s137 + $0x13f0] sm:$0xff] %v1802
        %2827 = vst [vmem:[%s137 + $0x13f8] sm:$0xff] %v1803
        %2828 = vst [vmem:[%s137 + $0x1400] sm:$0xff] %v1804
        %2829 = vst [vmem:[%s137 + $0x1408] sm:$0xff] %v1805
        %2830 = vst [vmem:[%s137 + $0x1410] sm:$0xff] %v1806
        %2831 = vst [vmem:[%s137 + $0x1418] sm:$0xff] %v1807
        %2832 = vst [vmem:[%s137 + $0x1420] sm:$0xff] %v1808
        %2833 = vst [vmem:[%s137 + $0x1428] sm:$0xff] %v1809
        %2834 = vst [vmem:[%s137 + $0x1430] sm:$0xff] %v1810
        %2835 = vst [vmem:[%s137 + $0x1438] sm:$0xff] %v1811
        %2836 = vst [vmem:[%s137 + $0x1440] sm:$0xff] %v1812
        %2837 = vst [vmem:[%s137 + $0x1448] sm:$0xff] %v1813
        %2838 = vst [vmem:[%s137 + $0x1450] sm:$0xff] %v1814
        %2839 = vst [vmem:[%s137 + $0x1458] sm:$0xff] %v1815
        %2840 = vst [vmem:[%s137 + $0x1460] sm:$0xff] %v1816
        %2841 = vst [vmem:[%s137 + $0x1468] sm:$0xff] %v1817
        %2842 = vst [vmem:[%s137 + $0x1470] sm:$0xff] %v1818
        %2843 = vst [vmem:[%s137 + $0x1478] sm:$0xff] %v1819
        %2844 = vst [vmem:[%s137 + $0x1480] sm:$0xff] %v1820
        %2845 = vst [vmem:[%s137 + $0x1488] sm:$0xff] %v1821
        %2846 = vst [vmem:[%s137 + $0x1490] sm:$0xff] %v1822
        %2847 = vst [vmem:[%s137 + $0x1498] sm:$0xff] %v1823
        %2848 = vst [vmem:[%s137 + $0x14a0] sm:$0xff] %v1824
        %2849 = vst [vmem:[%s137 + $0x14a8] sm:$0xff] %v1825
        %2850 = vst [vmem:[%s137 + $0x14b0] sm:$0xff] %v1826
        %2851 = vst [vmem:[%s137 + $0x14b8] sm:$0xff] %v1827
        %2852 = vst [vmem:[%s137 + $0x14c0] sm:$0xff] %v1828
        %2853 = vst [vmem:[%s137 + $0x14c8] sm:$0xff] %v1829
        %2854 = vst [vmem:[%s137 + $0x14d0] sm:$0xff] %v1830
        %2855 = vst [vmem:[%s137 + $0x14d8] sm:$0xff] %v1831
        %2856 = vst [vmem:[%s137 + $0x14e0] sm:$0xff] %v1832
        %2857 = vst [vmem:[%s137 + $0x14e8] sm:$0xff] %v1833
        %2858 = vst [vmem:[%s137 + $0x14f0] sm:$0xff] %v1834
        %2859 = vst [vmem:[%s137 + $0x14f8] sm:$0xff] %v1835
        %2860 = vst [vmem:[%s137 + $0x1500] sm:$0xff] %v1836
        %2861 = vst [vmem:[%s137 + $0x1508] sm:$0xff] %v1837
        %2862 = vst [vmem:[%s137 + $0x1510] sm:$0xff] %v1838
        %2863 = vst [vmem:[%s137 + $0x1518] sm:$0xff] %v1839
        %2864 = vst [vmem:[%s137 + $0x1520] sm:$0xff] %v1840
        %2865 = vst [vmem:[%s137 + $0x1528] sm:$0xff] %v1841
        %2866 = vst [vmem:[%s137 + $0x1530] sm:$0xff] %v1842
        %2867 = vst [vmem:[%s137 + $0x1538] sm:$0xff] %v1843
        %2868 = vst [vmem:[%s137 + $0x1540] sm:$0xff] %v1844
        %2869 = vst [vmem:[%s137 + $0x1548] sm:$0xff] %v1845
        %2870 = vst [vmem:[%s137 + $0x1550] sm:$0xff] %v1846
        %2871 = vst [vmem:[%s137 + $0x1558] sm:$0xff] %v1847
        %2872 = vst [vmem:[%s137 + $0x1560] sm:$0xff] %v1848
        %2873 = vst [vmem:[%s137 + $0x1568] sm:$0xff] %v1849
        %2874 = vst [vmem:[%s137 + $0x1570] sm:$0xff] %v1850
        %2875 = vst [vmem:[%s137 + $0x1578] sm:$0xff] %v1851
        %2876 = vst [vmem:[%s137 + $0x1580] sm:$0xff] %v1852
        %2877 = vst [vmem:[%s137 + $0x1588] sm:$0xff] %v1853
        %2878 = vst [vmem:[%s137 + $0x1590] sm:$0xff] %v1854
        %2879 = vst [vmem:[%s137 + $0x1598] sm:$0xff] %v1855
        %2880 = vst [vmem:[%s137 + $0x15a0] sm:$0xff] %v1856
        %2881 = vst [vmem:[%s137 + $0x15a8] sm:$0xff] %v1857
        %2882 = vst [vmem:[%s137 + $0x15b0] sm:$0xff] %v1858
        %2883 = vst [vmem:[%s137 + $0x15b8] sm:$0xff] %v1859
        %2884 = vst [vmem:[%s137 + $0x15c0] sm:$0xff] %v1860
        %2885 = vst [vmem:[%s137 + $0x15c8] sm:$0xff] %v1861
        %2886 = vst [vmem:[%s137 + $0x15d0] sm:$0xff] %v1862
        %2887 = vst [vmem:[%s137 + $0x15d8] sm:$0xff] %v1863
        %2888 = vst [vmem:[%s137 + $0x15e0] sm:$0xff] %v1864
        %2889 = vst [vmem:[%s137 + $0x15e8] sm:$0xff] %v1865
        %2890 = vst [vmem:[%s137 + $0x15f0] sm:$0xff] %v1866
        %2891 = vst [vmem:[%s137 + $0x15f8] sm:$0xff] %v1867
        %2892 = vst [vmem:[%s137 + $0x1600] sm:$0xff] %v1868
        %2893 = vst [vmem:[%s137 + $0x1608] sm:$0xff] %v1869
        %2894 = vst [vmem:[%s137 + $0x1610] sm:$0xff] %v1870
        %2895 = vst [vmem:[%s137 + $0x1618] sm:$0xff] %v1871
        %2896 = vst [vmem:[%s137 + $0x1620] sm:$0xff] %v1872
        %2897 = vst [vmem:[%s137 + $0x1628] sm:$0xff] %v1873
        %2898 = vst [vmem:[%s137 + $0x1630] sm:$0xff] %v1874
        %2899 = vst [vmem:[%s137 + $0x1638] sm:$0xff] %v1875
        %2900 = vst [vmem:[%s137 + $0x1640] sm:$0xff] %v1876
        %2901 = vst [vmem:[%s137 + $0x1648] sm:$0xff] %v1877
        %2902 = vst [vmem:[%s137 + $0x1650] sm:$0xff] %v1878
        %2903 = vst [vmem:[%s137 + $0x1658] sm:$0xff] %v1879
        %2904 = vst [vmem:[%s137 + $0x1660] sm:$0xff] %v1880
        %2905 = vst [vmem:[%s137 + $0x1668] sm:$0xff] %v1881
        %2906 = vst [vmem:[%s137 + $0x1670] sm:$0xff] %v1882
        %2907 = vst [vmem:[%s137 + $0x1678] sm:$0xff] %v1883
        %2908 = vst [vmem:[%s137 + $0x1680] sm:$0xff] %v1884
        %2909 = vst [vmem:[%s137 + $0x1688] sm:$0xff] %v1885
        %2910 = vst [vmem:[%s137 + $0x1690] sm:$0xff] %v1886
        %2911 = vst [vmem:[%s137 + $0x1698] sm:$0xff] %v1887
        %2912 = vst [vmem:[%s137 + $0x16a0] sm:$0xff] %v1888
        %2913 = vst [vmem:[%s137 + $0x16a8] sm:$0xff] %v1889
        %2914 = vst [vmem:[%s137 + $0x16b0] sm:$0xff] %v1890
        %2915 = vst [vmem:[%s137 + $0x16b8] sm:$0xff] %v1891
        %2916 = vst [vmem:[%s137 + $0x16c0] sm:$0xff] %v1892
        %2917 = vst [vmem:[%s137 + $0x16c8] sm:$0xff] %v1893
        %2918 = vst [vmem:[%s137 + $0x16d0] sm:$0xff] %v1894
        %2919 = vst [vmem:[%s137 + $0x16d8] sm:$0xff] %v1895
        %2920 = vst [vmem:[%s137 + $0x16e0] sm:$0xff] %v1896
        %2921 = vst [vmem:[%s137 + $0x16e8] sm:$0xff] %v1897
        %2922 = vst [vmem:[%s137 + $0x16f0] sm:$0xff] %v1898
        %2923 = vst [vmem:[%s137 + $0x16f8] sm:$0xff] %v1899
        %2924 = vst [vmem:[%s137 + $0x1700] sm:$0xff] %v1900
        %2925 = vst [vmem:[%s137 + $0x1708] sm:$0xff] %v1901
        %2926 = vst [vmem:[%s137 + $0x1710] sm:$0xff] %v1902
        %2927 = vst [vmem:[%s137 + $0x1718] sm:$0xff] %v1903
        %2928 = vst [vmem:[%s137 + $0x1720] sm:$0xff] %v1904
        %2929 = vst [vmem:[%s137 + $0x1728] sm:$0xff] %v1905
        %2930 = vst [vmem:[%s137 + $0x1730] sm:$0xff] %v1906
        %2931 = vst [vmem:[%s137 + $0x1738] sm:$0xff] %v1907
        %2932 = vst [vmem:[%s137 + $0x1740] sm:$0xff] %v1908
        %2933 = vst [vmem:[%s137 + $0x1748] sm:$0xff] %v1909
        %2934 = vst [vmem:[%s137 + $0x1750] sm:$0xff] %v1910
        %2935 = vst [vmem:[%s137 + $0x1758] sm:$0xff] %v1911
        %2936 = vst [vmem:[%s137 + $0x1760] sm:$0xff] %v1912
        %2937 = vst [vmem:[%s137 + $0x1768] sm:$0xff] %v1913
        %2938 = vst [vmem:[%s137 + $0x1770] sm:$0xff] %v1914
        %2939 = vst [vmem:[%s137 + $0x1778] sm:$0xff] %v1915
        %2940 = vst [vmem:[%s137 + $0x1780] sm:$0xff] %v1916
        %2941 = vst [vmem:[%s137 + $0x1788] sm:$0xff] %v1917
        %2942 = vst [vmem:[%s137 + $0x1790] sm:$0xff] %v1918
        %2943 = vst [vmem:[%s137 + $0x1798] sm:$0xff] %v1919
        %2944 = vst [vmem:[%s137 + $0x17a0] sm:$0xff] %v1920
        %2945 = vst [vmem:[%s137 + $0x17a8] sm:$0xff] %v1921
        %2946 = vst [vmem:[%s137 + $0x17b0] sm:$0xff] %v1922
        %2947 = vst [vmem:[%s137 + $0x17b8] sm:$0xff] %v1923
        %2948 = vst [vmem:[%s137 + $0x17c0] sm:$0xff] %v1924
        %2949 = vst [vmem:[%s137 + $0x17c8] sm:$0xff] %v1925
        %2950 = vst [vmem:[%s137 + $0x17d0] sm:$0xff] %v1926
        %2951 = vst [vmem:[%s137 + $0x17d8] sm:$0xff] %v1927
        %2952 = vst [vmem:[%s137 + $0x17e0] sm:$0xff] %v1928
        %2953 = vst [vmem:[%s137 + $0x17e8] sm:$0xff] %v1929
        %2954 = vst [vmem:[%s137 + $0x17f0] sm:$0xff] %v1930
        %2955 = vst [vmem:[%s137 + $0x17f8] sm:$0xff] %v1931
        %2956 = vst [vmem:[%s137 + $0x1800] sm:$0xff] %v1932
        %2957 = vst [vmem:[%s137 + $0x1808] sm:$0xff] %v1933
        %2958 = vst [vmem:[%s137 + $0x1810] sm:$0xff] %v1934
        %2959 = vst [vmem:[%s137 + $0x1818] sm:$0xff] %v1935
        %2960 = vst [vmem:[%s137 + $0x1820] sm:$0xff] %v1936
        %2961 = vst [vmem:[%s137 + $0x1828] sm:$0xff] %v1937
        %2962 = vst [vmem:[%s137 + $0x1830] sm:$0xff] %v1938
        %2963 = vst [vmem:[%s137 + $0x1838] sm:$0xff] %v1939
        %2964 = vst [vmem:[%s137 + $0x1840] sm:$0xff] %v1940
        %2965 = vst [vmem:[%s137 + $0x1848] sm:$0xff] %v1941
        %2966 = vst [vmem:[%s137 + $0x1850] sm:$0xff] %v1942
        %2967 = vst [vmem:[%s137 + $0x1858] sm:$0xff] %v1943
        %2968 = vst [vmem:[%s137 + $0x1860] sm:$0xff] %v1944
        %2969 = vst [vmem:[%s137 + $0x1868] sm:$0xff] %v1945
        %2970 = vst [vmem:[%s137 + $0x1870] sm:$0xff] %v1946
        %2971 = vst [vmem:[%s137 + $0x1878] sm:$0xff] %v1947
        %2972 = vst [vmem:[%s137 + $0x1880] sm:$0xff] %v1948
        %2973 = vst [vmem:[%s137 + $0x1888] sm:$0xff] %v1949
        %2974 = vst [vmem:[%s137 + $0x1890] sm:$0xff] %v1950
        %2975 = vst [vmem:[%s137 + $0x1898] sm:$0xff] %v1951
        %2976 = vst [vmem:[%s137 + $0x18a0] sm:$0xff] %v1952
        %2977 = vst [vmem:[%s137 + $0x18a8] sm:$0xff] %v1953
        %2978 = vst [vmem:[%s137 + $0x18b0] sm:$0xff] %v1954
        %2979 = vst [vmem:[%s137 + $0x18b8] sm:$0xff] %v1955
        %2980 = vst [vmem:[%s137 + $0x18c0] sm:$0xff] %v1956
        %2981 = vst [vmem:[%s137 + $0x18c8] sm:$0xff] %v1957
        %2982 = vst [vmem:[%s137 + $0x18d0] sm:$0xff] %v1958
        %2983 = vst [vmem:[%s137 + $0x18d8] sm:$0xff] %v1959
        %2984 = vst [vmem:[%s137 + $0x18e0] sm:$0xff] %v1960
        %2985 = vst [vmem:[%s137 + $0x18e8] sm:$0xff] %v1961
        %2986 = vst [vmem:[%s137 + $0x18f0] sm:$0xff] %v1962
        %2987 = vst [vmem:[%s137 + $0x18f8] sm:$0xff] %v1963
        %2988 = vst [vmem:[%s137 + $0x1900] sm:$0xff] %v1964
        %2989 = vst [vmem:[%s137 + $0x1908] sm:$0xff] %v1965
        %2990 = vst [vmem:[%s137 + $0x1910] sm:$0xff] %v1966
        %2991 = vst [vmem:[%s137 + $0x1918] sm:$0xff] %v1967
        %2992 = vst [vmem:[%s137 + $0x1920] sm:$0xff] %v1968
        %2993 = vst [vmem:[%s137 + $0x1928] sm:$0xff] %v1969
        %2994 = vst [vmem:[%s137 + $0x1930] sm:$0xff] %v1970
        %2995 = vst [vmem:[%s137 + $0x1938] sm:$0xff] %v1971
        %2996 = vst [vmem:[%s137 + $0x1940] sm:$0xff] %v1972
        %2997 = vst [vmem:[%s137 + $0x1948] sm:$0xff] %v1973
        %2998 = vst [vmem:[%s137 + $0x1950] sm:$0xff] %v1974
        %2999 = vst [vmem:[%s137 + $0x1958] sm:$0xff] %v1975
        %3000 = vst [vmem:[%s137 + $0x1960] sm:$0xff] %v1976
        %3001 = vst [vmem:[%s137 + $0x1968] sm:$0xff] %v1977
        %3002 = vst [vmem:[%s137 + $0x1970] sm:$0xff] %v1978
        %3003 = vst [vmem:[%s137 + $0x1978] sm:$0xff] %v1979
        %3004 = vst [vmem:[%s137 + $0x1980] sm:$0xff] %v1980
        %3005 = vst [vmem:[%s137 + $0x1988] sm:$0xff] %v1981
        %3006 = vst [vmem:[%s137 + $0x1990] sm:$0xff] %v1982
        %3007 = vst [vmem:[%s137 + $0x1998] sm:$0xff] %v1983
        %3008 = vst [vmem:[%s137 + $0x19a0] sm:$0xff] %v1984
        %3009 = vst [vmem:[%s137 + $0x19a8] sm:$0xff] %v1985
        %3010 = vst [vmem:[%s137 + $0x19b0] sm:$0xff] %v1986
        %3011 = vst [vmem:[%s137 + $0x19b8] sm:$0xff] %v1987
        %3012 = vst [vmem:[%s137 + $0x19c0] sm:$0xff] %v1988
        %3013 = vst [vmem:[%s137 + $0x19c8] sm:$0xff] %v1989
        %3014 = vst [vmem:[%s137 + $0x19d0] sm:$0xff] %v1990
        %3015 = vst [vmem:[%s137 + $0x19d8] sm:$0xff] %v1991
        %3016 = vst [vmem:[%s137 + $0x19e0] sm:$0xff] %v1992
        %3017 = vst [vmem:[%s137 + $0x19e8] sm:$0xff] %v1993
        %3018 = vst [vmem:[%s137 + $0x19f0] sm:$0xff] %v1994
        %3019 = vst [vmem:[%s137 + $0x19f8] sm:$0xff] %v1995
        %3020 = vst [vmem:[%s137 + $0x1a00] sm:$0xff] %v1996
        %3021 = vst [vmem:[%s137 + $0x1a08] sm:$0xff] %v1997
        %3022 = vst [vmem:[%s137 + $0x1a10] sm:$0xff] %v1998
        %3023 = vst [vmem:[%s137 + $0x1a18] sm:$0xff] %v1999
        %3024 = vst [vmem:[%s137 + $0x1a20] sm:$0xff] %v2000
        %3025 = vst [vmem:[%s137 + $0x1a28] sm:$0xff] %v2001
        %3026 = vst [vmem:[%s137 + $0x1a30] sm:$0xff] %v2002
        %3027 = vst [vmem:[%s137 + $0x1a38] sm:$0xff] %v2003
        %3028 = vst [vmem:[%s137 + $0x1a40] sm:$0xff] %v2004
        %3029 = vst [vmem:[%s137 + $0x1a48] sm:$0xff] %v2005
        %3030 = vst [vmem:[%s137 + $0x1a50] sm:$0xff] %v2006
        %3031 = vst [vmem:[%s137 + $0x1a58] sm:$0xff] %v2007
        %3032 = vst [vmem:[%s137 + $0x1a60] sm:$0xff] %v2008
        %3033 = vst [vmem:[%s137 + $0x1a68] sm:$0xff] %v2009
        %3034 = vst [vmem:[%s137 + $0x1a70] sm:$0xff] %v2010
        %3035 = vst [vmem:[%s137 + $0x1a78] sm:$0xff] %v2011
        %3036 = vst [vmem:[%s137 + $0x1a80] sm:$0xff] %v2012
        %3037 = vst [vmem:[%s137 + $0x1a88] sm:$0xff] %v2013
        %3038 = vst [vmem:[%s137 + $0x1a90] sm:$0xff] %v2014
        %3039 = vst [vmem:[%s137 + $0x1a98] sm:$0xff] %v2015
        %3040 = vst [vmem:[%s137 + $0x1aa0] sm:$0xff] %v2016
        %3041 = vst [vmem:[%s137 + $0x1aa8] sm:$0xff] %v2017
        %3042 = vst [vmem:[%s137 + $0x1ab0] sm:$0xff] %v2018
        %3043 = vst [vmem:[%s137 + $0x1ab8] sm:$0xff] %v2019
        %3044 = vst [vmem:[%s137 + $0x1ac0] sm:$0xff] %v2020
        %3045 = vst [vmem:[%s137 + $0x1ac8] sm:$0xff] %v2021
        %3046 = vst [vmem:[%s137 + $0x1ad0] sm:$0xff] %v2022
        %3047 = vst [vmem:[%s137 + $0x1ad8] sm:$0xff] %v2023
        %3048 = vst [vmem:[%s137 + $0x1ae0] sm:$0xff] %v2024
        %3049 = vst [vmem:[%s137 + $0x1ae8] sm:$0xff] %v2025
        %3050 = vst [vmem:[%s137 + $0x1af0] sm:$0xff] %v2026
        %3051 = vst [vmem:[%s137 + $0x1af8] sm:$0xff] %v2027
        %3052 = vst [vmem:[%s137 + $0x1b00] sm:$0xff] %v2028
        %3053 = vst [vmem:[%s137 + $0x1b08] sm:$0xff] %v2029
        %3054 = vst [vmem:[%s137 + $0x1b10] sm:$0xff] %v2030
        %3055 = vst [vmem:[%s137 + $0x1b18] sm:$0xff] %v2031
        %3056 = vst [vmem:[%s137 + $0x1b20] sm:$0xff] %v2032
        %3057 = vst [vmem:[%s137 + $0x1b28] sm:$0xff] %v2033
        %3058 = vst [vmem:[%s137 + $0x1b30] sm:$0xff] %v2034
        %3059 = vst [vmem:[%s137 + $0x1b38] sm:$0xff] %v2035
        %3060 = vst [vmem:[%s137 + $0x1b40] sm:$0xff] %v2036
        %3061 = vst [vmem:[%s137 + $0x1b48] sm:$0xff] %v2037
        %3062 = vst [vmem:[%s137 + $0x1b50] sm:$0xff] %v2038
        %3063 = vst [vmem:[%s137 + $0x1b58] sm:$0xff] %v2039
        %3064 = vst [vmem:[%s137 + $0x1b60] sm:$0xff] %v2040
        %3065 = vst [vmem:[%s137 + $0x1b68] sm:$0xff] %v2041
        %3066 = vst [vmem:[%s137 + $0x1b70] sm:$0xff] %v2042
        %3067 = vst [vmem:[%s137 + $0x1b78] sm:$0xff] %v2043
        %3068 = vst [vmem:[%s137 + $0x1b80] sm:$0xff] %v2044
        %3069 = vst [vmem:[%s137 + $0x1b88] sm:$0xff] %v2045
        %3070 = vst [vmem:[%s137 + $0x1b90] sm:$0xff] %v2046
        %3071 = vst [vmem:[%s137 + $0x1b98] sm:$0xff] %v2047
        %3072 = vst [vmem:[%s137 + $0x1ba0] sm:$0xff] %v2048
        %3073 = vst [vmem:[%s137 + $0x1ba8] sm:$0xff] %v2049
        %3074 = vst [vmem:[%s137 + $0x1bb0] sm:$0xff] %v2050
        %3075 = vst [vmem:[%s137 + $0x1bb8] sm:$0xff] %v2051
        %3076 = vst [vmem:[%s137 + $0x1bc0] sm:$0xff] %v2052
        %3077 = vst [vmem:[%s137 + $0x1bc8] sm:$0xff] %v2053
        %3078 = vst [vmem:[%s137 + $0x1bd0] sm:$0xff] %v2054
        %3079 = vst [vmem:[%s137 + $0x1bd8] sm:$0xff] %v2055
        %3080 = vst [vmem:[%s137 + $0x1be0] sm:$0xff] %v2056
        %3081 = vst [vmem:[%s137 + $0x1be8] sm:$0xff] %v2057
        %3082 = vst [vmem:[%s137 + $0x1bf0] sm:$0xff] %v2058
        %3083 = vst [vmem:[%s137 + $0x1bf8] sm:$0xff] %v2059
        %3084 = vst [vmem:[%s137 + $0x1c00] sm:$0xff] %v2060
        %3085 = vst [vmem:[%s137 + $0x1c08] sm:$0xff] %v2061
        %3086 = vst [vmem:[%s137 + $0x1c10] sm:$0xff] %v2062
        %3087 = vst [vmem:[%s137 + $0x1c18] sm:$0xff] %v2063
        %3088 = vst [vmem:[%s137 + $0x1c20] sm:$0xff] %v2064
        %3089 = vst [vmem:[%s137 + $0x1c28] sm:$0xff] %v2065
        %3090 = vst [vmem:[%s137 + $0x1c30] sm:$0xff] %v2066
        %3091 = vst [vmem:[%s137 + $0x1c38] sm:$0xff] %v2067
        %3092 = vst [vmem:[%s137 + $0x1c40] sm:$0xff] %v2068
        %3093 = vst [vmem:[%s137 + $0x1c48] sm:$0xff] %v2069
        %3094 = vst [vmem:[%s137 + $0x1c50] sm:$0xff] %v2070
        %3095 = vst [vmem:[%s137 + $0x1c58] sm:$0xff] %v2071
        %3096 = vst [vmem:[%s137 + $0x1c60] sm:$0xff] %v2072
        %3097 = vst [vmem:[%s137 + $0x1c68] sm:$0xff] %v2073
        %3098 = vst [vmem:[%s137 + $0x1c70] sm:$0xff] %v2074
        %3099 = vst [vmem:[%s137 + $0x1c78] sm:$0xff] %v2075
        %3100 = vst [vmem:[%s137 + $0x1c80] sm:$0xff] %v2076
        %3101 = vst [vmem:[%s137 + $0x1c88] sm:$0xff] %v2077
        %3102 = vst [vmem:[%s137 + $0x1c90] sm:$0xff] %v2078
        %3103 = vst [vmem:[%s137 + $0x1c98] sm:$0xff] %v2079
        %3104 = vst [vmem:[%s137 + $0x1ca0] sm:$0xff] %v2080
        %3105 = vst [vmem:[%s137 + $0x1ca8] sm:$0xff] %v2081
        %3106 = vst [vmem:[%s137 + $0x1cb0] sm:$0xff] %v2082
        %3107 = vst [vmem:[%s137 + $0x1cb8] sm:$0xff] %v2083
        %3108 = vst [vmem:[%s137 + $0x1cc0] sm:$0xff] %v2084
        %3109 = vst [vmem:[%s137 + $0x1cc8] sm:$0xff] %v2085
        %3110 = vst [vmem:[%s137 + $0x1cd0] sm:$0xff] %v2086
        %3111 = vst [vmem:[%s137 + $0x1cd8] sm:$0xff] %v2087
        %3112 = vst [vmem:[%s137 + $0x1ce0] sm:$0xff] %v2088
        %3113 = vst [vmem:[%s137 + $0x1ce8] sm:$0xff] %v2089
        %3114 = vst [vmem:[%s137 + $0x1cf0] sm:$0xff] %v2090
        %3115 = vst [vmem:[%s137 + $0x1cf8] sm:$0xff] %v2091
        %3116 = vst [vmem:[%s137 + $0x1d00] sm:$0xff] %v2092
        %3117 = vst [vmem:[%s137 + $0x1d08] sm:$0xff] %v2093
        %3118 = vst [vmem:[%s137 + $0x1d10] sm:$0xff] %v2094
        %3119 = vst [vmem:[%s137 + $0x1d18] sm:$0xff] %v2095
        %3120 = vst [vmem:[%s137 + $0x1d20] sm:$0xff] %v2096
        %3121 = vst [vmem:[%s137 + $0x1d28] sm:$0xff] %v2097
        %3122 = vst [vmem:[%s137 + $0x1d30] sm:$0xff] %v2098
        %3123 = vst [vmem:[%s137 + $0x1d38] sm:$0xff] %v2099
        %3124 = vst [vmem:[%s137 + $0x1d40] sm:$0xff] %v2100
        %3125 = vst [vmem:[%s137 + $0x1d48] sm:$0xff] %v2101
        %3126 = vst [vmem:[%s137 + $0x1d50] sm:$0xff] %v2102
        %3127 = vst [vmem:[%s137 + $0x1d58] sm:$0xff] %v2103
        %3128 = vst [vmem:[%s137 + $0x1d60] sm:$0xff] %v2104
        %3129 = vst [vmem:[%s137 + $0x1d68] sm:$0xff] %v2105
        %3130 = vst [vmem:[%s137 + $0x1d70] sm:$0xff] %v2106
        %3131 = vst [vmem:[%s137 + $0x1d78] sm:$0xff] %v2107
        %3132 = vst [vmem:[%s137 + $0x1d80] sm:$0xff] %v2108
        %3133 = vst [vmem:[%s137 + $0x1d88] sm:$0xff] %v2109
        %3134 = vst [vmem:[%s137 + $0x1d90] sm:$0xff] %v2110
        %3135 = vst [vmem:[%s137 + $0x1d98] sm:$0xff] %v2111
        %3136 = vst [vmem:[%s137 + $0x1da0] sm:$0xff] %v2112
        %3137 = vst [vmem:[%s137 + $0x1da8] sm:$0xff] %v2113
        %3138 = vst [vmem:[%s137 + $0x1db0] sm:$0xff] %v2114
        %3139 = vst [vmem:[%s137 + $0x1db8] sm:$0xff] %v2115
        %3140 = vst [vmem:[%s137 + $0x1dc0] sm:$0xff] %v2116
        %3141 = vst [vmem:[%s137 + $0x1dc8] sm:$0xff] %v2117
        %3142 = vst [vmem:[%s137 + $0x1dd0] sm:$0xff] %v2118
        %3143 = vst [vmem:[%s137 + $0x1dd8] sm:$0xff] %v2119
        %3144 = vst [vmem:[%s137 + $0x1de0] sm:$0xff] %v2120
        %3145 = vst [vmem:[%s137 + $0x1de8] sm:$0xff] %v2121
        %3146 = vst [vmem:[%s137 + $0x1df0] sm:$0xff] %v2122
        %3147 = vst [vmem:[%s137 + $0x1df8] sm:$0xff] %v2123
        %3148 = vst [vmem:[%s137 + $0x1e00] sm:$0xff] %v2124
        %3149 = vst [vmem:[%s137 + $0x1e08] sm:$0xff] %v2125
        %3150 = vst [vmem:[%s137 + $0x1e10] sm:$0xff] %v2126
        %3151 = vst [vmem:[%s137 + $0x1e18] sm:$0xff] %v2127
        %3152 = vst [vmem:[%s137 + $0x1e20] sm:$0xff] %v2128
        %3153 = vst [vmem:[%s137 + $0x1e28] sm:$0xff] %v2129
        %3154 = vst [vmem:[%s137 + $0x1e30] sm:$0xff] %v2130
        %3155 = vst [vmem:[%s137 + $0x1e38] sm:$0xff] %v2131
        %3156 = vst [vmem:[%s137 + $0x1e40] sm:$0xff] %v2132
        %3157 = vst [vmem:[%s137 + $0x1e48] sm:$0xff] %v2133
        %3158 = vst [vmem:[%s137 + $0x1e50] sm:$0xff] %v2134
        %3159 = vst [vmem:[%s137 + $0x1e58] sm:$0xff] %v2135
        %3160 = vst [vmem:[%s137 + $0x1e60] sm:$0xff] %v2136
        %3161 = vst [vmem:[%s137 + $0x1e68] sm:$0xff] %v2137
        %3162 = vst [vmem:[%s137 + $0x1e70] sm:$0xff] %v2138
        %3163 = vst [vmem:[%s137 + $0x1e78] sm:$0xff] %v2139
        %3164 = vst [vmem:[%s137 + $0x1e80] sm:$0xff] %v2140
        %3165 = vst [vmem:[%s137 + $0x1e88] sm:$0xff] %v2141
        %3166 = vst [vmem:[%s137 + $0x1e90] sm:$0xff] %v2142
        %3167 = vst [vmem:[%s137 + $0x1e98] sm:$0xff] %v2143
        %3168 = vst [vmem:[%s137 + $0x1ea0] sm:$0xff] %v2144
        %3169 = vst [vmem:[%s137 + $0x1ea8] sm:$0xff] %v2145
        %3170 = vst [vmem:[%s137 + $0x1eb0] sm:$0xff] %v2146
        %3171 = vst [vmem:[%s137 + $0x1eb8] sm:$0xff] %v2147
        %3172 = vst [vmem:[%s137 + $0x1ec0] sm:$0xff] %v2148
        %3173 = vst [vmem:[%s137 + $0x1ec8] sm:$0xff] %v2149
        %3174 = vst [vmem:[%s137 + $0x1ed0] sm:$0xff] %v2150
        %3175 = vst [vmem:[%s137 + $0x1ed8] sm:$0xff] %v2151
        %3176 = vst [vmem:[%s137 + $0x1ee0] sm:$0xff] %v2152
        %3177 = vst [vmem:[%s137 + $0x1ee8] sm:$0xff] %v2153
        %3178 = vst [vmem:[%s137 + $0x1ef0] sm:$0xff] %v2154
        %3179 = vst [vmem:[%s137 + $0x1ef8] sm:$0xff] %v2155
        %3180 = vst [vmem:[%s137 + $0x1f00] sm:$0xff] %v2156
        %3181 = vst [vmem:[%s137 + $0x1f08] sm:$0xff] %v2157
        %3182 = vst [vmem:[%s137 + $0x1f10] sm:$0xff] %v2158
        %3183 = vst [vmem:[%s137 + $0x1f18] sm:$0xff] %v2159
        %3184 = vst [vmem:[%s137 + $0x1f20] sm:$0xff] %v2160
        %3185 = vst [vmem:[%s137 + $0x1f28] sm:$0xff] %v2161
        %3186 = vst [vmem:[%s137 + $0x1f30] sm:$0xff] %v2162
        %3187 = vst [vmem:[%s137 + $0x1f38] sm:$0xff] %v2163
        %3188 = vst [vmem:[%s137 + $0x1f40] sm:$0xff] %v2164
        %3189 = vst [vmem:[%s137 + $0x1f48] sm:$0xff] %v2165
        %3190 = vst [vmem:[%s137 + $0x1f50] sm:$0xff] %v2166
        %3191 = vst [vmem:[%s137 + $0x1f58] sm:$0xff] %v2167
        %3192 = vst [vmem:[%s137 + $0x1f60] sm:$0xff] %v2168
        %3193 = vst [vmem:[%s137 + $0x1f68] sm:$0xff] %v2169
        %3194 = vst [vmem:[%s137 + $0x1f70] sm:$0xff] %v2170
        %3195 = vst [vmem:[%s137 + $0x1f78] sm:$0xff] %v2171
        %3196 = vst [vmem:[%s137 + $0x1f80] sm:$0xff] %v2172
        %3197 = vst [vmem:[%s137 + $0x1f88] sm:$0xff] %v2173
        %3198 = vst [vmem:[%s137 + $0x1f90] sm:$0xff] %v2174
        %3199 = vst [vmem:[%s137 + $0x1f98] sm:$0xff] %v2175
        %3200 = vst [vmem:[%s137 + $0x1fa0] sm:$0xff] %v2176
        %3201 = vst [vmem:[%s137 + $0x1fa8] sm:$0xff] %v2177
        %3202 = vst [vmem:[%s137 + $0x1fb0] sm:$0xff] %v2178
        %3203 = vst [vmem:[%s137 + $0x1fb8] sm:$0xff] %v2179
        %3204 = vst [vmem:[%s137 + $0x1fc0] sm:$0xff] %v2180
        %3205 = vst [vmem:[%s137 + $0x1fc8] sm:$0xff] %v2181
        %3206 = vst [vmem:[%s137 + $0x1fd0] sm:$0xff] %v2182
        %3207 = vst [vmem:[%s137 + $0x1fd8] sm:$0xff] %v2183
        %3208 = vst [vmem:[%s137 + $0x1fe0] sm:$0xff] %v2184
        %3209 = vst [vmem:[%s137 + $0x1fe8] sm:$0xff] %v2185
        %3210 = vst [vmem:[%s137 + $0x1ff0] sm:$0xff] %v2186
        %3211 = vst [vmem:[%s137 + $0x1ff8] sm:$0xff] %v2187
        %s3212 = sand.u32 %s52, 1
        %s3213 = scalar_lea.sflag [#allocation4], %s3212
        %s3214 = sand.u32 %s52, 1
        %s3215 = smul.addr %s3214, 8192
        %s3216 = scalar_lea.vmem [#allocation5], %s3215
        // Predicated region
        $region29: #{tpu_custom_call.1} parent=23 // pred_check
          %p3217 = pneg %p62
        $region30: #{tpu_custom_call.1} parent=23 // pred_check_branch
          %3219 = sbr.rel (%p3217) target = $region32
        $region31: #{tpu_custom_call.1} parent=23 // pred_region
          %s3220 = smul.u32 64, %s18
          %3222 = vsyncadd %s3213, 0
          %s3223 = smul.addr %s3220, 16
          %s3224 = smul.addr %s3223, 8
          %s3225 = scalar_lea.hbm %s1, %s3224
          %s3226 = sshll.u32 %s3216, 4
          %s3227 = int_to_ptr.vmem [resolvable:$true] %s3226
          %s3228 = sshll.u32 %s3225, 4
          %s3229 = int_to_ptr.hbm [resolvable:$true] %s3228
          %3234 = dma.vmem_to_hbm [thread:$0]  %s3227, 131072, %s3229, %s3213, 2048, 2048, 128
        $region32: #{tpu_custom_call.1} parent=23 // pred_fallthru
          _
      $region24: #{tpu_custom_call.1} parent=5 // pred_fallthru
        _
      %p3235 = scmp.le.s32.totalorder 2, %s13
      // Predicated region
      $region33: #{tpu_custom_call.1} parent=5 // pred_check
        %p3236 = pneg %p3235
      $region34: #{tpu_custom_call.1} parent=5 // pred_check_branch
        %3238 = sbr.rel (%p3236) target = $region36
      $region35: #{tpu_custom_call.1} parent=5 // pred_region
        %s3239 = ssub.s32 %s13, 2
        // Predicated region
        $region37: #{tpu_custom_call.1} parent=35 // pred_check
          %p3240 = pneg %p68
        $region38: #{tpu_custom_call.1} parent=35 // pred_check_branch
          %3242 = sbr.rel (%p3240) target = $region40
        $region39: #{tpu_custom_call.1} parent=35 // pred_region
          %s3243 = sand.u32 %s53, 1
          %s3244 = scalar_lea.sflag [#allocation4], %s3243
          %s3245 = sand.u32 %s53, 1
          %s3246 = smul.addr %s3245, 8192
          %s3247 = scalar_lea.vmem [#allocation5], %s3246
          %3249 = dma.done %s3244, 131072
        $region40: #{tpu_custom_call.1} parent=35 // pred_fallthru
          _
      $region36: #{tpu_custom_call.1} parent=5 // pred_fallthru
        _
    $region6: #{tpu_custom_call.1} parent=1 // loop_footer
      %s17 = sadd.s32 1, %s13
    $region7: #{tpu_custom_call.1} parent=1 // loop_footer_branch
      %12 = sbr.rel target = $region3
    $region8: #{tpu_custom_call.1} parent=1 // loop_exit
      _
    %3250 = vsyncpa [#allocation3], 1
    %s3251 = scalar_lea.sflag [#allocation3], 1
    %3252 = vsyncpa %s3251, 1
    %3253 = vsyncpa [#allocation4], 1
    %s3254 = scalar_lea.sflag [#allocation4], 1
    %3255 = vsyncpa %s3254, 1

</llo_original>
